<compile_context>
chip_gen: v6e
topology: v6e:2x2x1
jax: 0.10.0
libtpu: 0.0.40
codegen_flags: <defaults>
</compile_context>

<pallas_src>
import math

import jax
import jax.numpy as jnp
from jax.experimental import pallas as pl
from jax.experimental.pallas import tpu as pltpu

NEG_SLOPE = 0.01                    # nn.LeakyReLU(0.01) in the module
VMEM_LIMIT = 32 * 1024 * 1024       # >> actual usage (<1 MiB); safe v5e..v7x


# ---------------------------------------------------------------------------
# Fused Pallas kernel: whole discriminator forward, one image per grid step
# ---------------------------------------------------------------------------
def _leaky_relu(x):
    return jnp.where(x >= 0, x, NEG_SLOPE * x)


def _conv_block(h, rs_ref, bd_ref):
    """One conv layer on a [Hi, Wi*Cin] bf16 activation.

    y[oh, ow*Cout + co] = sum_kh  (S[kh] @ h @ B[kh])     (f32 accumulate)

    rs_ref: [KH, Ho, Hi]          0/1 bf16 (folds H stride + H zero-padding)
    bd_ref: [KH, Wi*Cin, Wo*Cout] bf16 banded weights (folds W stride/pad,
                                  KW and Cin contraction)
    """
    kh_taps = rs_ref.shape[0]
    acc = None
    for kh in range(kh_taps):
        # Row selection is a 0/1 matmul -> exact copy of bf16 rows (no rounding).
        rows = jnp.dot(rs_ref[kh], h, preferred_element_type=jnp.float32)
        part = jnp.dot(rows.astype(jnp.bfloat16), bd_ref[kh],
                       preferred_element_type=jnp.float32)
        acc = part if acc is None else acc + part
    return acc                                            # [Ho, Wo*Cout] f32


def _disc_kernel(*refs):
    """refs = x, (rowsel, band, bias) * n_layers,
              rowsel_src, band_src, rowsel_cls, band_cls,
              out_src, out_cls."""
    x_ref = refs[0]
    o_src_ref, o_cls_ref = refs[-2], refs[-1]
    mid = refs[1:-2]
    n_layers = (len(mid) - 4) // 3

    h = x_ref[0]                                          # [H, W*Cin] bf16
    for l in range(n_layers):
        rs_ref, bd_ref, bias_ref = mid[3 * l:3 * l + 3]
        acc = _conv_block(h, rs_ref, bd_ref) + bias_ref[...]
        h = _leaky_relu(acc).astype(jnp.bfloat16)         # bf16 between layers

    rs_s, bd_s, rs_c, bd_c = mid[3 * n_layers:]
    o_src_ref[0] = _conv_block(h, rs_s, bd_s)             # PatchGAN head
    o_cls_ref[0] = _conv_block(h, rs_c, bd_c)             # classification head


# ---------------------------------------------------------------------------
# One-time weight transform: conv (OIHW) -> row-select + banded matmul operands
# ---------------------------------------------------------------------------
def _pack_conv(w, b, Hi, Wi, stride, pad):
    """Lower a PyTorch-layout conv into the kernel's matmul operands.

    Returns (rowsel [KH,Ho,Hi] bf16, band [KH, Wi*InC, Wo*OutC] bf16,
             bias_row [1, Wo*OutC] f32, Ho, Wo) for the [H, W*C] layout used
    inside the kernel.  Stride and zero padding are folded into rowsel / band
    (out-of-range taps become zero rows / zero entries).
    """
    OutC, InC, KH, KW = w.shape
    Ho = (Hi + 2 * pad - KH) // stride + 1
    Wo = (Wi + 2 * pad - KW) // stride + 1

    # rowsel[kh, oh, h] = 1  iff  h == stride*oh + kh - pad  (and 0 <= h < Hi)
    oh = jnp.arange(Ho)
    src_h = stride * oh[None, :, None] + jnp.arange(KH)[:, None, None] - pad
    rowsel = (src_h == jnp.arange(Hi)[None, None, :]).astype(jnp.bfloat16)

    # band[kh, w*InC+ci, ow*OutC+co] = w[co, ci, kh, kw], kw = w - (stride*ow - pad)
    w_idx = jnp.arange(Wi)
    ow_idx = jnp.arange(Wo)
    kw_idx = w_idx[:, None] - (stride * ow_idx[None, :] - pad)        # [Wi, Wo]
    valid = (kw_idx >= 0) & (kw_idx < KW)
    wt = jnp.transpose(w.astype(jnp.float32), (2, 3, 1, 0))           # [KH,KW,InC,OutC]
    band = wt[:, jnp.clip(kw_idx, 0, KW - 1)]                         # [KH,Wi,Wo,InC,OutC]
    band = jnp.where(valid[None, :, :, None, None], band, 0.0)
    band = jnp.transpose(band, (0, 1, 3, 2, 4)).reshape(KH, Wi * InC, Wo * OutC)
    band = band.astype(jnp.bfloat16)

    if b is None:
        b = jnp.zeros((OutC,), jnp.float32)
    bias_row = jnp.tile(b.astype(jnp.float32), Wo).reshape(1, Wo * OutC)
    return rowsel, band, bias_row, Ho, Wo


def pack_discriminator_params(params, image_size):
    """One-time weight transform (call once, outside the jitted forward)."""
    Hi = Wi = image_size
    layers = []
    for w, b in params["main"]:
        rs, band, bias, Hi, Wi = _pack_conv(w, b, Hi, Wi, stride=2, pad=1)
        layers.append((rs, band, bias))
    rs_s, band_s, _, _, _ = _pack_conv(params["conv1_w"], None, Hi, Wi,
                                       stride=1, pad=1)
    rs_c, band_c, _, Ho_c, Wo_c = _pack_conv(params["conv2_w"], None, Hi, Wi,
                                             stride=1, pad=0)
    assert Ho_c == 1 and Wo_c == 1, "conv2 kernel must cover the feature map"
    return {"layers": layers,
            "head_src": (rs_s, band_s),
            "head_cls": (rs_c, band_c)}


# ---------------------------------------------------------------------------
# Forward: one fused pallas_call over the whole network
# ---------------------------------------------------------------------------
def discriminator_forward(packed, x):
    """x: NCHW f32 (PyTorch convention)."""
    N, Cin, H, W = x.shape
    # One-time NCHW -> [N, H, W*C] channels-last slab, cast to bf16 right away.
    x2d = jnp.transpose(x, (0, 2, 3, 1)).reshape(N, H, W * Cin).astype(jnp.bfloat16)

    layers = packed["layers"]
    rs_s, bd_s = packed["head_src"]
    rs_c, bd_c = packed["head_cls"]

    resident3 = lambda n: (0, 0, 0)
    resident2 = lambda n: (0, 0)

    operands = [x2d]
    in_specs = [pl.BlockSpec((1, H, W * Cin), lambda n: (n, 0, 0))]
    for rs, bd, bias in layers:
        operands += [rs, bd, bias]
        in_specs += [pl.BlockSpec(rs.shape, resident3),
                     pl.BlockSpec(bd.shape, resident3),
                     pl.BlockSpec(bias.shape, resident2)]
    for rs, bd in (packed["head_src"], packed["head_cls"]):
        operands += [rs, bd]
        in_specs += [pl.BlockSpec(rs.shape, resident3),
                     pl.BlockSpec(bd.shape, resident3)]

    Ho_s, cols_s = rs_s.shape[1], bd_s.shape[2]       # out_src: [Ho, Wo*1]
    Ho_c, cols_c = rs_c.shape[1], bd_c.shape[2]       # out_cls: [1, c_dim]

    out_shape = (jax.ShapeDtypeStruct((N, Ho_s, cols_s), jnp.float32),
                 jax.ShapeDtypeStruct((N, Ho_c, cols_c), jnp.float32))
    out_specs = (pl.BlockSpec((1, Ho_s, cols_s), lambda n: (n, 0, 0)),
                 pl.BlockSpec((1, Ho_c, cols_c), lambda n: (n, 0, 0)))

    # Advisory cost estimate so XLA schedules this µs-scale custom call.
    flops = 0
    conv_ops = [(rs, bd) for rs, bd, _ in layers] + [(rs_s, bd_s), (rs_c, bd_c)]
    for rs, bd in conv_ops:
        kh, ho, hi = rs.shape
        k, c = bd.shape[1], bd.shape[2]
        flops += kh * (2 * ho * hi * k + 2 * ho * k * c)
    flops *= N
    bytes_accessed = sum(int(o.size) * o.dtype.itemsize for o in operands)
    bytes_accessed += sum(math.prod(s.shape) * 4 for s in out_shape)

    out_src, out_cls = pl.pallas_call(
        _disc_kernel,
        out_shape=out_shape,
        grid=(N,),
        in_specs=in_specs,
        out_specs=out_specs,
        compiler_params=pltpu.CompilerParams(
            dimension_semantics=("parallel",),        # v7x: one image per TC
            vmem_limit_bytes=VMEM_LIMIT),
        cost_estimate=pl.CostEstimate(flops=flops, transcendentals=0,
                                      bytes_accessed=bytes_accessed),
    )(*operands)

    # torch `.squeeze()`: drop every size-1 dim (incl. the batch dim if N == 1).
    return jnp.squeeze(out_src), jnp.squeeze(out_cls)


# ---------------------------------------------------------------------------
# Discriminator parameters (mirrors BaseNetwork._weights_init_fn)
# ---------------------------------------------------------------------------
def init_discriminator_params(key, image_size=16, conv_dim=8, c_dim=5,
                              repeat_num=3):
    """Conv weights ~ N(0, 0.02), biases = 0 (heads are bias-free)."""
    params = {"main": []}
    in_ch, out_ch = 3, conv_dim
    for _ in range(repeat_num):
        key, sub = jax.random.split(key)
        w = 0.02 * jax.random.normal(sub, (out_ch, in_ch, 4, 4), jnp.float32)
        b = jnp.zeros((out_ch,), jnp.float32)
        params["main"].append((w, b))
        in_ch, out_ch = out_ch, out_ch * 2
    curr_dim = in_ch
    ksize = image_size // (2 ** repeat_num)

    key, sub = jax.random.split(key)
    params["conv1_w"] = 0.02 * jax.random.normal(sub, (1, curr_dim, 3, 3),
                                                 jnp.float32)
    key, sub = jax.random.split(key)
    params["conv2_w"] = 0.02 * jax.random.normal(
        sub, (c_dim, curr_dim, ksize, ksize), jnp.float32)
    return params


# ---------------------------------------------------------------------------
# Pure-JAX reference (silent correctness check; f32 end-to-end)
# ---------------------------------------------------------------------------
def _conv_ref(x, w, b, stride, padding):
    out = jax.lax.conv_general_dilated(
        x, w, window_strides=(stride, stride),
        padding=((padding, padding), (padding, padding)),
        dimension_numbers=("NCHW", "OIHW", "NCHW"),
        precision=jax.lax.Precision.HIGHEST,
    )
    if b is not None:
        out = out + b[None, :, None, None]
    return out


def _forward_ref(params, x):
    h = x
    for w, b in params["main"]:
        h = _conv_ref(h, w, b, 2, 1)
        h = jnp.where(h >= 0, h, NEG_SLOPE * h)
    out_src = _conv_ref(h, params["conv1_w"], None, 1, 1)
    out_cls = _conv_ref(h, params["conv2_w"], None, 1, 0)
    return jnp.squeeze(out_src), jnp.squeeze(out_cls)


if __name__ == "__main__":
    key = jax.random.PRNGKey(0)
    key, xkey = jax.random.split(key)

    # Small config consistent with the module: image_size=16, conv_dim=8,
    # c_dim=5, repeat_num=3  ->  final feature map 32 x 2 x 2, conv2 kernel 2.
    image_size, conv_dim, c_dim, repeat_num = 16, 8, 5, 3
    x = jax.random.normal(xkey, (2, 3, image_size, image_size), jnp.float32)

    params = init_discriminator_params(
        key, image_size=image_size, conv_dim=conv_dim,
        c_dim=c_dim, repeat_num=repeat_num,
    )
    packed = pack_discriminator_params(params, image_size)   # one-time transform

    fwd = jax.jit(discriminator_forward)
    out_src, out_cls = fwd(packed, x)
    out_src, out_cls = jax.block_until_ready((out_src, out_cls))

    # Silent sanity check vs the pure-JAX f32 reference (kernel uses bf16
    # activations with f32 accumulation -> loose-ish tolerance, intentional).
    ref_src, ref_cls = _forward_ref(params, x)
    assert out_src.shape == (2, 2, 2) and out_cls.shape == (2, c_dim)
    assert jnp.allclose(out_src, ref_src, rtol=5e-2, atol=1e-3)
    assert jnp.allclose(out_cls, ref_cls, rtol=5e-2, atol=1e-3)

    print("KERNEL_OK")
</pallas_src>

<mosaic_0001>
module attributes {stable_mosaic.version = 11 : i64} {
  func.func @_disc_kernel(%arg0: i32, %arg1: memref<1x16x48xbf16, #tpu.memory_space<vmem>>, %arg2: memref<4x8x16xbf16, #tpu.memory_space<vmem>>, %arg3: memref<4x48x64xbf16, #tpu.memory_space<vmem>>, %arg4: memref<1x64xf32, #tpu.memory_space<vmem>>, %arg5: memref<4x4x8xbf16, #tpu.memory_space<vmem>>, %arg6: memref<4x64x64xbf16, #tpu.memory_space<vmem>>, %arg7: memref<1x64xf32, #tpu.memory_space<vmem>>, %arg8: memref<4x2x4xbf16, #tpu.memory_space<vmem>>, %arg9: memref<4x64x64xbf16, #tpu.memory_space<vmem>>, %arg10: memref<1x64xf32, #tpu.memory_space<vmem>>, %arg11: memref<3x2x2xbf16, #tpu.memory_space<vmem>>, %arg12: memref<3x64x2xbf16, #tpu.memory_space<vmem>>, %arg13: memref<2x1x2xbf16, #tpu.memory_space<vmem>>, %arg14: memref<2x64x5xbf16, #tpu.memory_space<vmem>>, %arg15: memref<1x2x2xf32, #tpu.memory_space<vmem>>, %arg16: memref<1x1x5xf32, #tpu.memory_space<vmem>>) attributes {dimension_semantics = [#tpu.dimension_semantics<parallel>], iteration_bounds = array<i64: 2>, scalar_prefetch = 0 : i64, scratch_operands = 0 : i64, tpu.core_type = #tpu.core_type<tc>, window_params = [{transform_indices = @transform_0, window_bounds = array<i64: 1, 16, 48>}, {pipeline_mode = #tpu.pipeline_mode<synchronous>, transform_indices = @transform_1, window_bounds = array<i64: 4, 8, 16>}, {pipeline_mode = #tpu.pipeline_mode<synchronous>, transform_indices = @transform_2, window_bounds = array<i64: 4, 48, 64>}, {pipeline_mode = #tpu.pipeline_mode<synchronous>, transform_indices = @transform_3, window_bounds = array<i64: 1, 64>}, {pipeline_mode = #tpu.pipeline_mode<synchronous>, transform_indices = @transform_4, window_bounds = array<i64: 4, 4, 8>}, {pipeline_mode = #tpu.pipeline_mode<synchronous>, transform_indices = @transform_5, window_bounds = array<i64: 4, 64, 64>}, {pipeline_mode = #tpu.pipeline_mode<synchronous>, transform_indices = @transform_6, window_bounds = array<i64: 1, 64>}, {pipeline_mode = #tpu.pipeline_mode<synchronous>, transform_indices = @transform_7, window_bounds = array<i64: 4, 2, 4>}, {pipeline_mode = #tpu.pipeline_mode<synchronous>, transform_indices = @transform_8, window_bounds = array<i64: 4, 64, 64>}, {pipeline_mode = #tpu.pipeline_mode<synchronous>, transform_indices = @transform_9, window_bounds = array<i64: 1, 64>}, {pipeline_mode = #tpu.pipeline_mode<synchronous>, transform_indices = @transform_10, window_bounds = array<i64: 3, 2, 2>}, {pipeline_mode = #tpu.pipeline_mode<synchronous>, transform_indices = @transform_11, window_bounds = array<i64: 3, 64, 2>}, {pipeline_mode = #tpu.pipeline_mode<synchronous>, transform_indices = @transform_12, window_bounds = array<i64: 2, 1, 2>}, {pipeline_mode = #tpu.pipeline_mode<synchronous>, transform_indices = @transform_13, window_bounds = array<i64: 2, 64, 5>}, {transform_indices = @transform_14, window_bounds = array<i64: 1, 2, 2>}, {transform_indices = @transform_15, window_bounds = array<i64: 1, 1, 5>}]} {
    %c0 = arith.constant 0 : index
    %c0_0 = arith.constant 0 : index
    %c0_1 = arith.constant 0 : index
    %0 = vector.load %arg1[%c0, %c0_0, %c0_1] : memref<1x16x48xbf16, #tpu.memory_space<vmem>>, vector<1x16x48xbf16>
    %1 = vector.shape_cast %0 : vector<1x16x48xbf16> to vector<16x48xbf16>
    %c0_2 = arith.constant 0 : index
    %c0_3 = arith.constant 0 : index
    %c0_4 = arith.constant 0 : index
    %2 = vector.load %arg2[%c0_2, %c0_3, %c0_4] : memref<4x8x16xbf16, #tpu.memory_space<vmem>>, vector<1x8x16xbf16>
    %3 = vector.shape_cast %2 : vector<1x8x16xbf16> to vector<8x16xbf16>
    %cst = arith.constant dense<0.000000e+00> : vector<8x48xf32>
    %4 = tpu.matmul %3, %1, %cst {dimension_numbers = #tpu.dot_dimension_numbers<[1], [0], [0], [1], [0, 0, 1, 1], [], []>} : vector<8x16xbf16>, vector<16x48xbf16>, vector<8x48xf32> -> vector<8x48xf32>
    %5 = arith.truncf %4 : vector<8x48xf32> to vector<8x48xbf16>
    %c0_5 = arith.constant 0 : index
    %c0_6 = arith.constant 0 : index
    %c0_7 = arith.constant 0 : index
    %6 = vector.load %arg3[%c0_5, %c0_6, %c0_7] : memref<4x48x64xbf16, #tpu.memory_space<vmem>>, vector<1x48x64xbf16>
    %7 = vector.shape_cast %6 : vector<1x48x64xbf16> to vector<48x64xbf16>
    %cst_8 = arith.constant dense<0.000000e+00> : vector<8x64xf32>
    %8 = tpu.matmul %5, %7, %cst_8 {dimension_numbers = #tpu.dot_dimension_numbers<[1], [0], [0], [1], [0, 0, 1, 1], [], []>} : vector<8x48xbf16>, vector<48x64xbf16>, vector<8x64xf32> -> vector<8x64xf32>
    %c1 = arith.constant 1 : index
    %c0_9 = arith.constant 0 : index
    %c0_10 = arith.constant 0 : index
    %9 = vector.load %arg2[%c1, %c0_9, %c0_10] : memref<4x8x16xbf16, #tpu.memory_space<vmem>>, vector<1x8x16xbf16>
    %10 = vector.shape_cast %9 : vector<1x8x16xbf16> to vector<8x16xbf16>
    %cst_11 = arith.constant dense<0.000000e+00> : vector<8x48xf32>
    %11 = tpu.matmul %10, %1, %cst_11 {dimension_numbers = #tpu.dot_dimension_numbers<[1], [0], [0], [1], [0, 0, 1, 1], [], []>} : vector<8x16xbf16>, vector<16x48xbf16>, vector<8x48xf32> -> vector<8x48xf32>
    %12 = arith.truncf %11 : vector<8x48xf32> to vector<8x48xbf16>
    %c1_12 = arith.constant 1 : index
    %c0_13 = arith.constant 0 : index
    %c0_14 = arith.constant 0 : index
    %13 = vector.load %arg3[%c1_12, %c0_13, %c0_14] : memref<4x48x64xbf16, #tpu.memory_space<vmem>>, vector<1x48x64xbf16>
    %14 = vector.shape_cast %13 : vector<1x48x64xbf16> to vector<48x64xbf16>
    %cst_15 = arith.constant dense<0.000000e+00> : vector<8x64xf32>
    %15 = tpu.matmul %12, %14, %cst_15 {dimension_numbers = #tpu.dot_dimension_numbers<[1], [0], [0], [1], [0, 0, 1, 1], [], []>} : vector<8x48xbf16>, vector<48x64xbf16>, vector<8x64xf32> -> vector<8x64xf32>
    %16 = arith.addf %8, %15 : vector<8x64xf32>
    %c2 = arith.constant 2 : index
    %c0_16 = arith.constant 0 : index
    %c0_17 = arith.constant 0 : index
    %17 = vector.load %arg2[%c2, %c0_16, %c0_17] : memref<4x8x16xbf16, #tpu.memory_space<vmem>>, vector<1x8x16xbf16>
    %18 = vector.shape_cast %17 : vector<1x8x16xbf16> to vector<8x16xbf16>
    %cst_18 = arith.constant dense<0.000000e+00> : vector<8x48xf32>
    %19 = tpu.matmul %18, %1, %cst_18 {dimension_numbers = #tpu.dot_dimension_numbers<[1], [0], [0], [1], [0, 0, 1, 1], [], []>} : vector<8x16xbf16>, vector<16x48xbf16>, vector<8x48xf32> -> vector<8x48xf32>
    %20 = arith.truncf %19 : vector<8x48xf32> to vector<8x48xbf16>
    %c2_19 = arith.constant 2 : index
    %c0_20 = arith.constant 0 : index
    %c0_21 = arith.constant 0 : index
    %21 = vector.load %arg3[%c2_19, %c0_20, %c0_21] : memref<4x48x64xbf16, #tpu.memory_space<vmem>>, vector<1x48x64xbf16>
    %22 = vector.shape_cast %21 : vector<1x48x64xbf16> to vector<48x64xbf16>
    %cst_22 = arith.constant dense<0.000000e+00> : vector<8x64xf32>
    %23 = tpu.matmul %20, %22, %cst_22 {dimension_numbers = #tpu.dot_dimension_numbers<[1], [0], [0], [1], [0, 0, 1, 1], [], []>} : vector<8x48xbf16>, vector<48x64xbf16>, vector<8x64xf32> -> vector<8x64xf32>
    %24 = arith.addf %16, %23 : vector<8x64xf32>
    %c3 = arith.constant 3 : index
    %c0_23 = arith.constant 0 : index
    %c0_24 = arith.constant 0 : index
    %25 = vector.load %arg2[%c3, %c0_23, %c0_24] : memref<4x8x16xbf16, #tpu.memory_space<vmem>>, vector<1x8x16xbf16>
    %26 = vector.shape_cast %25 : vector<1x8x16xbf16> to vector<8x16xbf16>
    %cst_25 = arith.constant dense<0.000000e+00> : vector<8x48xf32>
    %27 = tpu.matmul %26, %1, %cst_25 {dimension_numbers = #tpu.dot_dimension_numbers<[1], [0], [0], [1], [0, 0, 1, 1], [], []>} : vector<8x16xbf16>, vector<16x48xbf16>, vector<8x48xf32> -> vector<8x48xf32>
    %28 = arith.truncf %27 : vector<8x48xf32> to vector<8x48xbf16>
    %c3_26 = arith.constant 3 : index
    %c0_27 = arith.constant 0 : index
    %c0_28 = arith.constant 0 : index
    %29 = vector.load %arg3[%c3_26, %c0_27, %c0_28] : memref<4x48x64xbf16, #tpu.memory_space<vmem>>, vector<1x48x64xbf16>
    %30 = vector.shape_cast %29 : vector<1x48x64xbf16> to vector<48x64xbf16>
    %cst_29 = arith.constant dense<0.000000e+00> : vector<8x64xf32>
    %31 = tpu.matmul %28, %30, %cst_29 {dimension_numbers = #tpu.dot_dimension_numbers<[1], [0], [0], [1], [0, 0, 1, 1], [], []>} : vector<8x48xbf16>, vector<48x64xbf16>, vector<8x64xf32> -> vector<8x64xf32>
    %32 = arith.addf %24, %31 : vector<8x64xf32>
    %c0_30 = arith.constant 0 : index
    %c0_31 = arith.constant 0 : index
    %33 = vector.load %arg4[%c0_30, %c0_31] : memref<1x64xf32, #tpu.memory_space<vmem>>, vector<1x64xf32>
    %34 = vector.broadcast %33 : vector<1x64xf32> to vector<8x64xf32>
    %35 = arith.addf %32, %34 : vector<8x64xf32>
    %cst_32 = arith.constant 0.000000e+00 : f32
    %36 = vector.broadcast %cst_32 : f32 to vector<8x64xf32>
    %37 = arith.cmpf oge, %35, %36 : vector<8x64xf32>
    %cst_33 = arith.constant 0.00999999977 : f32
    %38 = vector.broadcast %cst_33 : f32 to vector<8x64xf32>
    %39 = arith.mulf %38, %35 : vector<8x64xf32>
    %40 = arith.select %37, %35, %39 : vector<8x64xi1>, vector<8x64xf32>
    %41 = arith.truncf %40 : vector<8x64xf32> to vector<8x64xbf16>
    %c0_34 = arith.constant 0 : index
    %c0_35 = arith.constant 0 : index
    %c0_36 = arith.constant 0 : index
    %42 = vector.load %arg5[%c0_34, %c0_35, %c0_36] : memref<4x4x8xbf16, #tpu.memory_space<vmem>>, vector<1x4x8xbf16>
    %43 = vector.shape_cast %42 : vector<1x4x8xbf16> to vector<4x8xbf16>
    %cst_37 = arith.constant dense<0.000000e+00> : vector<4x64xf32>
    %44 = tpu.matmul %43, %41, %cst_37 {dimension_numbers = #tpu.dot_dimension_numbers<[1], [0], [0], [1], [0, 0, 1, 1], [], []>} : vector<4x8xbf16>, vector<8x64xbf16>, vector<4x64xf32> -> vector<4x64xf32>
    %45 = arith.truncf %44 : vector<4x64xf32> to vector<4x64xbf16>
    %c0_38 = arith.constant 0 : index
    %c0_39 = arith.constant 0 : index
    %c0_40 = arith.constant 0 : index
    %46 = vector.load %arg6[%c0_38, %c0_39, %c0_40] : memref<4x64x64xbf16, #tpu.memory_space<vmem>>, vector<1x64x64xbf16>
    %47 = vector.shape_cast %46 : vector<1x64x64xbf16> to vector<64x64xbf16>
    %cst_41 = arith.constant dense<0.000000e+00> : vector<4x64xf32>
    %48 = tpu.matmul %45, %47, %cst_41 {dimension_numbers = #tpu.dot_dimension_numbers<[1], [0], [0], [1], [0, 0, 1, 1], [], []>} : vector<4x64xbf16>, vector<64x64xbf16>, vector<4x64xf32> -> vector<4x64xf32>
    %c1_42 = arith.constant 1 : index
    %c0_43 = arith.constant 0 : index
    %c0_44 = arith.constant 0 : index
    %49 = vector.load %arg5[%c1_42, %c0_43, %c0_44] : memref<4x4x8xbf16, #tpu.memory_space<vmem>>, vector<1x4x8xbf16>
    %50 = vector.shape_cast %49 : vector<1x4x8xbf16> to vector<4x8xbf16>
    %cst_45 = arith.constant dense<0.000000e+00> : vector<4x64xf32>
    %51 = tpu.matmul %50, %41, %cst_45 {dimension_numbers = #tpu.dot_dimension_numbers<[1], [0], [0], [1], [0, 0, 1, 1], [], []>} : vector<4x8xbf16>, vector<8x64xbf16>, vector<4x64xf32> -> vector<4x64xf32>
    %52 = arith.truncf %51 : vector<4x64xf32> to vector<4x64xbf16>
    %c1_46 = arith.constant 1 : index
    %c0_47 = arith.constant 0 : index
    %c0_48 = arith.constant 0 : index
    %53 = vector.load %arg6[%c1_46, %c0_47, %c0_48] : memref<4x64x64xbf16, #tpu.memory_space<vmem>>, vector<1x64x64xbf16>
    %54 = vector.shape_cast %53 : vector<1x64x64xbf16> to vector<64x64xbf16>
    %cst_49 = arith.constant dense<0.000000e+00> : vector<4x64xf32>
    %55 = tpu.matmul %52, %54, %cst_49 {dimension_numbers = #tpu.dot_dimension_numbers<[1], [0], [0], [1], [0, 0, 1, 1], [], []>} : vector<4x64xbf16>, vector<64x64xbf16>, vector<4x64xf32> -> vector<4x64xf32>
    %56 = arith.addf %48, %55 : vector<4x64xf32>
    %c2_50 = arith.constant 2 : index
    %c0_51 = arith.constant 0 : index
    %c0_52 = arith.constant 0 : index
    %57 = vector.load %arg5[%c2_50, %c0_51, %c0_52] : memref<4x4x8xbf16, #tpu.memory_space<vmem>>, vector<1x4x8xbf16>
    %58 = vector.shape_cast %57 : vector<1x4x8xbf16> to vector<4x8xbf16>
    %cst_53 = arith.constant dense<0.000000e+00> : vector<4x64xf32>
    %59 = tpu.matmul %58, %41, %cst_53 {dimension_numbers = #tpu.dot_dimension_numbers<[1], [0], [0], [1], [0, 0, 1, 1], [], []>} : vector<4x8xbf16>, vector<8x64xbf16>, vector<4x64xf32> -> vector<4x64xf32>
    %60 = arith.truncf %59 : vector<4x64xf32> to vector<4x64xbf16>
    %c2_54 = arith.constant 2 : index
    %c0_55 = arith.constant 0 : index
    %c0_56 = arith.constant 0 : index
    %61 = vector.load %arg6[%c2_54, %c0_55, %c0_56] : memref<4x64x64xbf16, #tpu.memory_space<vmem>>, vector<1x64x64xbf16>
    %62 = vector.shape_cast %61 : vector<1x64x64xbf16> to vector<64x64xbf16>
    %cst_57 = arith.constant dense<0.000000e+00> : vector<4x64xf32>
    %63 = tpu.matmul %60, %62, %cst_57 {dimension_numbers = #tpu.dot_dimension_numbers<[1], [0], [0], [1], [0, 0, 1, 1], [], []>} : vector<4x64xbf16>, vector<64x64xbf16>, vector<4x64xf32> -> vector<4x64xf32>
    %64 = arith.addf %56, %63 : vector<4x64xf32>
    %c3_58 = arith.constant 3 : index
    %c0_59 = arith.constant 0 : index
    %c0_60 = arith.constant 0 : index
    %65 = vector.load %arg5[%c3_58, %c0_59, %c0_60] : memref<4x4x8xbf16, #tpu.memory_space<vmem>>, vector<1x4x8xbf16>
    %66 = vector.shape_cast %65 : vector<1x4x8xbf16> to vector<4x8xbf16>
    %cst_61 = arith.constant dense<0.000000e+00> : vector<4x64xf32>
    %67 = tpu.matmul %66, %41, %cst_61 {dimension_numbers = #tpu.dot_dimension_numbers<[1], [0], [0], [1], [0, 0, 1, 1], [], []>} : vector<4x8xbf16>, vector<8x64xbf16>, vector<4x64xf32> -> vector<4x64xf32>
    %68 = arith.truncf %67 : vector<4x64xf32> to vector<4x64xbf16>
    %c3_62 = arith.constant 3 : index
    %c0_63 = arith.constant 0 : index
    %c0_64 = arith.constant 0 : index
    %69 = vector.load %arg6[%c3_62, %c0_63, %c0_64] : memref<4x64x64xbf16, #tpu.memory_space<vmem>>, vector<1x64x64xbf16>
    %70 = vector.shape_cast %69 : vector<1x64x64xbf16> to vector<64x64xbf16>
    %cst_65 = arith.constant dense<0.000000e+00> : vector<4x64xf32>
    %71 = tpu.matmul %68, %70, %cst_65 {dimension_numbers = #tpu.dot_dimension_numbers<[1], [0], [0], [1], [0, 0, 1, 1], [], []>} : vector<4x64xbf16>, vector<64x64xbf16>, vector<4x64xf32> -> vector<4x64xf32>
    %72 = arith.addf %64, %71 : vector<4x64xf32>
    %c0_66 = arith.constant 0 : index
    %c0_67 = arith.constant 0 : index
    %73 = vector.load %arg7[%c0_66, %c0_67] : memref<1x64xf32, #tpu.memory_space<vmem>>, vector<1x64xf32>
    %74 = vector.broadcast %73 : vector<1x64xf32> to vector<4x64xf32>
    %75 = arith.addf %72, %74 : vector<4x64xf32>
    %cst_68 = arith.constant 0.000000e+00 : f32
    %76 = vector.broadcast %cst_68 : f32 to vector<4x64xf32>
    %77 = arith.cmpf oge, %75, %76 : vector<4x64xf32>
    %cst_69 = arith.constant 0.00999999977 : f32
    %78 = vector.broadcast %cst_69 : f32 to vector<4x64xf32>
    %79 = arith.mulf %78, %75 : vector<4x64xf32>
    %80 = arith.select %77, %75, %79 : vector<4x64xi1>, vector<4x64xf32>
    %81 = arith.truncf %80 : vector<4x64xf32> to vector<4x64xbf16>
    %c0_70 = arith.constant 0 : index
    %c0_71 = arith.constant 0 : index
    %c0_72 = arith.constant 0 : index
    %82 = vector.load %arg8[%c0_70, %c0_71, %c0_72] : memref<4x2x4xbf16, #tpu.memory_space<vmem>>, vector<1x2x4xbf16>
    %83 = vector.shape_cast %82 : vector<1x2x4xbf16> to vector<2x4xbf16>
    %cst_73 = arith.constant dense<0.000000e+00> : vector<2x64xf32>
    %84 = tpu.matmul %83, %81, %cst_73 {dimension_numbers = #tpu.dot_dimension_numbers<[1], [0], [0], [1], [0, 0, 1, 1], [], []>} : vector<2x4xbf16>, vector<4x64xbf16>, vector<2x64xf32> -> vector<2x64xf32>
    %85 = arith.truncf %84 : vector<2x64xf32> to vector<2x64xbf16>
    %c0_74 = arith.constant 0 : index
    %c0_75 = arith.constant 0 : index
    %c0_76 = arith.constant 0 : index
    %86 = vector.load %arg9[%c0_74, %c0_75, %c0_76] : memref<4x64x64xbf16, #tpu.memory_space<vmem>>, vector<1x64x64xbf16>
    %87 = vector.shape_cast %86 : vector<1x64x64xbf16> to vector<64x64xbf16>
    %cst_77 = arith.constant dense<0.000000e+00> : vector<2x64xf32>
    %88 = tpu.matmul %85, %87, %cst_77 {dimension_numbers = #tpu.dot_dimension_numbers<[1], [0], [0], [1], [0, 0, 1, 1], [], []>} : vector<2x64xbf16>, vector<64x64xbf16>, vector<2x64xf32> -> vector<2x64xf32>
    %c1_78 = arith.constant 1 : index
    %c0_79 = arith.constant 0 : index
    %c0_80 = arith.constant 0 : index
    %89 = vector.load %arg8[%c1_78, %c0_79, %c0_80] : memref<4x2x4xbf16, #tpu.memory_space<vmem>>, vector<1x2x4xbf16>
    %90 = vector.shape_cast %89 : vector<1x2x4xbf16> to vector<2x4xbf16>
    %cst_81 = arith.constant dense<0.000000e+00> : vector<2x64xf32>
    %91 = tpu.matmul %90, %81, %cst_81 {dimension_numbers = #tpu.dot_dimension_numbers<[1], [0], [0], [1], [0, 0, 1, 1], [], []>} : vector<2x4xbf16>, vector<4x64xbf16>, vector<2x64xf32> -> vector<2x64xf32>
    %92 = arith.truncf %91 : vector<2x64xf32> to vector<2x64xbf16>
    %c1_82 = arith.constant 1 : index
    %c0_83 = arith.constant 0 : index
    %c0_84 = arith.constant 0 : index
    %93 = vector.load %arg9[%c1_82, %c0_83, %c0_84] : memref<4x64x64xbf16, #tpu.memory_space<vmem>>, vector<1x64x64xbf16>
    %94 = vector.shape_cast %93 : vector<1x64x64xbf16> to vector<64x64xbf16>
    %cst_85 = arith.constant dense<0.000000e+00> : vector<2x64xf32>
    %95 = tpu.matmul %92, %94, %cst_85 {dimension_numbers = #tpu.dot_dimension_numbers<[1], [0], [0], [1], [0, 0, 1, 1], [], []>} : vector<2x64xbf16>, vector<64x64xbf16>, vector<2x64xf32> -> vector<2x64xf32>
    %96 = arith.addf %88, %95 : vector<2x64xf32>
    %c2_86 = arith.constant 2 : index
    %c0_87 = arith.constant 0 : index
    %c0_88 = arith.constant 0 : index
    %97 = vector.load %arg8[%c2_86, %c0_87, %c0_88] : memref<4x2x4xbf16, #tpu.memory_space<vmem>>, vector<1x2x4xbf16>
    %98 = vector.shape_cast %97 : vector<1x2x4xbf16> to vector<2x4xbf16>
    %cst_89 = arith.constant dense<0.000000e+00> : vector<2x64xf32>
    %99 = tpu.matmul %98, %81, %cst_89 {dimension_numbers = #tpu.dot_dimension_numbers<[1], [0], [0], [1], [0, 0, 1, 1], [], []>} : vector<2x4xbf16>, vector<4x64xbf16>, vector<2x64xf32> -> vector<2x64xf32>
    %100 = arith.truncf %99 : vector<2x64xf32> to vector<2x64xbf16>
    %c2_90 = arith.constant 2 : index
    %c0_91 = arith.constant 0 : index
    %c0_92 = arith.constant 0 : index
    %101 = vector.load %arg9[%c2_90, %c0_91, %c0_92] : memref<4x64x64xbf16, #tpu.memory_space<vmem>>, vector<1x64x64xbf16>
    %102 = vector.shape_cast %101 : vector<1x64x64xbf16> to vector<64x64xbf16>
    %cst_93 = arith.constant dense<0.000000e+00> : vector<2x64xf32>
    %103 = tpu.matmul %100, %102, %cst_93 {dimension_numbers = #tpu.dot_dimension_numbers<[1], [0], [0], [1], [0, 0, 1, 1], [], []>} : vector<2x64xbf16>, vector<64x64xbf16>, vector<2x64xf32> -> vector<2x64xf32>
    %104 = arith.addf %96, %103 : vector<2x64xf32>
    %c3_94 = arith.constant 3 : index
    %c0_95 = arith.constant 0 : index
    %c0_96 = arith.constant 0 : index
    %105 = vector.load %arg8[%c3_94, %c0_95, %c0_96] : memref<4x2x4xbf16, #tpu.memory_space<vmem>>, vector<1x2x4xbf16>
    %106 = vector.shape_cast %105 : vector<1x2x4xbf16> to vector<2x4xbf16>
    %cst_97 = arith.constant dense<0.000000e+00> : vector<2x64xf32>
    %107 = tpu.matmul %106, %81, %cst_97 {dimension_numbers = #tpu.dot_dimension_numbers<[1], [0], [0], [1], [0, 0, 1, 1], [], []>} : vector<2x4xbf16>, vector<4x64xbf16>, vector<2x64xf32> -> vector<2x64xf32>
    %108 = arith.truncf %107 : vector<2x64xf32> to vector<2x64xbf16>
    %c3_98 = arith.constant 3 : index
    %c0_99 = arith.constant 0 : index
    %c0_100 = arith.constant 0 : index
    %109 = vector.load %arg9[%c3_98, %c0_99, %c0_100] : memref<4x64x64xbf16, #tpu.memory_space<vmem>>, vector<1x64x64xbf16>
    %110 = vector.shape_cast %109 : vector<1x64x64xbf16> to vector<64x64xbf16>
    %cst_101 = arith.constant dense<0.000000e+00> : vector<2x64xf32>
    %111 = tpu.matmul %108, %110, %cst_101 {dimension_numbers = #tpu.dot_dimension_numbers<[1], [0], [0], [1], [0, 0, 1, 1], [], []>} : vector<2x64xbf16>, vector<64x64xbf16>, vector<2x64xf32> -> vector<2x64xf32>
    %112 = arith.addf %104, %111 : vector<2x64xf32>
    %c0_102 = arith.constant 0 : index
    %c0_103 = arith.constant 0 : index
    %113 = vector.load %arg10[%c0_102, %c0_103] : memref<1x64xf32, #tpu.memory_space<vmem>>, vector<1x64xf32>
    %114 = vector.broadcast %113 : vector<1x64xf32> to vector<2x64xf32>
    %115 = arith.addf %112, %114 : vector<2x64xf32>
    %cst_104 = arith.constant 0.000000e+00 : f32
    %116 = vector.broadcast %cst_104 : f32 to vector<2x64xf32>
    %117 = arith.cmpf oge, %115, %116 : vector<2x64xf32>
    %cst_105 = arith.constant 0.00999999977 : f32
    %118 = vector.broadcast %cst_105 : f32 to vector<2x64xf32>
    %119 = arith.mulf %118, %115 : vector<2x64xf32>
    %120 = arith.select %117, %115, %119 : vector<2x64xi1>, vector<2x64xf32>
    %121 = arith.truncf %120 : vector<2x64xf32> to vector<2x64xbf16>
    %c0_106 = arith.constant 0 : index
    %c0_107 = arith.constant 0 : index
    %c0_108 = arith.constant 0 : index
    %122 = vector.load %arg11[%c0_106, %c0_107, %c0_108] : memref<3x2x2xbf16, #tpu.memory_space<vmem>>, vector<1x2x2xbf16>
    %123 = vector.shape_cast %122 : vector<1x2x2xbf16> to vector<2x2xbf16>
    %cst_109 = arith.constant dense<0.000000e+00> : vector<2x64xf32>
    %124 = tpu.matmul %123, %121, %cst_109 {dimension_numbers = #tpu.dot_dimension_numbers<[1], [0], [0], [1], [0, 0, 1, 1], [], []>} : vector<2x2xbf16>, vector<2x64xbf16>, vector<2x64xf32> -> vector<2x64xf32>
    %125 = arith.truncf %124 : vector<2x64xf32> to vector<2x64xbf16>
    %c0_110 = arith.constant 0 : index
    %c0_111 = arith.constant 0 : index
    %c0_112 = arith.constant 0 : index
    %126 = vector.load %arg12[%c0_110, %c0_111, %c0_112] : memref<3x64x2xbf16, #tpu.memory_space<vmem>>, vector<1x64x2xbf16>
    %127 = vector.shape_cast %126 : vector<1x64x2xbf16> to vector<64x2xbf16>
    %cst_113 = arith.constant dense<0.000000e+00> : vector<2x2xf32>
    %128 = tpu.matmul %125, %127, %cst_113 {dimension_numbers = #tpu.dot_dimension_numbers<[1], [0], [0], [1], [0, 0, 1, 1], [], []>} : vector<2x64xbf16>, vector<64x2xbf16>, vector<2x2xf32> -> vector<2x2xf32>
    %c1_114 = arith.constant 1 : index
    %c0_115 = arith.constant 0 : index
    %c0_116 = arith.constant 0 : index
    %129 = vector.load %arg11[%c1_114, %c0_115, %c0_116] : memref<3x2x2xbf16, #tpu.memory_space<vmem>>, vector<1x2x2xbf16>
    %130 = vector.shape_cast %129 : vector<1x2x2xbf16> to vector<2x2xbf16>
    %cst_117 = arith.constant dense<0.000000e+00> : vector<2x64xf32>
    %131 = tpu.matmul %130, %121, %cst_117 {dimension_numbers = #tpu.dot_dimension_numbers<[1], [0], [0], [1], [0, 0, 1, 1], [], []>} : vector<2x2xbf16>, vector<2x64xbf16>, vector<2x64xf32> -> vector<2x64xf32>
    %132 = arith.truncf %131 : vector<2x64xf32> to vector<2x64xbf16>
    %c1_118 = arith.constant 1 : index
    %c0_119 = arith.constant 0 : index
    %c0_120 = arith.constant 0 : index
    %133 = vector.load %arg12[%c1_118, %c0_119, %c0_120] : memref<3x64x2xbf16, #tpu.memory_space<vmem>>, vector<1x64x2xbf16>
    %134 = vector.shape_cast %133 : vector<1x64x2xbf16> to vector<64x2xbf16>
    %cst_121 = arith.constant dense<0.000000e+00> : vector<2x2xf32>
    %135 = tpu.matmul %132, %134, %cst_121 {dimension_numbers = #tpu.dot_dimension_numbers<[1], [0], [0], [1], [0, 0, 1, 1], [], []>} : vector<2x64xbf16>, vector<64x2xbf16>, vector<2x2xf32> -> vector<2x2xf32>
    %136 = arith.addf %128, %135 : vector<2x2xf32>
    %c2_122 = arith.constant 2 : index
    %c0_123 = arith.constant 0 : index
    %c0_124 = arith.constant 0 : index
    %137 = vector.load %arg11[%c2_122, %c0_123, %c0_124] : memref<3x2x2xbf16, #tpu.memory_space<vmem>>, vector<1x2x2xbf16>
    %138 = vector.shape_cast %137 : vector<1x2x2xbf16> to vector<2x2xbf16>
    %cst_125 = arith.constant dense<0.000000e+00> : vector<2x64xf32>
    %139 = tpu.matmul %138, %121, %cst_125 {dimension_numbers = #tpu.dot_dimension_numbers<[1], [0], [0], [1], [0, 0, 1, 1], [], []>} : vector<2x2xbf16>, vector<2x64xbf16>, vector<2x64xf32> -> vector<2x64xf32>
    %140 = arith.truncf %139 : vector<2x64xf32> to vector<2x64xbf16>
    %c2_126 = arith.constant 2 : index
    %c0_127 = arith.constant 0 : index
    %c0_128 = arith.constant 0 : index
    %141 = vector.load %arg12[%c2_126, %c0_127, %c0_128] : memref<3x64x2xbf16, #tpu.memory_space<vmem>>, vector<1x64x2xbf16>
    %142 = vector.shape_cast %141 : vector<1x64x2xbf16> to vector<64x2xbf16>
    %cst_129 = arith.constant dense<0.000000e+00> : vector<2x2xf32>
    %143 = tpu.matmul %140, %142, %cst_129 {dimension_numbers = #tpu.dot_dimension_numbers<[1], [0], [0], [1], [0, 0, 1, 1], [], []>} : vector<2x64xbf16>, vector<64x2xbf16>, vector<2x2xf32> -> vector<2x2xf32>
    %144 = arith.addf %136, %143 : vector<2x2xf32>
    %c0_130 = arith.constant 0 : index
    %c0_131 = arith.constant 0 : index
    %c0_132 = arith.constant 0 : index
    %145 = vector.load %arg15[%c0_130, %c0_131, %c0_132] : memref<1x2x2xf32, #tpu.memory_space<vmem>>, vector<1x2x2xf32>
    %146 = vector.shape_cast %145 : vector<1x2x2xf32> to vector<2x2xf32>
    %147 = vector.shape_cast %144 : vector<2x2xf32> to vector<1x2x2xf32>
    tpu.vector_store %arg15[%c0_130, %c0_131, %c0_132], %147 {strides = array<i32>} : memref<1x2x2xf32, #tpu.memory_space<vmem>>, vector<1x2x2xf32>,
    %c0_133 = arith.constant 0 : index
    %c0_134 = arith.constant 0 : index
    %c0_135 = arith.constant 0 : index
    %148 = vector.load %arg13[%c0_133, %c0_134, %c0_135] : memref<2x1x2xbf16, #tpu.memory_space<vmem>>, vector<1x1x2xbf16>
    %149 = vector.shape_cast %148 : vector<1x1x2xbf16> to vector<1x2xbf16>
    %cst_136 = arith.constant dense<0.000000e+00> : vector<1x64xf32>
    %150 = tpu.matmul %149, %121, %cst_136 {dimension_numbers = #tpu.dot_dimension_numbers<[1], [0], [0], [1], [0, 0, 1, 1], [], []>} : vector<1x2xbf16>, vector<2x64xbf16>, vector<1x64xf32> -> vector<1x64xf32>
    %151 = arith.truncf %150 : vector<1x64xf32> to vector<1x64xbf16>
    %c0_137 = arith.constant 0 : index
    %c0_138 = arith.constant 0 : index
    %c0_139 = arith.constant 0 : index
    %152 = vector.load %arg14[%c0_137, %c0_138, %c0_139] : memref<2x64x5xbf16, #tpu.memory_space<vmem>>, vector<1x64x5xbf16>
    %153 = vector.shape_cast %152 : vector<1x64x5xbf16> to vector<64x5xbf16>
    %cst_140 = arith.constant dense<0.000000e+00> : vector<1x5xf32>
    %154 = tpu.matmul %151, %153, %cst_140 {dimension_numbers = #tpu.dot_dimension_numbers<[1], [0], [0], [1], [0, 0, 1, 1], [], []>} : vector<1x64xbf16>, vector<64x5xbf16>, vector<1x5xf32> -> vector<1x5xf32>
    %c1_141 = arith.constant 1 : index
    %c0_142 = arith.constant 0 : index
    %c0_143 = arith.constant 0 : index
    %155 = vector.load %arg13[%c1_141, %c0_142, %c0_143] : memref<2x1x2xbf16, #tpu.memory_space<vmem>>, vector<1x1x2xbf16>
    %156 = vector.shape_cast %155 : vector<1x1x2xbf16> to vector<1x2xbf16>
    %cst_144 = arith.constant dense<0.000000e+00> : vector<1x64xf32>
    %157 = tpu.matmul %156, %121, %cst_144 {dimension_numbers = #tpu.dot_dimension_numbers<[1], [0], [0], [1], [0, 0, 1, 1], [], []>} : vector<1x2xbf16>, vector<2x64xbf16>, vector<1x64xf32> -> vector<1x64xf32>
    %158 = arith.truncf %157 : vector<1x64xf32> to vector<1x64xbf16>
    %c1_145 = arith.constant 1 : index
    %c0_146 = arith.constant 0 : index
    %c0_147 = arith.constant 0 : index
    %159 = vector.load %arg14[%c1_145, %c0_146, %c0_147] : memref<2x64x5xbf16, #tpu.memory_space<vmem>>, vector<1x64x5xbf16>
    %160 = vector.shape_cast %159 : vector<1x64x5xbf16> to vector<64x5xbf16>
    %cst_148 = arith.constant dense<0.000000e+00> : vector<1x5xf32>
    %161 = tpu.matmul %158, %160, %cst_148 {dimension_numbers = #tpu.dot_dimension_numbers<[1], [0], [0], [1], [0, 0, 1, 1], [], []>} : vector<1x64xbf16>, vector<64x5xbf16>, vector<1x5xf32> -> vector<1x5xf32>
    %162 = arith.addf %154, %161 : vector<1x5xf32>
    %c0_149 = arith.constant 0 : index
    %c0_150 = arith.constant 0 : index
    %c0_151 = arith.constant 0 : index
    %163 = vector.load %arg16[%c0_149, %c0_150, %c0_151] : memref<1x1x5xf32, #tpu.memory_space<vmem>>, vector<1x1x5xf32>
    %164 = vector.shape_cast %163 : vector<1x1x5xf32> to vector<1x5xf32>
    %165 = vector.shape_cast %162 : vector<1x5xf32> to vector<1x1x5xf32>
    tpu.vector_store %arg16[%c0_149, %c0_150, %c0_151], %165 {strides = array<i32>} : memref<1x1x5xf32, #tpu.memory_space<vmem>>, vector<1x1x5xf32>,
    return
  }
  func.func @transform_0(%arg0: i32) -> (i32, i32, i32) {
    %c0_i32 = arith.constant 0 : i32
    %c0_i32_0 = arith.constant 0 : i32
    %c0_i32_1 = arith.constant 0 : i32
    return %arg0, %c0_i32, %c0_i32_0 : i32, i32, i32
  }
  func.func @transform_1(%arg0: i32) -> (i32, i32, i32) {
    %c0_i32 = arith.constant 0 : i32
    %c0_i32_0 = arith.constant 0 : i32
    %c0_i32_1 = arith.constant 0 : i32
    %c0_i32_2 = arith.constant 0 : i32
    return %c0_i32, %c0_i32_0, %c0_i32_1 : i32, i32, i32
  }
  func.func @transform_2(%arg0: i32) -> (i32, i32, i32) {
    %c0_i32 = arith.constant 0 : i32
    %c0_i32_0 = arith.constant 0 : i32
    %c0_i32_1 = arith.constant 0 : i32
    %c0_i32_2 = arith.constant 0 : i32
    return %c0_i32, %c0_i32_0, %c0_i32_1 : i32, i32, i32
  }
  func.func @transform_3(%arg0: i32) -> (i32, i32) {
    %c0_i32 = arith.constant 0 : i32
    %c0_i32_0 = arith.constant 0 : i32
    %c0_i32_1 = arith.constant 0 : i32
    return %c0_i32, %c0_i32_0 : i32, i32
  }
  func.func @transform_4(%arg0: i32) -> (i32, i32, i32) {
    %c0_i32 = arith.constant 0 : i32
    %c0_i32_0 = arith.constant 0 : i32
    %c0_i32_1 = arith.constant 0 : i32
    %c0_i32_2 = arith.constant 0 : i32
    return %c0_i32, %c0_i32_0, %c0_i32_1 : i32, i32, i32
  }
  func.func @transform_5(%arg0: i32) -> (i32, i32, i32) {
    %c0_i32 = arith.constant 0 : i32
    %c0_i32_0 = arith.constant 0 : i32
    %c0_i32_1 = arith.constant 0 : i32
    %c0_i32_2 = arith.constant 0 : i32
    return %c0_i32, %c0_i32_0, %c0_i32_1 : i32, i32, i32
  }
  func.func @transform_6(%arg0: i32) -> (i32, i32) {
    %c0_i32 = arith.constant 0 : i32
    %c0_i32_0 = arith.constant 0 : i32
    %c0_i32_1 = arith.constant 0 : i32
    return %c0_i32, %c0_i32_0 : i32, i32
  }
  func.func @transform_7(%arg0: i32) -> (i32, i32, i32) {
    %c0_i32 = arith.constant 0 : i32
    %c0_i32_0 = arith.constant 0 : i32
    %c0_i32_1 = arith.constant 0 : i32
    %c0_i32_2 = arith.constant 0 : i32
    return %c0_i32, %c0_i32_0, %c0_i32_1 : i32, i32, i32
  }
  func.func @transform_8(%arg0: i32) -> (i32, i32, i32) {
    %c0_i32 = arith.constant 0 : i32
    %c0_i32_0 = arith.constant 0 : i32
    %c0_i32_1 = arith.constant 0 : i32
    %c0_i32_2 = arith.constant 0 : i32
    return %c0_i32, %c0_i32_0, %c0_i32_1 : i32, i32, i32
  }
  func.func @transform_9(%arg0: i32) -> (i32, i32) {
    %c0_i32 = arith.constant 0 : i32
    %c0_i32_0 = arith.constant 0 : i32
    %c0_i32_1 = arith.constant 0 : i32
    return %c0_i32, %c0_i32_0 : i32, i32
  }
  func.func @transform_10(%arg0: i32) -> (i32, i32, i32) {
    %c0_i32 = arith.constant 0 : i32
    %c0_i32_0 = arith.constant 0 : i32
    %c0_i32_1 = arith.constant 0 : i32
    %c0_i32_2 = arith.constant 0 : i32
    return %c0_i32, %c0_i32_0, %c0_i32_1 : i32, i32, i32
  }
  func.func @transform_11(%arg0: i32) -> (i32, i32, i32) {
    %c0_i32 = arith.constant 0 : i32
    %c0_i32_0 = arith.constant 0 : i32
    %c0_i32_1 = arith.constant 0 : i32
    %c0_i32_2 = arith.constant 0 : i32
    return %c0_i32, %c0_i32_0, %c0_i32_1 : i32, i32, i32
  }
  func.func @transform_12(%arg0: i32) -> (i32, i32, i32) {
    %c0_i32 = arith.constant 0 : i32
    %c0_i32_0 = arith.constant 0 : i32
    %c0_i32_1 = arith.constant 0 : i32
    %c0_i32_2 = arith.constant 0 : i32
    return %c0_i32, %c0_i32_0, %c0_i32_1 : i32, i32, i32
  }
  func.func @transform_13(%arg0: i32) -> (i32, i32, i32) {
    %c0_i32 = arith.constant 0 : i32
    %c0_i32_0 = arith.constant 0 : i32
    %c0_i32_1 = arith.constant 0 : i32
    %c0_i32_2 = arith.constant 0 : i32
    return %c0_i32, %c0_i32_0, %c0_i32_1 : i32, i32, i32
  }
  func.func @transform_14(%arg0: i32) -> (i32, i32, i32) {
    %c0_i32 = arith.constant 0 : i32
    %c0_i32_0 = arith.constant 0 : i32
    %c0_i32_1 = arith.constant 0 : i32
    return %arg0, %c0_i32, %c0_i32_0 : i32, i32, i32
  }
  func.func @transform_15(%arg0: i32) -> (i32, i32, i32) {
    %c0_i32 = arith.constant 0 : i32
    %c0_i32_0 = arith.constant 0 : i32
    %c0_i32_1 = arith.constant 0 : i32
    return %arg0, %c0_i32, %c0_i32_0 : i32, i32, i32
  }
}

</mosaic_0001>

<llo_original>
// kernel: discriminator_forward.1
$region0: #{discriminator_forward.1}
  #allocation0 [shape = 'u32[]', space=smem, size = 0x4, offset = 0x4, fixed_abs, tag = 'smem constant byte address 0x4 - core index']
  #allocation1 [shape = 'u32[144,128]{1,0:T(1,128)}', space=vmem, size = 0x12000, scoped, tag = 'internal scratch']
  %s0 = inlined_call_operand.vmem [shape: bf16[2,16,48], index: 0, kind: input, shape index: {}]
  %s1 = inlined_call_operand.vmem [shape: bf16[4,8,16], index: 1, kind: input, shape index: {}]
  %s2 = inlined_call_operand.vmem [shape: bf16[4,48,64], index: 2, kind: input, shape index: {}]
  %s3 = inlined_call_operand.vmem [shape: f32[1,64], index: 3, kind: input, shape index: {}]
  %s4 = inlined_call_operand.vmem [shape: bf16[4,4,8], index: 4, kind: input, shape index: {}]
  %s5 = inlined_call_operand.vmem [shape: bf16[4,64,64], index: 5, kind: input, shape index: {}]
  %s6 = inlined_call_operand.vmem [shape: f32[1,64], index: 6, kind: input, shape index: {}]
  %s7 = inlined_call_operand.vmem [shape: bf16[4,2,4], index: 7, kind: input, shape index: {}]
  %s8 = inlined_call_operand.vmem [shape: bf16[4,64,64], index: 8, kind: input, shape index: {}]
  %s9 = inlined_call_operand.vmem [shape: f32[1,64], index: 9, kind: input, shape index: {}]
  %s10 = inlined_call_operand.vmem [shape: bf16[3,2,2], index: 10, kind: input, shape index: {}]
  %s11 = inlined_call_operand.vmem [shape: bf16[3,64,2], index: 11, kind: input, shape index: {}]
  %s12 = inlined_call_operand.vmem [shape: bf16[2,1,2], index: 12, kind: input, shape index: {}]
  %s13 = inlined_call_operand.vmem [shape: bf16[2,64,5], index: 13, kind: input, shape index: {}]
  %s14 = inlined_call_operand.hbm [shape: f32[2,2,2], index: 14, kind: output, shape index: {0}]
  %s15 = inlined_call_operand.hbm [shape: f32[2,1,5], index: 15, kind: output, shape index: {1}]
  %16 = xla_tuple %s14, %s15
  %s17 = sld [smem:[#allocation0]]
  $region97: #{discriminator_forward.1} parent=0
    _
  %s19 = ssub.s32 1, %s17
  %s20 = scalar_select 0, %s19, %s17
  $region1: #{discriminator_forward.1} parent=0
    #allocation2 [shape = 'u8[2048]{0}', space=vmem, size = 0x800, scoped, tag = 'output window, operand 0']
    #allocation3 [shape = 's32[2]{0}', space=sflag, size = 0x8, scoped, tag = 'scoped memory for discriminator_forward.1']
    #allocation4 [shape = 'u8[1024]{0}', space=vmem, size = 0x400, scoped, tag = 'output window, operand 1']
    #allocation5 [shape = 's32[2]{0}', space=sflag, size = 0x8, scoped, tag = 'scoped memory for discriminator_forward.1']
    %21 = vsyncpa [#allocation3], 0
    %s22 = scalar_lea.sflag [#allocation3], 1
    %23 = vsyncpa %s22, 0
    %24 = vsyncpa [#allocation5], 0
    %s25 = scalar_lea.sflag [#allocation5], 1
    %26 = vsyncpa %s25, 0
    loop: start=0, step=1, limit=4
    $region2: #{discriminator_forward.1} parent=1 // loop_pre_header
      _
    $region3: #{discriminator_forward.1} parent=1 // loop_header
      %s28 = sphi 0, %s32
      %p29 = scmp.ge.s32.totalorder %s28, 4
      %s38 = sphi 0, %s40
      %s41 = sphi 0, %s38
      %s42 = sphi 0, %s41
      %s58 = sphi 0, %s42
      %s62 = sphi 0, %s62
      %s64 = sphi 0, %s62
      %s65 = sphi 0, %s64
      %s79 = sphi 0, %s65
      %s83 = sphi 0, %s83
      %s85 = sphi 0, %s83
      %s86 = sphi 0, %s85
      %s100 = sphi 0, %s86
      %s104 = sphi 0, %s104
      %s106 = sphi 0, %s104
      %s107 = sphi 0, %s106
      %s121 = sphi 0, %s107
      %s125 = sphi 0, %s125
      %s127 = sphi 0, %s125
      %s128 = sphi 0, %s127
      %s142 = sphi 0, %s128
      %s146 = sphi 0, %s146
      %s148 = sphi 0, %s146
      %s149 = sphi 0, %s148
      %s163 = sphi 0, %s149
      %s167 = sphi 0, %s167
      %s169 = sphi 0, %s167
      %s170 = sphi 0, %s169
      %s184 = sphi 0, %s170
      %s188 = sphi 0, %s188
      %s190 = sphi 0, %s188
      %s191 = sphi 0, %s190
      %s205 = sphi 0, %s191
      %s209 = sphi 0, %s209
      %s211 = sphi 0, %s209
      %s212 = sphi 0, %s211
      %s226 = sphi 0, %s212
      %s230 = sphi 0, %s230
      %s232 = sphi 0, %s230
      %s233 = sphi 0, %s232
      %s247 = sphi 0, %s233
      %s251 = sphi 0, %s251
      %s253 = sphi 0, %s251
      %s254 = sphi 0, %s253
      %s268 = sphi 0, %s254
      %s272 = sphi 0, %s272
      %s274 = sphi 0, %s272
      %s275 = sphi 0, %s274
      %s289 = sphi 0, %s275
      %s293 = sphi 0, %s293
      %s295 = sphi 0, %s293
      %s296 = sphi 0, %s295
      %s310 = sphi 0, %s296
      %s314 = sphi 0, %s314
      %s316 = sphi 0, %s314
      %s317 = sphi 0, %s316
      %s331 = sphi 0, %s317
      %s337 = sphi 0, %s339
      %s340 = sphi 0, %s337
      %s341 = sphi 0, %s340
      %s357 = sphi 0, %s341
      %s363 = sphi 0, %s365
      %s366 = sphi 0, %s363
      %s367 = sphi 0, %s366
      %s383 = sphi 0, %s367
    $region4: #{discriminator_forward.1} parent=1 // loop_header_branch
      %31 = sbr.rel (%p29) target = $region8
    $region5: #{discriminator_forward.1} parent=1 // loop_body
      %s33 = ssub.s32 %s28, 1
      %s34 = ssub.s32 %s28, 2
      %s35 = sadd.s32 %s28, 1
      %s36 = ssub.s32 %s28, %s35
      %p37 = scmp.eq.s32.totalorder %s36, 0
      %s39 = sadd.s32 %s38, 1
      %s40 = scalar_select %p37, %s38, %s39
      %p43 = pneg %p37
      %p44 = scmp.eq.s32.totalorder %s28, 1
      %p45 = por %p43, %p44
      %p46 = scmp.ne.s32.totalorder %s38, %s41
      %p47 = scmp.eq.s32.totalorder %s28, 0
      %p48 = por %p46, %p47
      %p49 = scmp.ne.s32.totalorder %s38, %s41
      %p50 = scmp.eq.s32.totalorder %s33, 1
      %p51 = por %p49, %p50
      %p52 = scmp.ne.s32.totalorder %s41, %s42
      %p53 = scmp.eq.s32.totalorder %s33, 0
      %p54 = por %p52, %p53
      %p55 = scmp.ne.s32.totalorder %s41, %s42
      %p56 = scmp.eq.s32.totalorder %s34, 1
      %p57 = por %p55, %p56
      %p59 = scmp.ne.s32.totalorder %s42, %s58
      %p60 = scmp.eq.s32.totalorder %s34, 0
      %p61 = por %p59, %p60
      %s63 = sadd.s32 %s62, 1
      %p66 = scmp.eq.s32.totalorder %s28, 1
      %p67 = scmp.ne.s32.totalorder %s62, %s64
      %p68 = scmp.eq.s32.totalorder %s28, 0
      %p69 = por %p67, %p68
      %p70 = scmp.ne.s32.totalorder %s62, %s64
      %p71 = scmp.eq.s32.totalorder %s33, 1
      %p72 = por %p70, %p71
      %p73 = scmp.ne.s32.totalorder %s64, %s65
      %p74 = scmp.eq.s32.totalorder %s33, 0
      %p75 = por %p73, %p74
      %p76 = scmp.ne.s32.totalorder %s64, %s65
      %p77 = scmp.eq.s32.totalorder %s34, 1
      %p78 = por %p76, %p77
      %p80 = scmp.ne.s32.totalorder %s65, %s79
      %p81 = scmp.eq.s32.totalorder %s34, 0
      %p82 = por %p80, %p81
      %s84 = sadd.s32 %s83, 1
      %p87 = scmp.eq.s32.totalorder %s28, 1
      %p88 = scmp.ne.s32.totalorder %s83, %s85
      %p89 = scmp.eq.s32.totalorder %s28, 0
      %p90 = por %p88, %p89
      %p91 = scmp.ne.s32.totalorder %s83, %s85
      %p92 = scmp.eq.s32.totalorder %s33, 1
      %p93 = por %p91, %p92
      %p94 = scmp.ne.s32.totalorder %s85, %s86
      %p95 = scmp.eq.s32.totalorder %s33, 0
      %p96 = por %p94, %p95
      %p97 = scmp.ne.s32.totalorder %s85, %s86
      %p98 = scmp.eq.s32.totalorder %s34, 1
      %p99 = por %p97, %p98
      %p101 = scmp.ne.s32.totalorder %s86, %s100
      %p102 = scmp.eq.s32.totalorder %s34, 0
      %p103 = por %p101, %p102
      %s105 = sadd.s32 %s104, 1
      %p108 = scmp.eq.s32.totalorder %s28, 1
      %p109 = scmp.ne.s32.totalorder %s104, %s106
      %p110 = scmp.eq.s32.totalorder %s28, 0
      %p111 = por %p109, %p110
      %p112 = scmp.ne.s32.totalorder %s104, %s106
      %p113 = scmp.eq.s32.totalorder %s33, 1
      %p114 = por %p112, %p113
      %p115 = scmp.ne.s32.totalorder %s106, %s107
      %p116 = scmp.eq.s32.totalorder %s33, 0
      %p117 = por %p115, %p116
      %p118 = scmp.ne.s32.totalorder %s106, %s107
      %p119 = scmp.eq.s32.totalorder %s34, 1
      %p120 = por %p118, %p119
      %p122 = scmp.ne.s32.totalorder %s107, %s121
      %p123 = scmp.eq.s32.totalorder %s34, 0
      %p124 = por %p122, %p123
      %s126 = sadd.s32 %s125, 1
      %p129 = scmp.eq.s32.totalorder %s28, 1
      %p130 = scmp.ne.s32.totalorder %s125, %s127
      %p131 = scmp.eq.s32.totalorder %s28, 0
      %p132 = por %p130, %p131
      %p133 = scmp.ne.s32.totalorder %s125, %s127
      %p134 = scmp.eq.s32.totalorder %s33, 1
      %p135 = por %p133, %p134
      %p136 = scmp.ne.s32.totalorder %s127, %s128
      %p137 = scmp.eq.s32.totalorder %s33, 0
      %p138 = por %p136, %p137
      %p139 = scmp.ne.s32.totalorder %s127, %s128
      %p140 = scmp.eq.s32.totalorder %s34, 1
      %p141 = por %p139, %p140
      %p143 = scmp.ne.s32.totalorder %s128, %s142
      %p144 = scmp.eq.s32.totalorder %s34, 0
      %p145 = por %p143, %p144
      %s147 = sadd.s32 %s146, 1
      %p150 = scmp.eq.s32.totalorder %s28, 1
      %p151 = scmp.ne.s32.totalorder %s146, %s148
      %p152 = scmp.eq.s32.totalorder %s28, 0
      %p153 = por %p151, %p152
      %p154 = scmp.ne.s32.totalorder %s146, %s148
      %p155 = scmp.eq.s32.totalorder %s33, 1
      %p156 = por %p154, %p155
      %p157 = scmp.ne.s32.totalorder %s148, %s149
      %p158 = scmp.eq.s32.totalorder %s33, 0
      %p159 = por %p157, %p158
      %p160 = scmp.ne.s32.totalorder %s148, %s149
      %p161 = scmp.eq.s32.totalorder %s34, 1
      %p162 = por %p160, %p161
      %p164 = scmp.ne.s32.totalorder %s149, %s163
      %p165 = scmp.eq.s32.totalorder %s34, 0
      %p166 = por %p164, %p165
      %s168 = sadd.s32 %s167, 1
      %p171 = scmp.eq.s32.totalorder %s28, 1
      %p172 = scmp.ne.s32.totalorder %s167, %s169
      %p173 = scmp.eq.s32.totalorder %s28, 0
      %p174 = por %p172, %p173
      %p175 = scmp.ne.s32.totalorder %s167, %s169
      %p176 = scmp.eq.s32.totalorder %s33, 1
      %p177 = por %p175, %p176
      %p178 = scmp.ne.s32.totalorder %s169, %s170
      %p179 = scmp.eq.s32.totalorder %s33, 0
      %p180 = por %p178, %p179
      %p181 = scmp.ne.s32.totalorder %s169, %s170
      %p182 = scmp.eq.s32.totalorder %s34, 1
      %p183 = por %p181, %p182
      %p185 = scmp.ne.s32.totalorder %s170, %s184
      %p186 = scmp.eq.s32.totalorder %s34, 0
      %p187 = por %p185, %p186
      %s189 = sadd.s32 %s188, 1
      %p192 = scmp.eq.s32.totalorder %s28, 1
      %p193 = scmp.ne.s32.totalorder %s188, %s190
      %p194 = scmp.eq.s32.totalorder %s28, 0
      %p195 = por %p193, %p194
      %p196 = scmp.ne.s32.totalorder %s188, %s190
      %p197 = scmp.eq.s32.totalorder %s33, 1
      %p198 = por %p196, %p197
      %p199 = scmp.ne.s32.totalorder %s190, %s191
      %p200 = scmp.eq.s32.totalorder %s33, 0
      %p201 = por %p199, %p200
      %p202 = scmp.ne.s32.totalorder %s190, %s191
      %p203 = scmp.eq.s32.totalorder %s34, 1
      %p204 = por %p202, %p203
      %p206 = scmp.ne.s32.totalorder %s191, %s205
      %p207 = scmp.eq.s32.totalorder %s34, 0
      %p208 = por %p206, %p207
      %s210 = sadd.s32 %s209, 1
      %p213 = scmp.eq.s32.totalorder %s28, 1
      %p214 = scmp.ne.s32.totalorder %s209, %s211
      %p215 = scmp.eq.s32.totalorder %s28, 0
      %p216 = por %p214, %p215
      %p217 = scmp.ne.s32.totalorder %s209, %s211
      %p218 = scmp.eq.s32.totalorder %s33, 1
      %p219 = por %p217, %p218
      %p220 = scmp.ne.s32.totalorder %s211, %s212
      %p221 = scmp.eq.s32.totalorder %s33, 0
      %p222 = por %p220, %p221
      %p223 = scmp.ne.s32.totalorder %s211, %s212
      %p224 = scmp.eq.s32.totalorder %s34, 1
      %p225 = por %p223, %p224
      %p227 = scmp.ne.s32.totalorder %s212, %s226
      %p228 = scmp.eq.s32.totalorder %s34, 0
      %p229 = por %p227, %p228
      %s231 = sadd.s32 %s230, 1
      %p234 = scmp.eq.s32.totalorder %s28, 1
      %p235 = scmp.ne.s32.totalorder %s230, %s232
      %p236 = scmp.eq.s32.totalorder %s28, 0
      %p237 = por %p235, %p236
      %p238 = scmp.ne.s32.totalorder %s230, %s232
      %p239 = scmp.eq.s32.totalorder %s33, 1
      %p240 = por %p238, %p239
      %p241 = scmp.ne.s32.totalorder %s232, %s233
      %p242 = scmp.eq.s32.totalorder %s33, 0
      %p243 = por %p241, %p242
      %p244 = scmp.ne.s32.totalorder %s232, %s233
      %p245 = scmp.eq.s32.totalorder %s34, 1
      %p246 = por %p244, %p245
      %p248 = scmp.ne.s32.totalorder %s233, %s247
      %p249 = scmp.eq.s32.totalorder %s34, 0
      %p250 = por %p248, %p249
      %s252 = sadd.s32 %s251, 1
      %p255 = scmp.eq.s32.totalorder %s28, 1
      %p256 = scmp.ne.s32.totalorder %s251, %s253
      %p257 = scmp.eq.s32.totalorder %s28, 0
      %p258 = por %p256, %p257
      %p259 = scmp.ne.s32.totalorder %s251, %s253
      %p260 = scmp.eq.s32.totalorder %s33, 1
      %p261 = por %p259, %p260
      %p262 = scmp.ne.s32.totalorder %s253, %s254
      %p263 = scmp.eq.s32.totalorder %s33, 0
      %p264 = por %p262, %p263
      %p265 = scmp.ne.s32.totalorder %s253, %s254
      %p266 = scmp.eq.s32.totalorder %s34, 1
      %p267 = por %p265, %p266
      %p269 = scmp.ne.s32.totalorder %s254, %s268
      %p270 = scmp.eq.s32.totalorder %s34, 0
      %p271 = por %p269, %p270
      %s273 = sadd.s32 %s272, 1
      %p276 = scmp.eq.s32.totalorder %s28, 1
      %p277 = scmp.ne.s32.totalorder %s272, %s274
      %p278 = scmp.eq.s32.totalorder %s28, 0
      %p279 = por %p277, %p278
      %p280 = scmp.ne.s32.totalorder %s272, %s274
      %p281 = scmp.eq.s32.totalorder %s33, 1
      %p282 = por %p280, %p281
      %p283 = scmp.ne.s32.totalorder %s274, %s275
      %p284 = scmp.eq.s32.totalorder %s33, 0
      %p285 = por %p283, %p284
      %p286 = scmp.ne.s32.totalorder %s274, %s275
      %p287 = scmp.eq.s32.totalorder %s34, 1
      %p288 = por %p286, %p287
      %p290 = scmp.ne.s32.totalorder %s275, %s289
      %p291 = scmp.eq.s32.totalorder %s34, 0
      %p292 = por %p290, %p291
      %s294 = sadd.s32 %s293, 1
      %p297 = scmp.eq.s32.totalorder %s28, 1
      %p298 = scmp.ne.s32.totalorder %s293, %s295
      %p299 = scmp.eq.s32.totalorder %s28, 0
      %p300 = por %p298, %p299
      %p301 = scmp.ne.s32.totalorder %s293, %s295
      %p302 = scmp.eq.s32.totalorder %s33, 1
      %p303 = por %p301, %p302
      %p304 = scmp.ne.s32.totalorder %s295, %s296
      %p305 = scmp.eq.s32.totalorder %s33, 0
      %p306 = por %p304, %p305
      %p307 = scmp.ne.s32.totalorder %s295, %s296
      %p308 = scmp.eq.s32.totalorder %s34, 1
      %p309 = por %p307, %p308
      %p311 = scmp.ne.s32.totalorder %s296, %s310
      %p312 = scmp.eq.s32.totalorder %s34, 0
      %p313 = por %p311, %p312
      %s315 = sadd.s32 %s314, 1
      %p318 = scmp.eq.s32.totalorder %s28, 1
      %p319 = scmp.ne.s32.totalorder %s314, %s316
      %p320 = scmp.eq.s32.totalorder %s28, 0
      %p321 = por %p319, %p320
      %p322 = scmp.ne.s32.totalorder %s314, %s316
      %p323 = scmp.eq.s32.totalorder %s33, 1
      %p324 = por %p322, %p323
      %p325 = scmp.ne.s32.totalorder %s316, %s317
      %p326 = scmp.eq.s32.totalorder %s33, 0
      %p327 = por %p325, %p326
      %p328 = scmp.ne.s32.totalorder %s316, %s317
      %p329 = scmp.eq.s32.totalorder %s34, 1
      %p330 = por %p328, %p329
      %p332 = scmp.ne.s32.totalorder %s317, %s331
      %p333 = scmp.eq.s32.totalorder %s34, 0
      %p334 = por %p332, %p333
      %s335 = ssub.s32 %s28, %s35
      %p336 = scmp.eq.s32.totalorder %s335, 0
      %s338 = sadd.s32 %s337, 1
      %s339 = scalar_select %p336, %s337, %s338
      %p342 = pneg %p336
      %p343 = scmp.eq.s32.totalorder %s28, 1
      %p344 = por %p342, %p343
      %p345 = scmp.ne.s32.totalorder %s337, %s340
      %p346 = scmp.eq.s32.totalorder %s28, 0
      %p347 = por %p345, %p346
      %p348 = scmp.ne.s32.totalorder %s337, %s340
      %p349 = scmp.eq.s32.totalorder %s33, 1
      %p350 = por %p348, %p349
      %p351 = scmp.ne.s32.totalorder %s340, %s341
      %p352 = scmp.eq.s32.totalorder %s33, 0
      %p353 = por %p351, %p352
      %p354 = scmp.ne.s32.totalorder %s340, %s341
      %p355 = scmp.eq.s32.totalorder %s34, 1
      %p356 = por %p354, %p355
      %p358 = scmp.ne.s32.totalorder %s341, %s357
      %p359 = scmp.eq.s32.totalorder %s34, 0
      %p360 = por %p358, %p359
      %s361 = ssub.s32 %s28, %s35
      %p362 = scmp.eq.s32.totalorder %s361, 0
      %s364 = sadd.s32 %s363, 1
      %s365 = scalar_select %p362, %s363, %s364
      %p368 = pneg %p362
      %p369 = scmp.eq.s32.totalorder %s28, 1
      %p370 = por %p368, %p369
      %p371 = scmp.ne.s32.totalorder %s363, %s366
      %p372 = scmp.eq.s32.totalorder %s28, 0
      %p373 = por %p371, %p372
      %p374 = scmp.ne.s32.totalorder %s363, %s366
      %p375 = scmp.eq.s32.totalorder %s33, 1
      %p376 = por %p374, %p375
      %p377 = scmp.ne.s32.totalorder %s366, %s367
      %p378 = scmp.eq.s32.totalorder %s33, 0
      %p379 = por %p377, %p378
      %p380 = scmp.ne.s32.totalorder %s366, %s367
      %p381 = scmp.eq.s32.totalorder %s34, 1
      %p382 = por %p380, %p381
      %p384 = scmp.ne.s32.totalorder %s367, %s383
      %p385 = scmp.eq.s32.totalorder %s34, 0
      %p386 = por %p384, %p385
      %p387 = scmp.le.s32.totalorder 1, %s28
      %p388 = scmp.lt.s32.totalorder %s28, 3
      %p389 = pnand %p387, %p388
      %p390 = pneg %p389
      // Predicated region
      $region9: #{discriminator_forward.1} parent=5 // pred_check
        _
      $region10: #{discriminator_forward.1} parent=5 // pred_check_branch
        %392 = sbr.rel (%p389) target = $region12
      $region11: #{discriminator_forward.1} parent=5 // pred_region
        %s393 = ssub.s32 %s28, 1
        // Predicated region
        $region13: #{discriminator_forward.1} parent=11 // pred_check
          %p394 = pneg %p75
        $region14: #{discriminator_forward.1} parent=11 // pred_check_branch
          %396 = sbr.rel (%p394) target = $region16
        $region15: #{discriminator_forward.1} parent=11 // pred_region
          _
        $region16: #{discriminator_forward.1} parent=11 // pred_fallthru
          _
        // Predicated region
        $region17: #{discriminator_forward.1} parent=11 // pred_check
          %p397 = pneg %p96
        $region18: #{discriminator_forward.1} parent=11 // pred_check_branch
          %399 = sbr.rel (%p397) target = $region20
        $region19: #{discriminator_forward.1} parent=11 // pred_region
          _
        $region20: #{discriminator_forward.1} parent=11 // pred_fallthru
          _
        // Predicated region
        $region21: #{discriminator_forward.1} parent=11 // pred_check
          %p400 = pneg %p117
        $region22: #{discriminator_forward.1} parent=11 // pred_check_branch
          %402 = sbr.rel (%p400) target = $region24
        $region23: #{discriminator_forward.1} parent=11 // pred_region
          _
        $region24: #{discriminator_forward.1} parent=11 // pred_fallthru
          _
        // Predicated region
        $region25: #{discriminator_forward.1} parent=11 // pred_check
          %p403 = pneg %p138
        $region26: #{discriminator_forward.1} parent=11 // pred_check_branch
          %405 = sbr.rel (%p403) target = $region28
        $region27: #{discriminator_forward.1} parent=11 // pred_region
          _
        $region28: #{discriminator_forward.1} parent=11 // pred_fallthru
          _
        // Predicated region
        $region29: #{discriminator_forward.1} parent=11 // pred_check
          %p406 = pneg %p159
        $region30: #{discriminator_forward.1} parent=11 // pred_check_branch
          %408 = sbr.rel (%p406) target = $region32
        $region31: #{discriminator_forward.1} parent=11 // pred_region
          _
        $region32: #{discriminator_forward.1} parent=11 // pred_fallthru
          _
        // Predicated region
        $region33: #{discriminator_forward.1} parent=11 // pred_check
          %p409 = pneg %p180
        $region34: #{discriminator_forward.1} parent=11 // pred_check_branch
          %411 = sbr.rel (%p409) target = $region36
        $region35: #{discriminator_forward.1} parent=11 // pred_region
          _
        $region36: #{discriminator_forward.1} parent=11 // pred_fallthru
          _
        // Predicated region
        $region37: #{discriminator_forward.1} parent=11 // pred_check
          %p412 = pneg %p201
        $region38: #{discriminator_forward.1} parent=11 // pred_check_branch
          %414 = sbr.rel (%p412) target = $region40
        $region39: #{discriminator_forward.1} parent=11 // pred_region
          _
        $region40: #{discriminator_forward.1} parent=11 // pred_fallthru
          _
        // Predicated region
        $region41: #{discriminator_forward.1} parent=11 // pred_check
          %p415 = pneg %p222
        $region42: #{discriminator_forward.1} parent=11 // pred_check_branch
          %417 = sbr.rel (%p415) target = $region44
        $region43: #{discriminator_forward.1} parent=11 // pred_region
          _
        $region44: #{discriminator_forward.1} parent=11 // pred_fallthru
          _
        // Predicated region
        $region45: #{discriminator_forward.1} parent=11 // pred_check
          %p418 = pneg %p243
        $region46: #{discriminator_forward.1} parent=11 // pred_check_branch
          %420 = sbr.rel (%p418) target = $region48
        $region47: #{discriminator_forward.1} parent=11 // pred_region
          _
        $region48: #{discriminator_forward.1} parent=11 // pred_fallthru
          _
        // Predicated region
        $region49: #{discriminator_forward.1} parent=11 // pred_check
          %p421 = pneg %p264
        $region50: #{discriminator_forward.1} parent=11 // pred_check_branch
          %423 = sbr.rel (%p421) target = $region52
        $region51: #{discriminator_forward.1} parent=11 // pred_region
          _
        $region52: #{discriminator_forward.1} parent=11 // pred_fallthru
          _
        // Predicated region
        $region53: #{discriminator_forward.1} parent=11 // pred_check
          %p424 = pneg %p285
        $region54: #{discriminator_forward.1} parent=11 // pred_check_branch
          %426 = sbr.rel (%p424) target = $region56
        $region55: #{discriminator_forward.1} parent=11 // pred_region
          _
        $region56: #{discriminator_forward.1} parent=11 // pred_fallthru
          _
        // Predicated region
        $region57: #{discriminator_forward.1} parent=11 // pred_check
          %p427 = pneg %p306
        $region58: #{discriminator_forward.1} parent=11 // pred_check_branch
          %429 = sbr.rel (%p427) target = $region60
        $region59: #{discriminator_forward.1} parent=11 // pred_region
          _
        $region60: #{discriminator_forward.1} parent=11 // pred_fallthru
          _
        // Predicated region
        $region61: #{discriminator_forward.1} parent=11 // pred_check
          %p430 = pneg %p327
        $region62: #{discriminator_forward.1} parent=11 // pred_check_branch
          %432 = sbr.rel (%p430) target = $region64
        $region63: #{discriminator_forward.1} parent=11 // pred_region
          _
        $region64: #{discriminator_forward.1} parent=11 // pred_fallthru
          _
      $region12: #{discriminator_forward.1} parent=5 // pred_fallthru
        _
      %p433 = scmp.lt.s32.totalorder %s28, 2
      // Predicated region
      $region65: #{discriminator_forward.1} parent=5 // pred_check
        %p434 = pneg %p433
      $region66: #{discriminator_forward.1} parent=5 // pred_check_branch
        %436 = sbr.rel (%p434) target = $region68
      $region67: #{discriminator_forward.1} parent=5 // pred_region
        // Predicated region
        $region69: #{discriminator_forward.1} parent=67 // pred_check
          %p437 = pneg %p48
        $region70: #{discriminator_forward.1} parent=67 // pred_check_branch
          %439 = sbr.rel (%p437) target = $region72
        $region71: #{discriminator_forward.1} parent=67 // pred_region
          %p440 = scmp.lt.s32.totalorder %s28, 1
          %s441 = scalar_select %p440, %s28, 1
          %s442 = smul.addr %s441, 2
          %s443 = smul.addr %s442, 4
          %s444 = scalar_lea.vmem %s0, %s443
        $region72: #{discriminator_forward.1} parent=67 // pred_fallthru
          _
      $region68: #{discriminator_forward.1} parent=5 // pred_fallthru
        _
      %p445 = scmp.le.s32.totalorder 1, %s28
      %p446 = scmp.lt.s32.totalorder %s28, 3
      %p447 = pnand %p445, %p446
      %p448 = pneg %p447
      // Predicated region
      $region73: #{discriminator_forward.1} parent=5 // pred_check
        _
      $region74: #{discriminator_forward.1} parent=5 // pred_check_branch
        %450 = sbr.rel (%p447) target = $region76
      $region75: #{discriminator_forward.1} parent=5 // pred_region
        %s451 = ssub.s32 %s28, 1
        %p452 = scmp.lt.s32.totalorder %s33, 1
        %s453 = scalar_select %p452, %s33, 1
        %s454 = smul.addr %s453, 2
        %s455 = smul.addr %s454, 4
        %s456 = scalar_lea.vmem %s0, %s455
        %p457 = pneg %p54
        %p458 = pneg %p51
        %p459 = pneg %p75
        %p460 = pneg %p72
        %p461 = pneg %p96
        %p462 = pneg %p93
        %p463 = pneg %p117
        %p464 = pneg %p114
        %p465 = pneg %p138
        %p466 = pneg %p135
        %p467 = pneg %p159
        %p468 = pneg %p156
        %p469 = pneg %p180
        %p470 = pneg %p177
        %p471 = pneg %p201
        %p472 = pneg %p198
        %p473 = pneg %p222
        %p474 = pneg %p219
        %p475 = pneg %p243
        %p476 = pneg %p240
        %p477 = pneg %p264
        %p478 = pneg %p261
        %p479 = pneg %p285
        %p480 = pneg %p282
        %p481 = pneg %p306
        %p482 = pneg %p303
        %p483 = pneg %p327
        %p484 = pneg %p324
        %p485 = pneg %p353
        %p486 = pneg %p350
        %s487 = sand.u32 %s340, 1
        %s488 = scalar_lea.sflag [#allocation3], %s487
        %s489 = sand.u32 %s340, 1
        %s490 = smul.addr %s489, 2
        %s491 = scalar_lea.vmem [#allocation2], %s490
        %p492 = pneg %p379
        %p493 = pneg %p376
        %s494 = sand.u32 %s366, 1
        %s495 = scalar_lea.sflag [#allocation5], %s494
        %s496 = sand.u32 %s366, 1
        %s497 = scalar_lea.vmem [#allocation4], %s496
        %p498 = scmp.lt.s32.totalorder %s33, 1
        %s499 = scalar_select %p498, %s33, 1
        %s500 = smul.addr %s499, 2
        %s501 = smul.addr %s500, 4
        %s502 = scalar_lea.vmem %s0, %s501
        %v504 = vld [vmem:[%s502] sm:$0xf]
        %v505 = vld [vmem:[%s502 + $0x4] sm:$0xf]
        %v506 = vld [vmem:[%s1] sm:$0xf]
        %v509 = vunpack.c.l.b16 %v504
        %v510 = vunpack.c.l.b16 %v505
        %v511 = vpack.c.b16 %v510, %v509
        %vm513 = vcmask 130048
        %v515 = vsel %vm513, %v506, 0
        %517 = vmatprep.subr.bf16.mxu0 0
        %518 = vmatpush1.bf16.msra.mxu0 0
        %519 = vmatprep.subr.bf16.mxu0 0
        %520 = vmatpush1.bf16.msra.mxu0 0
        %521 = vmatprep.subr.bf16.mxu0 0
        %522 = vmatpush1.bf16.msra.mxu0 0
        %523 = vmatprep.subr.bf16.mxu0 0
        %524 = vmatpush1.bf16.msra.mxu0 0
        %525 = vmatprep.subr.bf16.mxu0 0
        %526 = vmatpush1.bf16.msra.mxu0 0
        %527 = vmatprep.subr.bf16.mxu0 0
        %528 = vmatpush1.bf16.msra.mxu0 0
        %529 = vmatprep.subr.bf16.mxu0 0
        %530 = vmatpush1.bf16.msra.mxu0 0
        %531 = vmatprep.subr.bf16.mxu0 0
        %532 = vmatpush1.bf16.msra.mxu0 %v511
        %533 = vmatprep.subr.bf16.mxu0 0
        %534 = vmatpush2.bf16.msra.mxu0 0
        %535 = vmatprep.subr.bf16.mxu0 0
        %536 = vmatpush2.bf16.msra.mxu0 0
        %537 = vmatprep.subr.bf16.mxu0 0
        %538 = vmatpush2.bf16.msra.mxu0 0
        %539 = vmatprep.subr.bf16.mxu0 0
        %540 = vmatpush2.bf16.msra.mxu0 0
        %541 = vmatprep.subr.bf16.mxu0 0
        %542 = vmatpush2.bf16.msra.mxu0 0
        %543 = vmatprep.subr.bf16.mxu0 0
        %544 = vmatpush2.bf16.msra.mxu0 0
        %545 = vmatprep.subr.bf16.mxu0 0
        %546 = vmatpush2.bf16.msra.mxu0 0
        %547 = vmatprep.subr.bf16.mxu0 0
        %548 = vmatpush2.bf16.msra.mxu0 0
        %549 = vmatprep.mubr.bf16.mxu0 0
        %550 = vmatmul.mubr.bf16.gmra.mxu0 %v515
        %v551 = vpop.f32.mrf.mxu0
        %v552 = vadd.f32 0.0, %v551
        %v553 = vpop.f32.mrf.mxu0
        %v554 = vpop.f32.mrf.mxu0
        %v555 = vpop.f32.mrf.mxu0
        %556 = vdwg.mxu0
        %v557 = vpack.c.bf16 %v552, %v552
        %v558 = vld [vmem:[%s2] sm:$0xf]
        %v559 = vld [vmem:[%s2 + $0x4] sm:$0xf]
        %v560 = vld [vmem:[%s2 + $0x8] sm:$0xf]
        %v561 = vld [vmem:[%s2 + $0xc] sm:$0xf]
        %v562 = vld [vmem:[%s2 + $0x10] sm:$0xf]
        %v563 = vld [vmem:[%s2 + $0x14] sm:$0xf]
        %s564 = scalar_lea.vmem %s1, 4
        %v565 = vld [vmem:[%s564] sm:$0xf]
        %v567 = vsel %vm513, %v565, 0
        %569 = vmatprep.subr.bf16.mxu0 0
        %570 = vmatpush1.bf16.msra.mxu0 0
        %571 = vmatprep.subr.bf16.mxu0 0
        %572 = vmatpush1.bf16.msra.mxu0 0
        %573 = vmatprep.subr.bf16.mxu0 0
        %574 = vmatpush1.bf16.msra.mxu0 0
        %575 = vmatprep.subr.bf16.mxu0 0
        %576 = vmatpush1.bf16.msra.mxu0 0
        %577 = vmatprep.subr.bf16.mxu0 0
        %578 = vmatpush1.bf16.msra.mxu0 0
        %579 = vmatprep.subr.bf16.mxu0 0
        %580 = vmatpush1.bf16.msra.mxu0 0
        %581 = vmatprep.subr.bf16.mxu0 0
        %582 = vmatpush1.bf16.msra.mxu0 0
        %583 = vmatprep.subr.bf16.mxu0 0
        %584 = vmatpush1.bf16.msra.mxu0 %v511
        %585 = vmatprep.subr.bf16.mxu0 0
        %586 = vmatpush2.bf16.msra.mxu0 0
        %587 = vmatprep.subr.bf16.mxu0 0
        %588 = vmatpush2.bf16.msra.mxu0 0
        %589 = vmatprep.subr.bf16.mxu0 0
        %590 = vmatpush2.bf16.msra.mxu0 0
        %591 = vmatprep.subr.bf16.mxu0 0
        %592 = vmatpush2.bf16.msra.mxu0 0
        %593 = vmatprep.subr.bf16.mxu0 0
        %594 = vmatpush2.bf16.msra.mxu0 0
        %595 = vmatprep.subr.bf16.mxu0 0
        %596 = vmatpush2.bf16.msra.mxu0 0
        %597 = vmatprep.subr.bf16.mxu0 0
        %598 = vmatpush2.bf16.msra.mxu0 0
        %599 = vmatprep.subr.bf16.mxu0 0
        %600 = vmatpush2.bf16.msra.mxu0 0
        %601 = vmatprep.mubr.bf16.mxu0 0
        %602 = vmatmul.mubr.bf16.gmra.mxu0 %v567
        %v603 = vpop.f32.mrf.mxu0
        %v604 = vadd.f32 0.0, %v603
        %v605 = vpop.f32.mrf.mxu0
        %v606 = vpop.f32.mrf.mxu0
        %v607 = vpop.f32.mrf.mxu0
        %608 = vdwg.mxu0
        %v609 = vpack.c.bf16 %v604, %v604
        %s610 = scalar_lea.vmem %s2, 24
        %v611 = vld [vmem:[%s610] sm:$0xf]
        %v612 = vld [vmem:[%s610 + $0x4] sm:$0xf]
        %v613 = vld [vmem:[%s610 + $0x8] sm:$0xf]
        %v614 = vld [vmem:[%s610 + $0xc] sm:$0xf]
        %v615 = vld [vmem:[%s610 + $0x10] sm:$0xf]
        %v616 = vld [vmem:[%s610 + $0x14] sm:$0xf]
        %v623 = vunpack.c.l.b16 %v611
        %v624 = vunpack.c.l.b16 %v612
        %v625 = vunpack.c.l.b16 %v613
        %v626 = vunpack.c.l.b16 %v614
        %v627 = vunpack.c.l.b16 %v615
        %v628 = vunpack.c.l.b16 %v616
        %v629 = vpack.c.b16 %v624, %v623
        %v630 = vpack.c.b16 %v626, %v625
        %v631 = vpack.c.b16 %v628, %v627
        %vm635 = vcmask 392192
        %v637 = vsel %vm635, %v609, 0
        %639 = vmatprep.subr.bf16.mxu0 0
        %640 = vmatpush1.bf16.msra.mxu0 0
        %641 = vmatprep.subr.bf16.mxu0 0
        %642 = vmatpush1.bf16.msra.mxu0 0
        %643 = vmatprep.subr.bf16.mxu0 0
        %644 = vmatpush1.bf16.msra.mxu0 0
        %645 = vmatprep.subr.bf16.mxu0 0
        %646 = vmatpush1.bf16.msra.mxu0 0
        %647 = vmatprep.subr.bf16.mxu0 0
        %648 = vmatpush1.bf16.msra.mxu0 0
        %649 = vmatprep.subr.bf16.mxu0 0
        %650 = vmatpush1.bf16.msra.mxu0 %v631
        %651 = vmatprep.subr.bf16.mxu0 0
        %652 = vmatpush1.bf16.msra.mxu0 %v630
        %653 = vmatprep.subr.bf16.mxu0 0
        %654 = vmatpush1.bf16.msra.mxu0 %v629
        %655 = vmatprep.subr.bf16.mxu0 0
        %656 = vmatpush2.bf16.msra.mxu0 0
        %657 = vmatprep.subr.bf16.mxu0 0
        %658 = vmatpush2.bf16.msra.mxu0 0
        %659 = vmatprep.subr.bf16.mxu0 0
        %660 = vmatpush2.bf16.msra.mxu0 0
        %661 = vmatprep.subr.bf16.mxu0 0
        %662 = vmatpush2.bf16.msra.mxu0 0
        %663 = vmatprep.subr.bf16.mxu0 0
        %664 = vmatpush2.bf16.msra.mxu0 0
        %665 = vmatprep.subr.bf16.mxu0 0
        %666 = vmatpush2.bf16.msra.mxu0 0
        %667 = vmatprep.subr.bf16.mxu0 0
        %668 = vmatpush2.bf16.msra.mxu0 0
        %669 = vmatprep.subr.bf16.mxu0 0
        %670 = vmatpush2.bf16.msra.mxu0 0
        %671 = vmatprep.mubr.bf16.mxu0 0
        %672 = vmatmul.mubr.bf16.gmra.mxu0 %v637
        %v673 = vpop.f32.mrf.mxu0
        %v674 = vadd.f32 0.0, %v673
        %v675 = vpop.f32.mrf.mxu0
        %v676 = vpop.f32.mrf.mxu0
        %v677 = vpop.f32.mrf.mxu0
        %678 = vdwg.mxu0
        %v685 = vunpack.c.l.b16 %v558
        %v686 = vunpack.c.l.b16 %v559
        %v687 = vunpack.c.l.b16 %v560
        %v688 = vunpack.c.l.b16 %v561
        %v689 = vunpack.c.l.b16 %v562
        %v690 = vunpack.c.l.b16 %v563
        %v691 = vpack.c.b16 %v686, %v685
        %v692 = vpack.c.b16 %v688, %v687
        %v693 = vpack.c.b16 %v690, %v689
        %v698 = vsel %vm635, %v557, 0
        %700 = vmatprep.subr.bf16.mxu0 0
        %701 = vmatpush1.bf16.msra.mxu0 0
        %702 = vmatprep.subr.bf16.mxu0 0
        %703 = vmatpush1.bf16.msra.mxu0 0
        %704 = vmatprep.subr.bf16.mxu0 0
        %705 = vmatpush1.bf16.msra.mxu0 0
        %706 = vmatprep.subr.bf16.mxu0 0
        %707 = vmatpush1.bf16.msra.mxu0 0
        %708 = vmatprep.subr.bf16.mxu0 0
        %709 = vmatpush1.bf16.msra.mxu0 0
        %710 = vmatprep.subr.bf16.mxu0 0
        %711 = vmatpush1.bf16.msra.mxu0 %v693
        %712 = vmatprep.subr.bf16.mxu0 0
        %713 = vmatpush1.bf16.msra.mxu0 %v692
        %714 = vmatprep.subr.bf16.mxu0 0
        %715 = vmatpush1.bf16.msra.mxu0 %v691
        %716 = vmatprep.subr.bf16.mxu0 0
        %717 = vmatpush2.bf16.msra.mxu0 0
        %718 = vmatprep.subr.bf16.mxu0 0
        %719 = vmatpush2.bf16.msra.mxu0 0
        %720 = vmatprep.subr.bf16.mxu0 0
        %721 = vmatpush2.bf16.msra.mxu0 0
        %722 = vmatprep.subr.bf16.mxu0 0
        %723 = vmatpush2.bf16.msra.mxu0 0
        %724 = vmatprep.subr.bf16.mxu0 0
        %725 = vmatpush2.bf16.msra.mxu0 0
        %726 = vmatprep.subr.bf16.mxu0 0
        %727 = vmatpush2.bf16.msra.mxu0 0
        %728 = vmatprep.subr.bf16.mxu0 0
        %729 = vmatpush2.bf16.msra.mxu0 0
        %730 = vmatprep.subr.bf16.mxu0 0
        %731 = vmatpush2.bf16.msra.mxu0 0
        %732 = vmatprep.mubr.bf16.mxu0 0
        %733 = vmatmul.mubr.bf16.gmra.mxu0 %v698
        %v734 = vpop.f32.mrf.mxu0
        %v735 = vadd.f32 %v674, %v734
        %v736 = vpop.f32.mrf.mxu0
        %v737 = vpop.f32.mrf.mxu0
        %v738 = vpop.f32.mrf.mxu0
        %739 = vdwg.mxu0
        %s740 = scalar_lea.vmem %s1, 8
        %v741 = vld [vmem:[%s740] sm:$0xf]
        %v743 = vsel %vm513, %v741, 0
        %745 = vmatprep.subr.bf16.mxu0 0
        %746 = vmatpush1.bf16.msra.mxu0 0
        %747 = vmatprep.subr.bf16.mxu0 0
        %748 = vmatpush1.bf16.msra.mxu0 0
        %749 = vmatprep.subr.bf16.mxu0 0
        %750 = vmatpush1.bf16.msra.mxu0 0
        %751 = vmatprep.subr.bf16.mxu0 0
        %752 = vmatpush1.bf16.msra.mxu0 0
        %753 = vmatprep.subr.bf16.mxu0 0
        %754 = vmatpush1.bf16.msra.mxu0 0
        %755 = vmatprep.subr.bf16.mxu0 0
        %756 = vmatpush1.bf16.msra.mxu0 0
        %757 = vmatprep.subr.bf16.mxu0 0
        %758 = vmatpush1.bf16.msra.mxu0 0
        %759 = vmatprep.subr.bf16.mxu0 0
        %760 = vmatpush1.bf16.msra.mxu0 %v511
        %761 = vmatprep.subr.bf16.mxu0 0
        %762 = vmatpush2.bf16.msra.mxu0 0
        %763 = vmatprep.subr.bf16.mxu0 0
        %764 = vmatpush2.bf16.msra.mxu0 0
        %765 = vmatprep.subr.bf16.mxu0 0
        %766 = vmatpush2.bf16.msra.mxu0 0
        %767 = vmatprep.subr.bf16.mxu0 0
        %768 = vmatpush2.bf16.msra.mxu0 0
        %769 = vmatprep.subr.bf16.mxu0 0
        %770 = vmatpush2.bf16.msra.mxu0 0
        %771 = vmatprep.subr.bf16.mxu0 0
        %772 = vmatpush2.bf16.msra.mxu0 0
        %773 = vmatprep.subr.bf16.mxu0 0
        %774 = vmatpush2.bf16.msra.mxu0 0
        %775 = vmatprep.subr.bf16.mxu0 0
        %776 = vmatpush2.bf16.msra.mxu0 0
        %777 = vmatprep.mubr.bf16.mxu0 0
        %778 = vmatmul.mubr.bf16.gmra.mxu0 %v743
        %v779 = vpop.f32.mrf.mxu0
        %v780 = vadd.f32 0.0, %v779
        %v781 = vpop.f32.mrf.mxu0
        %v782 = vpop.f32.mrf.mxu0
        %v783 = vpop.f32.mrf.mxu0
        %784 = vdwg.mxu0
        %v785 = vpack.c.bf16 %v780, %v780
        %s786 = scalar_lea.vmem %s2, 48
        %v787 = vld [vmem:[%s786] sm:$0xf]
        %v788 = vld [vmem:[%s786 + $0x4] sm:$0xf]
        %v789 = vld [vmem:[%s786 + $0x8] sm:$0xf]
        %v790 = vld [vmem:[%s786 + $0xc] sm:$0xf]
        %v791 = vld [vmem:[%s786 + $0x10] sm:$0xf]
        %v792 = vld [vmem:[%s786 + $0x14] sm:$0xf]
        %v799 = vunpack.c.l.b16 %v787
        %v800 = vunpack.c.l.b16 %v788
        %v801 = vunpack.c.l.b16 %v789
        %v802 = vunpack.c.l.b16 %v790
        %v803 = vunpack.c.l.b16 %v791
        %v804 = vunpack.c.l.b16 %v792
        %v805 = vpack.c.b16 %v800, %v799
        %v806 = vpack.c.b16 %v802, %v801
        %v807 = vpack.c.b16 %v804, %v803
        %v812 = vsel %vm635, %v785, 0
        %814 = vmatprep.subr.bf16.mxu0 0
        %815 = vmatpush1.bf16.msra.mxu0 0
        %816 = vmatprep.subr.bf16.mxu0 0
        %817 = vmatpush1.bf16.msra.mxu0 0
        %818 = vmatprep.subr.bf16.mxu0 0
        %819 = vmatpush1.bf16.msra.mxu0 0
        %820 = vmatprep.subr.bf16.mxu0 0
        %821 = vmatpush1.bf16.msra.mxu0 0
        %822 = vmatprep.subr.bf16.mxu0 0
        %823 = vmatpush1.bf16.msra.mxu0 0
        %824 = vmatprep.subr.bf16.mxu0 0
        %825 = vmatpush1.bf16.msra.mxu0 %v807
        %826 = vmatprep.subr.bf16.mxu0 0
        %827 = vmatpush1.bf16.msra.mxu0 %v806
        %828 = vmatprep.subr.bf16.mxu0 0
        %829 = vmatpush1.bf16.msra.mxu0 %v805
        %830 = vmatprep.subr.bf16.mxu0 0
        %831 = vmatpush2.bf16.msra.mxu0 0
        %832 = vmatprep.subr.bf16.mxu0 0
        %833 = vmatpush2.bf16.msra.mxu0 0
        %834 = vmatprep.subr.bf16.mxu0 0
        %835 = vmatpush2.bf16.msra.mxu0 0
        %836 = vmatprep.subr.bf16.mxu0 0
        %837 = vmatpush2.bf16.msra.mxu0 0
        %838 = vmatprep.subr.bf16.mxu0 0
        %839 = vmatpush2.bf16.msra.mxu0 0
        %840 = vmatprep.subr.bf16.mxu0 0
        %841 = vmatpush2.bf16.msra.mxu0 0
        %842 = vmatprep.subr.bf16.mxu0 0
        %843 = vmatpush2.bf16.msra.mxu0 0
        %844 = vmatprep.subr.bf16.mxu0 0
        %845 = vmatpush2.bf16.msra.mxu0 0
        %846 = vmatprep.mubr.bf16.mxu0 0
        %847 = vmatmul.mubr.bf16.gmra.mxu0 %v812
        %v848 = vpop.f32.mrf.mxu0
        %v849 = vadd.f32 0.0, %v848
        %v850 = vpop.f32.mrf.mxu0
        %v851 = vpop.f32.mrf.mxu0
        %v852 = vpop.f32.mrf.mxu0
        %853 = vdwg.mxu0
        %v854 = vadd.f32 %v735, %v849
        %s855 = scalar_lea.vmem %s1, 12
        %v856 = vld [vmem:[%s855] sm:$0xf]
        %v858 = vsel %vm513, %v856, 0
        %860 = vmatprep.subr.bf16.mxu0 0
        %861 = vmatpush1.bf16.msra.mxu0 0
        %862 = vmatprep.subr.bf16.mxu0 0
        %863 = vmatpush1.bf16.msra.mxu0 0
        %864 = vmatprep.subr.bf16.mxu0 0
        %865 = vmatpush1.bf16.msra.mxu0 0
        %866 = vmatprep.subr.bf16.mxu0 0
        %867 = vmatpush1.bf16.msra.mxu0 0
        %868 = vmatprep.subr.bf16.mxu0 0
        %869 = vmatpush1.bf16.msra.mxu0 0
        %870 = vmatprep.subr.bf16.mxu0 0
        %871 = vmatpush1.bf16.msra.mxu0 0
        %872 = vmatprep.subr.bf16.mxu0 0
        %873 = vmatpush1.bf16.msra.mxu0 0
        %874 = vmatprep.subr.bf16.mxu0 0
        %875 = vmatpush1.bf16.msra.mxu0 %v511
        %876 = vmatprep.subr.bf16.mxu0 0
        %877 = vmatpush2.bf16.msra.mxu0 0
        %878 = vmatprep.subr.bf16.mxu0 0
        %879 = vmatpush2.bf16.msra.mxu0 0
        %880 = vmatprep.subr.bf16.mxu0 0
        %881 = vmatpush2.bf16.msra.mxu0 0
        %882 = vmatprep.subr.bf16.mxu0 0
        %883 = vmatpush2.bf16.msra.mxu0 0
        %884 = vmatprep.subr.bf16.mxu0 0
        %885 = vmatpush2.bf16.msra.mxu0 0
        %886 = vmatprep.subr.bf16.mxu0 0
        %887 = vmatpush2.bf16.msra.mxu0 0
        %888 = vmatprep.subr.bf16.mxu0 0
        %889 = vmatpush2.bf16.msra.mxu0 0
        %890 = vmatprep.subr.bf16.mxu0 0
        %891 = vmatpush2.bf16.msra.mxu0 0
        %892 = vmatprep.mubr.bf16.mxu0 0
        %893 = vmatmul.mubr.bf16.gmra.mxu0 %v858
        %v894 = vpop.f32.mrf.mxu0
        %v895 = vadd.f32 0.0, %v894
        %v896 = vpop.f32.mrf.mxu0
        %v897 = vpop.f32.mrf.mxu0
        %v898 = vpop.f32.mrf.mxu0
        %899 = vdwg.mxu0
        %v900 = vpack.c.bf16 %v895, %v895
        %s901 = scalar_lea.vmem %s2, 72
        %v902 = vld [vmem:[%s901] sm:$0xf]
        %v903 = vld [vmem:[%s901 + $0x4] sm:$0xf]
        %v904 = vld [vmem:[%s901 + $0x8] sm:$0xf]
        %v905 = vld [vmem:[%s901 + $0xc] sm:$0xf]
        %v906 = vld [vmem:[%s901 + $0x10] sm:$0xf]
        %v907 = vld [vmem:[%s901 + $0x14] sm:$0xf]
        %v914 = vunpack.c.l.b16 %v902
        %v915 = vunpack.c.l.b16 %v903
        %v916 = vunpack.c.l.b16 %v904
        %v917 = vunpack.c.l.b16 %v905
        %v918 = vunpack.c.l.b16 %v906
        %v919 = vunpack.c.l.b16 %v907
        %v920 = vpack.c.b16 %v915, %v914
        %v921 = vpack.c.b16 %v917, %v916
        %v922 = vpack.c.b16 %v919, %v918
        %v927 = vsel %vm635, %v900, 0
        %929 = vmatprep.subr.bf16.mxu0 0
        %930 = vmatpush1.bf16.msra.mxu0 0
        %931 = vmatprep.subr.bf16.mxu0 0
        %932 = vmatpush1.bf16.msra.mxu0 0
        %933 = vmatprep.subr.bf16.mxu0 0
        %934 = vmatpush1.bf16.msra.mxu0 0
        %935 = vmatprep.subr.bf16.mxu0 0
        %936 = vmatpush1.bf16.msra.mxu0 0
        %937 = vmatprep.subr.bf16.mxu0 0
        %938 = vmatpush1.bf16.msra.mxu0 0
        %939 = vmatprep.subr.bf16.mxu0 0
        %940 = vmatpush1.bf16.msra.mxu0 %v922
        %941 = vmatprep.subr.bf16.mxu0 0
        %942 = vmatpush1.bf16.msra.mxu0 %v921
        %943 = vmatprep.subr.bf16.mxu0 0
        %944 = vmatpush1.bf16.msra.mxu0 %v920
        %945 = vmatprep.subr.bf16.mxu0 0
        %946 = vmatpush2.bf16.msra.mxu0 0
        %947 = vmatprep.subr.bf16.mxu0 0
        %948 = vmatpush2.bf16.msra.mxu0 0
        %949 = vmatprep.subr.bf16.mxu0 0
        %950 = vmatpush2.bf16.msra.mxu0 0
        %951 = vmatprep.subr.bf16.mxu0 0
        %952 = vmatpush2.bf16.msra.mxu0 0
        %953 = vmatprep.subr.bf16.mxu0 0
        %954 = vmatpush2.bf16.msra.mxu0 0
        %955 = vmatprep.subr.bf16.mxu0 0
        %956 = vmatpush2.bf16.msra.mxu0 0
        %957 = vmatprep.subr.bf16.mxu0 0
        %958 = vmatpush2.bf16.msra.mxu0 0
        %959 = vmatprep.subr.bf16.mxu0 0
        %960 = vmatpush2.bf16.msra.mxu0 0
        %961 = vmatprep.mubr.bf16.mxu0 0
        %962 = vmatmul.mubr.bf16.gmra.mxu0 %v927
        %v963 = vpop.f32.mrf.mxu0
        %v964 = vadd.f32 0.0, %v963
        %v965 = vpop.f32.mrf.mxu0
        %v966 = vpop.f32.mrf.mxu0
        %v967 = vpop.f32.mrf.mxu0
        %968 = vdwg.mxu0
        %v969 = vadd.f32 %v854, %v964
        %v970 = vld [vmem:[%s3] sm:$0x1]
        %v972 = vlaneseq
        %v973 = vshrl.u32 %v972, 7
        %v974 = vsub.s32 0, %v973
        %v975 = vrot.slane %v970, %v974
        %v977 = vadd.f32 %v969, %v975
        %vm978 = vcmp.ge.f32.partialorder %v977, 0.0
        %v979 = vmul.f32 %v977, 0.01
        %v980 = vsel %vm978, %v977, %v979
        %v981 = vpack.c.bf16 %v980, %v980
        %v982 = vld [vmem:[%s4] sm:$0x3]
        %vm983 = vcmask 64512
        %v985 = vsel %vm983, %v982, 0
        %vm987 = vcmask 1043456
        %v989 = vsel %vm987, %v981, 0
        %991 = vmatprep.subr.bf16.mxu0 0
        %992 = vmatpush1.bf16.msra.mxu0 0
        %993 = vmatprep.subr.bf16.mxu0 0
        %994 = vmatpush1.bf16.msra.mxu0 0
        %995 = vmatprep.subr.bf16.mxu0 0
        %996 = vmatpush1.bf16.msra.mxu0 0
        %997 = vmatprep.subr.bf16.mxu0 0
        %998 = vmatpush1.bf16.msra.mxu0 0
        %999 = vmatprep.subr.bf16.mxu0 0
        %1000 = vmatpush1.bf16.msra.mxu0 0
        %1001 = vmatprep.subr.bf16.mxu0 0
        %1002 = vmatpush1.bf16.msra.mxu0 0
        %1003 = vmatprep.subr.bf16.mxu0 0
        %1004 = vmatpush1.bf16.msra.mxu0 0
        %1005 = vmatprep.subr.bf16.mxu0 0
        %1006 = vmatpush1.bf16.msra.mxu0 %v989
        %1007 = vmatprep.subr.bf16.mxu0 0
        %1008 = vmatpush2.bf16.msra.mxu0 0
        %1009 = vmatprep.subr.bf16.mxu0 0
        %1010 = vmatpush2.bf16.msra.mxu0 0
        %1011 = vmatprep.subr.bf16.mxu0 0
        %1012 = vmatpush2.bf16.msra.mxu0 0
        %1013 = vmatprep.subr.bf16.mxu0 0
        %1014 = vmatpush2.bf16.msra.mxu0 0
        %1015 = vmatprep.subr.bf16.mxu0 0
        %1016 = vmatpush2.bf16.msra.mxu0 0
        %1017 = vmatprep.subr.bf16.mxu0 0
        %1018 = vmatpush2.bf16.msra.mxu0 0
        %1019 = vmatprep.subr.bf16.mxu0 0
        %1020 = vmatpush2.bf16.msra.mxu0 0
        %1021 = vmatprep.subr.bf16.mxu0 0
        %1022 = vmatpush2.bf16.msra.mxu0 0
        %1023 = vmatprep.mubr.bf16.mxu0 0
        %1024 = vmatmul.mubr.bf16.gmra.mxu0 %v985
        %v1025 = vpop.f32.mrf.mxu0
        %v1026 = vadd.f32 0.0, %v1025
        %v1027 = vpop.f32.mrf.mxu0
        %v1028 = vpop.f32.mrf.mxu0
        %v1029 = vpop.f32.mrf.mxu0
        %1030 = vdwg.mxu0
        %v1031 = vpack.c.bf16 %v1026, %v1026
        %v1032 = vld [vmem:[%s5] sm:$0xf]
        %v1033 = vld [vmem:[%s5 + $0x4] sm:$0xf]
        %v1034 = vld [vmem:[%s5 + $0x8] sm:$0xf]
        %v1035 = vld [vmem:[%s5 + $0xc] sm:$0xf]
        %v1036 = vld [vmem:[%s5 + $0x10] sm:$0xf]
        %v1037 = vld [vmem:[%s5 + $0x14] sm:$0xf]
        %v1038 = vld [vmem:[%s5 + $0x18] sm:$0xf]
        %v1039 = vld [vmem:[%s5 + $0x1c] sm:$0xf]
        %s1040 = scalar_lea.vmem %s4, 2
        %v1041 = vld [vmem:[%s1040] sm:$0x3]
        %v1043 = vsel %vm983, %v1041, 0
        %1045 = vmatprep.subr.bf16.mxu0 0
        %1046 = vmatpush1.bf16.msra.mxu0 0
        %1047 = vmatprep.subr.bf16.mxu0 0
        %1048 = vmatpush1.bf16.msra.mxu0 0
        %1049 = vmatprep.subr.bf16.mxu0 0
        %1050 = vmatpush1.bf16.msra.mxu0 0
        %1051 = vmatprep.subr.bf16.mxu0 0
        %1052 = vmatpush1.bf16.msra.mxu0 0
        %1053 = vmatprep.subr.bf16.mxu0 0
        %1054 = vmatpush1.bf16.msra.mxu0 0
        %1055 = vmatprep.subr.bf16.mxu0 0
        %1056 = vmatpush1.bf16.msra.mxu0 0
        %1057 = vmatprep.subr.bf16.mxu0 0
        %1058 = vmatpush1.bf16.msra.mxu0 0
        %1059 = vmatprep.subr.bf16.mxu0 0
        %1060 = vmatpush1.bf16.msra.mxu0 %v989
        %1061 = vmatprep.subr.bf16.mxu0 0
        %1062 = vmatpush2.bf16.msra.mxu0 0
        %1063 = vmatprep.subr.bf16.mxu0 0
        %1064 = vmatpush2.bf16.msra.mxu0 0
        %1065 = vmatprep.subr.bf16.mxu0 0
        %1066 = vmatpush2.bf16.msra.mxu0 0
        %1067 = vmatprep.subr.bf16.mxu0 0
        %1068 = vmatpush2.bf16.msra.mxu0 0
        %1069 = vmatprep.subr.bf16.mxu0 0
        %1070 = vmatpush2.bf16.msra.mxu0 0
        %1071 = vmatprep.subr.bf16.mxu0 0
        %1072 = vmatpush2.bf16.msra.mxu0 0
        %1073 = vmatprep.subr.bf16.mxu0 0
        %1074 = vmatpush2.bf16.msra.mxu0 0
        %1075 = vmatprep.subr.bf16.mxu0 0
        %1076 = vmatpush2.bf16.msra.mxu0 0
        %1077 = vmatprep.mubr.bf16.mxu0 0
        %1078 = vmatmul.mubr.bf16.gmra.mxu0 %v1043
        %v1079 = vpop.f32.mrf.mxu0
        %v1080 = vadd.f32 0.0, %v1079
        %v1081 = vpop.f32.mrf.mxu0
        %v1082 = vpop.f32.mrf.mxu0
        %v1083 = vpop.f32.mrf.mxu0
        %1084 = vdwg.mxu0
        %v1085 = vpack.c.bf16 %v1080, %v1080
        %s1086 = scalar_lea.vmem %s5, 32
        %v1087 = vld [vmem:[%s1086] sm:$0xf]
        %v1088 = vld [vmem:[%s1086 + $0x4] sm:$0xf]
        %v1089 = vld [vmem:[%s1086 + $0x8] sm:$0xf]
        %v1090 = vld [vmem:[%s1086 + $0xc] sm:$0xf]
        %v1091 = vld [vmem:[%s1086 + $0x10] sm:$0xf]
        %v1092 = vld [vmem:[%s1086 + $0x14] sm:$0xf]
        %v1093 = vld [vmem:[%s1086 + $0x18] sm:$0xf]
        %v1094 = vld [vmem:[%s1086 + $0x1c] sm:$0xf]
        %v1103 = vunpack.c.l.b16 %v1087
        %v1104 = vunpack.c.l.b16 %v1088
        %v1105 = vunpack.c.l.b16 %v1089
        %v1106 = vunpack.c.l.b16 %v1090
        %v1107 = vunpack.c.l.b16 %v1091
        %v1108 = vunpack.c.l.b16 %v1092
        %v1109 = vunpack.c.l.b16 %v1093
        %v1110 = vunpack.c.l.b16 %v1094
        %v1111 = vpack.c.b16 %v1104, %v1103
        %v1112 = vpack.c.b16 %v1106, %v1105
        %v1113 = vpack.c.b16 %v1108, %v1107
        %v1114 = vpack.c.b16 %v1110, %v1109
        %vm1119 = vcmask 523264
        %v1121 = vsel %vm1119, %v1085, 0
        %1123 = vmatprep.subr.bf16.mxu0 0
        %1124 = vmatpush1.bf16.msra.mxu0 0
        %1125 = vmatprep.subr.bf16.mxu0 0
        %1126 = vmatpush1.bf16.msra.mxu0 0
        %1127 = vmatprep.subr.bf16.mxu0 0
        %1128 = vmatpush1.bf16.msra.mxu0 0
        %1129 = vmatprep.subr.bf16.mxu0 0
        %1130 = vmatpush1.bf16.msra.mxu0 0
        %1131 = vmatprep.subr.bf16.mxu0 0
        %1132 = vmatpush1.bf16.msra.mxu0 %v1114
        %1133 = vmatprep.subr.bf16.mxu0 0
        %1134 = vmatpush1.bf16.msra.mxu0 %v1113
        %1135 = vmatprep.subr.bf16.mxu0 0
        %1136 = vmatpush1.bf16.msra.mxu0 %v1112
        %1137 = vmatprep.subr.bf16.mxu0 0
        %1138 = vmatpush1.bf16.msra.mxu0 %v1111
        %1139 = vmatprep.subr.bf16.mxu0 0
        %1140 = vmatpush2.bf16.msra.mxu0 0
        %1141 = vmatprep.subr.bf16.mxu0 0
        %1142 = vmatpush2.bf16.msra.mxu0 0
        %1143 = vmatprep.subr.bf16.mxu0 0
        %1144 = vmatpush2.bf16.msra.mxu0 0
        %1145 = vmatprep.subr.bf16.mxu0 0
        %1146 = vmatpush2.bf16.msra.mxu0 0
        %1147 = vmatprep.subr.bf16.mxu0 0
        %1148 = vmatpush2.bf16.msra.mxu0 0
        %1149 = vmatprep.subr.bf16.mxu0 0
        %1150 = vmatpush2.bf16.msra.mxu0 0
        %1151 = vmatprep.subr.bf16.mxu0 0
        %1152 = vmatpush2.bf16.msra.mxu0 0
        %1153 = vmatprep.subr.bf16.mxu0 0
        %1154 = vmatpush2.bf16.msra.mxu0 0
        %1155 = vmatprep.mubr.bf16.mxu0 0
        %1156 = vmatmul.mubr.bf16.gmra.mxu0 %v1121
        %v1157 = vpop.f32.mrf.mxu0
        %v1158 = vadd.f32 0.0, %v1157
        %v1159 = vpop.f32.mrf.mxu0
        %v1160 = vpop.f32.mrf.mxu0
        %v1161 = vpop.f32.mrf.mxu0
        %1162 = vdwg.mxu0
        %v1171 = vunpack.c.l.b16 %v1032
        %v1172 = vunpack.c.l.b16 %v1033
        %v1173 = vunpack.c.l.b16 %v1034
        %v1174 = vunpack.c.l.b16 %v1035
        %v1175 = vunpack.c.l.b16 %v1036
        %v1176 = vunpack.c.l.b16 %v1037
        %v1177 = vunpack.c.l.b16 %v1038
        %v1178 = vunpack.c.l.b16 %v1039
        %v1179 = vpack.c.b16 %v1172, %v1171
        %v1180 = vpack.c.b16 %v1174, %v1173
        %v1181 = vpack.c.b16 %v1176, %v1175
        %v1182 = vpack.c.b16 %v1178, %v1177
        %v1188 = vsel %vm1119, %v1031, 0
        %1190 = vmatprep.subr.bf16.mxu0 0
        %1191 = vmatpush1.bf16.msra.mxu0 0
        %1192 = vmatprep.subr.bf16.mxu0 0
        %1193 = vmatpush1.bf16.msra.mxu0 0
        %1194 = vmatprep.subr.bf16.mxu0 0
        %1195 = vmatpush1.bf16.msra.mxu0 0
        %1196 = vmatprep.subr.bf16.mxu0 0
        %1197 = vmatpush1.bf16.msra.mxu0 0
        %1198 = vmatprep.subr.bf16.mxu0 0
        %1199 = vmatpush1.bf16.msra.mxu0 %v1182
        %1200 = vmatprep.subr.bf16.mxu0 0
        %1201 = vmatpush1.bf16.msra.mxu0 %v1181
        %1202 = vmatprep.subr.bf16.mxu0 0
        %1203 = vmatpush1.bf16.msra.mxu0 %v1180
        %1204 = vmatprep.subr.bf16.mxu0 0
        %1205 = vmatpush1.bf16.msra.mxu0 %v1179
        %1206 = vmatprep.subr.bf16.mxu0 0
        %1207 = vmatpush2.bf16.msra.mxu0 0
        %1208 = vmatprep.subr.bf16.mxu0 0
        %1209 = vmatpush2.bf16.msra.mxu0 0
        %1210 = vmatprep.subr.bf16.mxu0 0
        %1211 = vmatpush2.bf16.msra.mxu0 0
        %1212 = vmatprep.subr.bf16.mxu0 0
        %1213 = vmatpush2.bf16.msra.mxu0 0
        %1214 = vmatprep.subr.bf16.mxu0 0
        %1215 = vmatpush2.bf16.msra.mxu0 0
        %1216 = vmatprep.subr.bf16.mxu0 0
        %1217 = vmatpush2.bf16.msra.mxu0 0
        %1218 = vmatprep.subr.bf16.mxu0 0
        %1219 = vmatpush2.bf16.msra.mxu0 0
        %1220 = vmatprep.subr.bf16.mxu0 0
        %1221 = vmatpush2.bf16.msra.mxu0 0
        %1222 = vmatprep.mubr.bf16.mxu0 0
        %1223 = vmatmul.mubr.bf16.gmra.mxu0 %v1188
        %v1224 = vpop.f32.mrf.mxu0
        %v1225 = vadd.f32 %v1158, %v1224
        %v1226 = vpop.f32.mrf.mxu0
        %v1227 = vpop.f32.mrf.mxu0
        %v1228 = vpop.f32.mrf.mxu0
        %1229 = vdwg.mxu0
        %s1230 = scalar_lea.vmem %s4, 4
        %v1231 = vld [vmem:[%s1230] sm:$0x3]
        %v1233 = vsel %vm983, %v1231, 0
        %1235 = vmatprep.subr.bf16.mxu0 0
        %1236 = vmatpush1.bf16.msra.mxu0 0
        %1237 = vmatprep.subr.bf16.mxu0 0
        %1238 = vmatpush1.bf16.msra.mxu0 0
        %1239 = vmatprep.subr.bf16.mxu0 0
        %1240 = vmatpush1.bf16.msra.mxu0 0
        %1241 = vmatprep.subr.bf16.mxu0 0
        %1242 = vmatpush1.bf16.msra.mxu0 0
        %1243 = vmatprep.subr.bf16.mxu0 0
        %1244 = vmatpush1.bf16.msra.mxu0 0
        %1245 = vmatprep.subr.bf16.mxu0 0
        %1246 = vmatpush1.bf16.msra.mxu0 0
        %1247 = vmatprep.subr.bf16.mxu0 0
        %1248 = vmatpush1.bf16.msra.mxu0 0
        %1249 = vmatprep.subr.bf16.mxu0 0
        %1250 = vmatpush1.bf16.msra.mxu0 %v989
        %1251 = vmatprep.subr.bf16.mxu0 0
        %1252 = vmatpush2.bf16.msra.mxu0 0
        %1253 = vmatprep.subr.bf16.mxu0 0
        %1254 = vmatpush2.bf16.msra.mxu0 0
        %1255 = vmatprep.subr.bf16.mxu0 0
        %1256 = vmatpush2.bf16.msra.mxu0 0
        %1257 = vmatprep.subr.bf16.mxu0 0
        %1258 = vmatpush2.bf16.msra.mxu0 0
        %1259 = vmatprep.subr.bf16.mxu0 0
        %1260 = vmatpush2.bf16.msra.mxu0 0
        %1261 = vmatprep.subr.bf16.mxu0 0
        %1262 = vmatpush2.bf16.msra.mxu0 0
        %1263 = vmatprep.subr.bf16.mxu0 0
        %1264 = vmatpush2.bf16.msra.mxu0 0
        %1265 = vmatprep.subr.bf16.mxu0 0
        %1266 = vmatpush2.bf16.msra.mxu0 0
        %1267 = vmatprep.mubr.bf16.mxu0 0
        %1268 = vmatmul.mubr.bf16.gmra.mxu0 %v1233
        %v1269 = vpop.f32.mrf.mxu0
        %v1270 = vadd.f32 0.0, %v1269
        %v1271 = vpop.f32.mrf.mxu0
        %v1272 = vpop.f32.mrf.mxu0
        %v1273 = vpop.f32.mrf.mxu0
        %1274 = vdwg.mxu0
        %v1275 = vpack.c.bf16 %v1270, %v1270
        %s1276 = scalar_lea.vmem %s5, 64
        %v1277 = vld [vmem:[%s1276] sm:$0xf]
        %v1278 = vld [vmem:[%s1276 + $0x4] sm:$0xf]
        %v1279 = vld [vmem:[%s1276 + $0x8] sm:$0xf]
        %v1280 = vld [vmem:[%s1276 + $0xc] sm:$0xf]
        %v1281 = vld [vmem:[%s1276 + $0x10] sm:$0xf]
        %v1282 = vld [vmem:[%s1276 + $0x14] sm:$0xf]
        %v1283 = vld [vmem:[%s1276 + $0x18] sm:$0xf]
        %v1284 = vld [vmem:[%s1276 + $0x1c] sm:$0xf]
        %v1293 = vunpack.c.l.b16 %v1277
        %v1294 = vunpack.c.l.b16 %v1278
        %v1295 = vunpack.c.l.b16 %v1279
        %v1296 = vunpack.c.l.b16 %v1280
        %v1297 = vunpack.c.l.b16 %v1281
        %v1298 = vunpack.c.l.b16 %v1282
        %v1299 = vunpack.c.l.b16 %v1283
        %v1300 = vunpack.c.l.b16 %v1284
        %v1301 = vpack.c.b16 %v1294, %v1293
        %v1302 = vpack.c.b16 %v1296, %v1295
        %v1303 = vpack.c.b16 %v1298, %v1297
        %v1304 = vpack.c.b16 %v1300, %v1299
        %v1310 = vsel %vm1119, %v1275, 0
        %1312 = vmatprep.subr.bf16.mxu0 0
        %1313 = vmatpush1.bf16.msra.mxu0 0
        %1314 = vmatprep.subr.bf16.mxu0 0
        %1315 = vmatpush1.bf16.msra.mxu0 0
        %1316 = vmatprep.subr.bf16.mxu0 0
        %1317 = vmatpush1.bf16.msra.mxu0 0
        %1318 = vmatprep.subr.bf16.mxu0 0
        %1319 = vmatpush1.bf16.msra.mxu0 0
        %1320 = vmatprep.subr.bf16.mxu0 0
        %1321 = vmatpush1.bf16.msra.mxu0 %v1304
        %1322 = vmatprep.subr.bf16.mxu0 0
        %1323 = vmatpush1.bf16.msra.mxu0 %v1303
        %1324 = vmatprep.subr.bf16.mxu0 0
        %1325 = vmatpush1.bf16.msra.mxu0 %v1302
        %1326 = vmatprep.subr.bf16.mxu0 0
        %1327 = vmatpush1.bf16.msra.mxu0 %v1301
        %1328 = vmatprep.subr.bf16.mxu0 0
        %1329 = vmatpush2.bf16.msra.mxu0 0
        %1330 = vmatprep.subr.bf16.mxu0 0
        %1331 = vmatpush2.bf16.msra.mxu0 0
        %1332 = vmatprep.subr.bf16.mxu0 0
        %1333 = vmatpush2.bf16.msra.mxu0 0
        %1334 = vmatprep.subr.bf16.mxu0 0
        %1335 = vmatpush2.bf16.msra.mxu0 0
        %1336 = vmatprep.subr.bf16.mxu0 0
        %1337 = vmatpush2.bf16.msra.mxu0 0
        %1338 = vmatprep.subr.bf16.mxu0 0
        %1339 = vmatpush2.bf16.msra.mxu0 0
        %1340 = vmatprep.subr.bf16.mxu0 0
        %1341 = vmatpush2.bf16.msra.mxu0 0
        %1342 = vmatprep.subr.bf16.mxu0 0
        %1343 = vmatpush2.bf16.msra.mxu0 0
        %1344 = vmatprep.mubr.bf16.mxu0 0
        %1345 = vmatmul.mubr.bf16.gmra.mxu0 %v1310
        %v1346 = vpop.f32.mrf.mxu0
        %v1347 = vadd.f32 0.0, %v1346
        %v1348 = vpop.f32.mrf.mxu0
        %v1349 = vpop.f32.mrf.mxu0
        %v1350 = vpop.f32.mrf.mxu0
        %1351 = vdwg.mxu0
        %v1352 = vadd.f32 %v1225, %v1347
        %s1353 = scalar_lea.vmem %s4, 6
        %v1354 = vld [vmem:[%s1353] sm:$0x3]
        %v1356 = vsel %vm983, %v1354, 0
        %1358 = vmatprep.subr.bf16.mxu0 0
        %1359 = vmatpush1.bf16.msra.mxu0 0
        %1360 = vmatprep.subr.bf16.mxu0 0
        %1361 = vmatpush1.bf16.msra.mxu0 0
        %1362 = vmatprep.subr.bf16.mxu0 0
        %1363 = vmatpush1.bf16.msra.mxu0 0
        %1364 = vmatprep.subr.bf16.mxu0 0
        %1365 = vmatpush1.bf16.msra.mxu0 0
        %1366 = vmatprep.subr.bf16.mxu0 0
        %1367 = vmatpush1.bf16.msra.mxu0 0
        %1368 = vmatprep.subr.bf16.mxu0 0
        %1369 = vmatpush1.bf16.msra.mxu0 0
        %1370 = vmatprep.subr.bf16.mxu0 0
        %1371 = vmatpush1.bf16.msra.mxu0 0
        %1372 = vmatprep.subr.bf16.mxu0 0
        %1373 = vmatpush1.bf16.msra.mxu0 %v989
        %1374 = vmatprep.subr.bf16.mxu0 0
        %1375 = vmatpush2.bf16.msra.mxu0 0
        %1376 = vmatprep.subr.bf16.mxu0 0
        %1377 = vmatpush2.bf16.msra.mxu0 0
        %1378 = vmatprep.subr.bf16.mxu0 0
        %1379 = vmatpush2.bf16.msra.mxu0 0
        %1380 = vmatprep.subr.bf16.mxu0 0
        %1381 = vmatpush2.bf16.msra.mxu0 0
        %1382 = vmatprep.subr.bf16.mxu0 0
        %1383 = vmatpush2.bf16.msra.mxu0 0
        %1384 = vmatprep.subr.bf16.mxu0 0
        %1385 = vmatpush2.bf16.msra.mxu0 0
        %1386 = vmatprep.subr.bf16.mxu0 0
        %1387 = vmatpush2.bf16.msra.mxu0 0
        %1388 = vmatprep.subr.bf16.mxu0 0
        %1389 = vmatpush2.bf16.msra.mxu0 0
        %1390 = vmatprep.mubr.bf16.mxu0 0
        %1391 = vmatmul.mubr.bf16.gmra.mxu0 %v1356
        %v1392 = vpop.f32.mrf.mxu0
        %v1393 = vadd.f32 0.0, %v1392
        %v1394 = vpop.f32.mrf.mxu0
        %v1395 = vpop.f32.mrf.mxu0
        %v1396 = vpop.f32.mrf.mxu0
        %1397 = vdwg.mxu0
        %v1398 = vpack.c.bf16 %v1393, %v1393
        %s1399 = scalar_lea.vmem %s5, 96
        %v1400 = vld [vmem:[%s1399] sm:$0xf]
        %v1401 = vld [vmem:[%s1399 + $0x4] sm:$0xf]
        %v1402 = vld [vmem:[%s1399 + $0x8] sm:$0xf]
        %v1403 = vld [vmem:[%s1399 + $0xc] sm:$0xf]
        %v1404 = vld [vmem:[%s1399 + $0x10] sm:$0xf]
        %v1405 = vld [vmem:[%s1399 + $0x14] sm:$0xf]
        %v1406 = vld [vmem:[%s1399 + $0x18] sm:$0xf]
        %v1407 = vld [vmem:[%s1399 + $0x1c] sm:$0xf]
        %v1416 = vunpack.c.l.b16 %v1400
        %v1417 = vunpack.c.l.b16 %v1401
        %v1418 = vunpack.c.l.b16 %v1402
        %v1419 = vunpack.c.l.b16 %v1403
        %v1420 = vunpack.c.l.b16 %v1404
        %v1421 = vunpack.c.l.b16 %v1405
        %v1422 = vunpack.c.l.b16 %v1406
        %v1423 = vunpack.c.l.b16 %v1407
        %v1424 = vpack.c.b16 %v1417, %v1416
        %v1425 = vpack.c.b16 %v1419, %v1418
        %v1426 = vpack.c.b16 %v1421, %v1420
        %v1427 = vpack.c.b16 %v1423, %v1422
        %v1433 = vsel %vm1119, %v1398, 0
        %1435 = vmatprep.subr.bf16.mxu0 0
        %1436 = vmatpush1.bf16.msra.mxu0 0
        %1437 = vmatprep.subr.bf16.mxu0 0
        %1438 = vmatpush1.bf16.msra.mxu0 0
        %1439 = vmatprep.subr.bf16.mxu0 0
        %1440 = vmatpush1.bf16.msra.mxu0 0
        %1441 = vmatprep.subr.bf16.mxu0 0
        %1442 = vmatpush1.bf16.msra.mxu0 0
        %1443 = vmatprep.subr.bf16.mxu0 0
        %1444 = vmatpush1.bf16.msra.mxu0 %v1427
        %1445 = vmatprep.subr.bf16.mxu0 0
        %1446 = vmatpush1.bf16.msra.mxu0 %v1426
        %1447 = vmatprep.subr.bf16.mxu0 0
        %1448 = vmatpush1.bf16.msra.mxu0 %v1425
        %1449 = vmatprep.subr.bf16.mxu0 0
        %1450 = vmatpush1.bf16.msra.mxu0 %v1424
        %1451 = vmatprep.subr.bf16.mxu0 0
        %1452 = vmatpush2.bf16.msra.mxu0 0
        %1453 = vmatprep.subr.bf16.mxu0 0
        %1454 = vmatpush2.bf16.msra.mxu0 0
        %1455 = vmatprep.subr.bf16.mxu0 0
        %1456 = vmatpush2.bf16.msra.mxu0 0
        %1457 = vmatprep.subr.bf16.mxu0 0
        %1458 = vmatpush2.bf16.msra.mxu0 0
        %1459 = vmatprep.subr.bf16.mxu0 0
        %1460 = vmatpush2.bf16.msra.mxu0 0
        %1461 = vmatprep.subr.bf16.mxu0 0
        %1462 = vmatpush2.bf16.msra.mxu0 0
        %1463 = vmatprep.subr.bf16.mxu0 0
        %1464 = vmatpush2.bf16.msra.mxu0 0
        %1465 = vmatprep.subr.bf16.mxu0 0
        %1466 = vmatpush2.bf16.msra.mxu0 0
        %1467 = vmatprep.mubr.bf16.mxu0 0
        %1468 = vmatmul.mubr.bf16.gmra.mxu0 %v1433
        %v1469 = vpop.f32.mrf.mxu0
        %v1470 = vadd.f32 0.0, %v1469
        %v1471 = vpop.f32.mrf.mxu0
        %v1472 = vpop.f32.mrf.mxu0
        %v1473 = vpop.f32.mrf.mxu0
        %1474 = vdwg.mxu0
        %v1475 = vadd.f32 %v1352, %v1470
        %v1476 = vld [vmem:[%s6] sm:$0x1]
        %v1478 = vlaneseq
        %v1479 = vshrl.u32 %v1478, 7
        %v1480 = vsub.s32 0, %v1479
        %v1481 = vrot.slane %v1476, %v1480
        %v1483 = vadd.f32 %v1475, %v1481
        %vm1484 = vcmp.ge.f32.partialorder %v1483, 0.0
        %v1485 = vmul.f32 %v1483, 0.01
        %v1486 = vsel %vm1484, %v1483, %v1485
        %v1487 = vpack.c.bf16 %v1486, %v1486
        %v1488 = vld [vmem:[%s7] sm:$0x1]
        %vm1489 = vcmask 31744
        %v1491 = vsel %vm1489, %v1488, 0
        %vm1493 = vcmask 1041408
        %v1495 = vsel %vm1493, %v1487, 0
        %1497 = vmatprep.subr.bf16.mxu0 0
        %1498 = vmatpush1.bf16.msra.mxu0 0
        %1499 = vmatprep.subr.bf16.mxu0 0
        %1500 = vmatpush1.bf16.msra.mxu0 0
        %1501 = vmatprep.subr.bf16.mxu0 0
        %1502 = vmatpush1.bf16.msra.mxu0 0
        %1503 = vmatprep.subr.bf16.mxu0 0
        %1504 = vmatpush1.bf16.msra.mxu0 0
        %1505 = vmatprep.subr.bf16.mxu0 0
        %1506 = vmatpush1.bf16.msra.mxu0 0
        %1507 = vmatprep.subr.bf16.mxu0 0
        %1508 = vmatpush1.bf16.msra.mxu0 0
        %1509 = vmatprep.subr.bf16.mxu0 0
        %1510 = vmatpush1.bf16.msra.mxu0 0
        %1511 = vmatprep.subr.bf16.mxu0 0
        %1512 = vmatpush1.bf16.msra.mxu0 %v1495
        %1513 = vmatprep.subr.bf16.mxu0 0
        %1514 = vmatpush2.bf16.msra.mxu0 0
        %1515 = vmatprep.subr.bf16.mxu0 0
        %1516 = vmatpush2.bf16.msra.mxu0 0
        %1517 = vmatprep.subr.bf16.mxu0 0
        %1518 = vmatpush2.bf16.msra.mxu0 0
        %1519 = vmatprep.subr.bf16.mxu0 0
        %1520 = vmatpush2.bf16.msra.mxu0 0
        %1521 = vmatprep.subr.bf16.mxu0 0
        %1522 = vmatpush2.bf16.msra.mxu0 0
        %1523 = vmatprep.subr.bf16.mxu0 0
        %1524 = vmatpush2.bf16.msra.mxu0 0
        %1525 = vmatprep.subr.bf16.mxu0 0
        %1526 = vmatpush2.bf16.msra.mxu0 0
        %1527 = vmatprep.subr.bf16.mxu0 0
        %1528 = vmatpush2.bf16.msra.mxu0 0
        %1529 = vmatprep.mubr.bf16.mxu0 0
        %1530 = vmatmul.mubr.bf16.gmra.mxu0 %v1491
        %v1531 = vpop.f32.mrf.mxu0
        %v1532 = vadd.f32 0.0, %v1531
        %v1533 = vpop.f32.mrf.mxu0
        %v1534 = vpop.f32.mrf.mxu0
        %v1535 = vpop.f32.mrf.mxu0
        %1536 = vdwg.mxu0
        %v1537 = vpack.c.bf16 %v1532, %v1532
        %v1538 = vld [vmem:[%s8] sm:$0xf]
        %v1539 = vld [vmem:[%s8 + $0x4] sm:$0xf]
        %v1540 = vld [vmem:[%s8 + $0x8] sm:$0xf]
        %v1541 = vld [vmem:[%s8 + $0xc] sm:$0xf]
        %v1542 = vld [vmem:[%s8 + $0x10] sm:$0xf]
        %v1543 = vld [vmem:[%s8 + $0x14] sm:$0xf]
        %v1544 = vld [vmem:[%s8 + $0x18] sm:$0xf]
        %v1545 = vld [vmem:[%s8 + $0x1c] sm:$0xf]
        %s1546 = scalar_lea.vmem %s7, 1
        %v1547 = vld [vmem:[%s1546] sm:$0x1]
        %v1549 = vsel %vm1489, %v1547, 0
        %1551 = vmatprep.subr.bf16.mxu0 0
        %1552 = vmatpush1.bf16.msra.mxu0 0
        %1553 = vmatprep.subr.bf16.mxu0 0
        %1554 = vmatpush1.bf16.msra.mxu0 0
        %1555 = vmatprep.subr.bf16.mxu0 0
        %1556 = vmatpush1.bf16.msra.mxu0 0
        %1557 = vmatprep.subr.bf16.mxu0 0
        %1558 = vmatpush1.bf16.msra.mxu0 0
        %1559 = vmatprep.subr.bf16.mxu0 0
        %1560 = vmatpush1.bf16.msra.mxu0 0
        %1561 = vmatprep.subr.bf16.mxu0 0
        %1562 = vmatpush1.bf16.msra.mxu0 0
        %1563 = vmatprep.subr.bf16.mxu0 0
        %1564 = vmatpush1.bf16.msra.mxu0 0
        %1565 = vmatprep.subr.bf16.mxu0 0
        %1566 = vmatpush1.bf16.msra.mxu0 %v1495
        %1567 = vmatprep.subr.bf16.mxu0 0
        %1568 = vmatpush2.bf16.msra.mxu0 0
        %1569 = vmatprep.subr.bf16.mxu0 0
        %1570 = vmatpush2.bf16.msra.mxu0 0
        %1571 = vmatprep.subr.bf16.mxu0 0
        %1572 = vmatpush2.bf16.msra.mxu0 0
        %1573 = vmatprep.subr.bf16.mxu0 0
        %1574 = vmatpush2.bf16.msra.mxu0 0
        %1575 = vmatprep.subr.bf16.mxu0 0
        %1576 = vmatpush2.bf16.msra.mxu0 0
        %1577 = vmatprep.subr.bf16.mxu0 0
        %1578 = vmatpush2.bf16.msra.mxu0 0
        %1579 = vmatprep.subr.bf16.mxu0 0
        %1580 = vmatpush2.bf16.msra.mxu0 0
        %1581 = vmatprep.subr.bf16.mxu0 0
        %1582 = vmatpush2.bf16.msra.mxu0 0
        %1583 = vmatprep.mubr.bf16.mxu0 0
        %1584 = vmatmul.mubr.bf16.gmra.mxu0 %v1549
        %v1585 = vpop.f32.mrf.mxu0
        %v1586 = vadd.f32 0.0, %v1585
        %v1587 = vpop.f32.mrf.mxu0
        %v1588 = vpop.f32.mrf.mxu0
        %v1589 = vpop.f32.mrf.mxu0
        %1590 = vdwg.mxu0
        %v1591 = vpack.c.bf16 %v1586, %v1586
        %s1592 = scalar_lea.vmem %s8, 32
        %v1593 = vld [vmem:[%s1592] sm:$0xf]
        %v1594 = vld [vmem:[%s1592 + $0x4] sm:$0xf]
        %v1595 = vld [vmem:[%s1592 + $0x8] sm:$0xf]
        %v1596 = vld [vmem:[%s1592 + $0xc] sm:$0xf]
        %v1597 = vld [vmem:[%s1592 + $0x10] sm:$0xf]
        %v1598 = vld [vmem:[%s1592 + $0x14] sm:$0xf]
        %v1599 = vld [vmem:[%s1592 + $0x18] sm:$0xf]
        %v1600 = vld [vmem:[%s1592 + $0x1c] sm:$0xf]
        %v1609 = vunpack.c.l.b16 %v1593
        %v1610 = vunpack.c.l.b16 %v1594
        %v1611 = vunpack.c.l.b16 %v1595
        %v1612 = vunpack.c.l.b16 %v1596
        %v1613 = vunpack.c.l.b16 %v1597
        %v1614 = vunpack.c.l.b16 %v1598
        %v1615 = vunpack.c.l.b16 %v1599
        %v1616 = vunpack.c.l.b16 %v1600
        %v1617 = vpack.c.b16 %v1610, %v1609
        %v1618 = vpack.c.b16 %v1612, %v1611
        %v1619 = vpack.c.b16 %v1614, %v1613
        %v1620 = vpack.c.b16 %v1616, %v1615
        %v1626 = vsel %vm1119, %v1591, 0
        %1628 = vmatprep.subr.bf16.mxu0 0
        %1629 = vmatpush1.bf16.msra.mxu0 0
        %1630 = vmatprep.subr.bf16.mxu0 0
        %1631 = vmatpush1.bf16.msra.mxu0 0
        %1632 = vmatprep.subr.bf16.mxu0 0
        %1633 = vmatpush1.bf16.msra.mxu0 0
        %1634 = vmatprep.subr.bf16.mxu0 0
        %1635 = vmatpush1.bf16.msra.mxu0 0
        %1636 = vmatprep.subr.bf16.mxu0 0
        %1637 = vmatpush1.bf16.msra.mxu0 %v1620
        %1638 = vmatprep.subr.bf16.mxu0 0
        %1639 = vmatpush1.bf16.msra.mxu0 %v1619
        %1640 = vmatprep.subr.bf16.mxu0 0
        %1641 = vmatpush1.bf16.msra.mxu0 %v1618
        %1642 = vmatprep.subr.bf16.mxu0 0
        %1643 = vmatpush1.bf16.msra.mxu0 %v1617
        %1644 = vmatprep.subr.bf16.mxu0 0
        %1645 = vmatpush2.bf16.msra.mxu0 0
        %1646 = vmatprep.subr.bf16.mxu0 0
        %1647 = vmatpush2.bf16.msra.mxu0 0
        %1648 = vmatprep.subr.bf16.mxu0 0
        %1649 = vmatpush2.bf16.msra.mxu0 0
        %1650 = vmatprep.subr.bf16.mxu0 0
        %1651 = vmatpush2.bf16.msra.mxu0 0
        %1652 = vmatprep.subr.bf16.mxu0 0
        %1653 = vmatpush2.bf16.msra.mxu0 0
        %1654 = vmatprep.subr.bf16.mxu0 0
        %1655 = vmatpush2.bf16.msra.mxu0 0
        %1656 = vmatprep.subr.bf16.mxu0 0
        %1657 = vmatpush2.bf16.msra.mxu0 0
        %1658 = vmatprep.subr.bf16.mxu0 0
        %1659 = vmatpush2.bf16.msra.mxu0 0
        %1660 = vmatprep.mubr.bf16.mxu0 0
        %1661 = vmatmul.mubr.bf16.gmra.mxu0 %v1626
        %v1662 = vpop.f32.mrf.mxu0
        %v1663 = vadd.f32 0.0, %v1662
        %v1664 = vpop.f32.mrf.mxu0
        %v1665 = vpop.f32.mrf.mxu0
        %v1666 = vpop.f32.mrf.mxu0
        %1667 = vdwg.mxu0
        %v1676 = vunpack.c.l.b16 %v1538
        %v1677 = vunpack.c.l.b16 %v1539
        %v1678 = vunpack.c.l.b16 %v1540
        %v1679 = vunpack.c.l.b16 %v1541
        %v1680 = vunpack.c.l.b16 %v1542
        %v1681 = vunpack.c.l.b16 %v1543
        %v1682 = vunpack.c.l.b16 %v1544
        %v1683 = vunpack.c.l.b16 %v1545
        %v1684 = vpack.c.b16 %v1677, %v1676
        %v1685 = vpack.c.b16 %v1679, %v1678
        %v1686 = vpack.c.b16 %v1681, %v1680
        %v1687 = vpack.c.b16 %v1683, %v1682
        %v1693 = vsel %vm1119, %v1537, 0
        %1695 = vmatprep.subr.bf16.mxu0 0
        %1696 = vmatpush1.bf16.msra.mxu0 0
        %1697 = vmatprep.subr.bf16.mxu0 0
        %1698 = vmatpush1.bf16.msra.mxu0 0
        %1699 = vmatprep.subr.bf16.mxu0 0
        %1700 = vmatpush1.bf16.msra.mxu0 0
        %1701 = vmatprep.subr.bf16.mxu0 0
        %1702 = vmatpush1.bf16.msra.mxu0 0
        %1703 = vmatprep.subr.bf16.mxu0 0
        %1704 = vmatpush1.bf16.msra.mxu0 %v1687
        %1705 = vmatprep.subr.bf16.mxu0 0
        %1706 = vmatpush1.bf16.msra.mxu0 %v1686
        %1707 = vmatprep.subr.bf16.mxu0 0
        %1708 = vmatpush1.bf16.msra.mxu0 %v1685
        %1709 = vmatprep.subr.bf16.mxu0 0
        %1710 = vmatpush1.bf16.msra.mxu0 %v1684
        %1711 = vmatprep.subr.bf16.mxu0 0
        %1712 = vmatpush2.bf16.msra.mxu0 0
        %1713 = vmatprep.subr.bf16.mxu0 0
        %1714 = vmatpush2.bf16.msra.mxu0 0
        %1715 = vmatprep.subr.bf16.mxu0 0
        %1716 = vmatpush2.bf16.msra.mxu0 0
        %1717 = vmatprep.subr.bf16.mxu0 0
        %1718 = vmatpush2.bf16.msra.mxu0 0
        %1719 = vmatprep.subr.bf16.mxu0 0
        %1720 = vmatpush2.bf16.msra.mxu0 0
        %1721 = vmatprep.subr.bf16.mxu0 0
        %1722 = vmatpush2.bf16.msra.mxu0 0
        %1723 = vmatprep.subr.bf16.mxu0 0
        %1724 = vmatpush2.bf16.msra.mxu0 0
        %1725 = vmatprep.subr.bf16.mxu0 0
        %1726 = vmatpush2.bf16.msra.mxu0 0
        %1727 = vmatprep.mubr.bf16.mxu0 0
        %1728 = vmatmul.mubr.bf16.gmra.mxu0 %v1693
        %v1729 = vpop.f32.mrf.mxu0
        %v1730 = vadd.f32 %v1663, %v1729
        %v1731 = vpop.f32.mrf.mxu0
        %v1732 = vpop.f32.mrf.mxu0
        %v1733 = vpop.f32.mrf.mxu0
        %1734 = vdwg.mxu0
        %s1735 = scalar_lea.vmem %s7, 2
        %v1736 = vld [vmem:[%s1735] sm:$0x1]
        %v1738 = vsel %vm1489, %v1736, 0
        %1740 = vmatprep.subr.bf16.mxu0 0
        %1741 = vmatpush1.bf16.msra.mxu0 0
        %1742 = vmatprep.subr.bf16.mxu0 0
        %1743 = vmatpush1.bf16.msra.mxu0 0
        %1744 = vmatprep.subr.bf16.mxu0 0
        %1745 = vmatpush1.bf16.msra.mxu0 0
        %1746 = vmatprep.subr.bf16.mxu0 0
        %1747 = vmatpush1.bf16.msra.mxu0 0
        %1748 = vmatprep.subr.bf16.mxu0 0
        %1749 = vmatpush1.bf16.msra.mxu0 0
        %1750 = vmatprep.subr.bf16.mxu0 0
        %1751 = vmatpush1.bf16.msra.mxu0 0
        %1752 = vmatprep.subr.bf16.mxu0 0
        %1753 = vmatpush1.bf16.msra.mxu0 0
        %1754 = vmatprep.subr.bf16.mxu0 0
        %1755 = vmatpush1.bf16.msra.mxu0 %v1495
        %1756 = vmatprep.subr.bf16.mxu0 0
        %1757 = vmatpush2.bf16.msra.mxu0 0
        %1758 = vmatprep.subr.bf16.mxu0 0
        %1759 = vmatpush2.bf16.msra.mxu0 0
        %1760 = vmatprep.subr.bf16.mxu0 0
        %1761 = vmatpush2.bf16.msra.mxu0 0
        %1762 = vmatprep.subr.bf16.mxu0 0
        %1763 = vmatpush2.bf16.msra.mxu0 0
        %1764 = vmatprep.subr.bf16.mxu0 0
        %1765 = vmatpush2.bf16.msra.mxu0 0
        %1766 = vmatprep.subr.bf16.mxu0 0
        %1767 = vmatpush2.bf16.msra.mxu0 0
        %1768 = vmatprep.subr.bf16.mxu0 0
        %1769 = vmatpush2.bf16.msra.mxu0 0
        %1770 = vmatprep.subr.bf16.mxu0 0
        %1771 = vmatpush2.bf16.msra.mxu0 0
        %1772 = vmatprep.mubr.bf16.mxu0 0
        %1773 = vmatmul.mubr.bf16.gmra.mxu0 %v1738
        %v1774 = vpop.f32.mrf.mxu0
        %v1775 = vadd.f32 0.0, %v1774
        %v1776 = vpop.f32.mrf.mxu0
        %v1777 = vpop.f32.mrf.mxu0
        %v1778 = vpop.f32.mrf.mxu0
        %1779 = vdwg.mxu0
        %v1780 = vpack.c.bf16 %v1775, %v1775
        %s1781 = scalar_lea.vmem %s8, 64
        %v1782 = vld [vmem:[%s1781] sm:$0xf]
        %v1783 = vld [vmem:[%s1781 + $0x4] sm:$0xf]
        %v1784 = vld [vmem:[%s1781 + $0x8] sm:$0xf]
        %v1785 = vld [vmem:[%s1781 + $0xc] sm:$0xf]
        %v1786 = vld [vmem:[%s1781 + $0x10] sm:$0xf]
        %v1787 = vld [vmem:[%s1781 + $0x14] sm:$0xf]
        %v1788 = vld [vmem:[%s1781 + $0x18] sm:$0xf]
        %v1789 = vld [vmem:[%s1781 + $0x1c] sm:$0xf]
        %v1798 = vunpack.c.l.b16 %v1782
        %v1799 = vunpack.c.l.b16 %v1783
        %v1800 = vunpack.c.l.b16 %v1784
        %v1801 = vunpack.c.l.b16 %v1785
        %v1802 = vunpack.c.l.b16 %v1786
        %v1803 = vunpack.c.l.b16 %v1787
        %v1804 = vunpack.c.l.b16 %v1788
        %v1805 = vunpack.c.l.b16 %v1789
        %v1806 = vpack.c.b16 %v1799, %v1798
        %v1807 = vpack.c.b16 %v1801, %v1800
        %v1808 = vpack.c.b16 %v1803, %v1802
        %v1809 = vpack.c.b16 %v1805, %v1804
        %v1815 = vsel %vm1119, %v1780, 0
        %1817 = vmatprep.subr.bf16.mxu0 0
        %1818 = vmatpush1.bf16.msra.mxu0 0
        %1819 = vmatprep.subr.bf16.mxu0 0
        %1820 = vmatpush1.bf16.msra.mxu0 0
        %1821 = vmatprep.subr.bf16.mxu0 0
        %1822 = vmatpush1.bf16.msra.mxu0 0
        %1823 = vmatprep.subr.bf16.mxu0 0
        %1824 = vmatpush1.bf16.msra.mxu0 0
        %1825 = vmatprep.subr.bf16.mxu0 0
        %1826 = vmatpush1.bf16.msra.mxu0 %v1809
        %1827 = vmatprep.subr.bf16.mxu0 0
        %1828 = vmatpush1.bf16.msra.mxu0 %v1808
        %1829 = vmatprep.subr.bf16.mxu0 0
        %1830 = vmatpush1.bf16.msra.mxu0 %v1807
        %1831 = vmatprep.subr.bf16.mxu0 0
        %1832 = vmatpush1.bf16.msra.mxu0 %v1806
        %1833 = vmatprep.subr.bf16.mxu0 0
        %1834 = vmatpush2.bf16.msra.mxu0 0
        %1835 = vmatprep.subr.bf16.mxu0 0
        %1836 = vmatpush2.bf16.msra.mxu0 0
        %1837 = vmatprep.subr.bf16.mxu0 0
        %1838 = vmatpush2.bf16.msra.mxu0 0
        %1839 = vmatprep.subr.bf16.mxu0 0
        %1840 = vmatpush2.bf16.msra.mxu0 0
        %1841 = vmatprep.subr.bf16.mxu0 0
        %1842 = vmatpush2.bf16.msra.mxu0 0
        %1843 = vmatprep.subr.bf16.mxu0 0
        %1844 = vmatpush2.bf16.msra.mxu0 0
        %1845 = vmatprep.subr.bf16.mxu0 0
        %1846 = vmatpush2.bf16.msra.mxu0 0
        %1847 = vmatprep.subr.bf16.mxu0 0
        %1848 = vmatpush2.bf16.msra.mxu0 0
        %1849 = vmatprep.mubr.bf16.mxu0 0
        %1850 = vmatmul.mubr.bf16.gmra.mxu0 %v1815
        %v1851 = vpop.f32.mrf.mxu0
        %v1852 = vadd.f32 0.0, %v1851
        %v1853 = vpop.f32.mrf.mxu0
        %v1854 = vpop.f32.mrf.mxu0
        %v1855 = vpop.f32.mrf.mxu0
        %1856 = vdwg.mxu0
        %v1857 = vadd.f32 %v1730, %v1852
        %s1858 = scalar_lea.vmem %s7, 3
        %v1859 = vld [vmem:[%s1858] sm:$0x1]
        %v1861 = vsel %vm1489, %v1859, 0
        %1863 = vmatprep.subr.bf16.mxu0 0
        %1864 = vmatpush1.bf16.msra.mxu0 0
        %1865 = vmatprep.subr.bf16.mxu0 0
        %1866 = vmatpush1.bf16.msra.mxu0 0
        %1867 = vmatprep.subr.bf16.mxu0 0
        %1868 = vmatpush1.bf16.msra.mxu0 0
        %1869 = vmatprep.subr.bf16.mxu0 0
        %1870 = vmatpush1.bf16.msra.mxu0 0
        %1871 = vmatprep.subr.bf16.mxu0 0
        %1872 = vmatpush1.bf16.msra.mxu0 0
        %1873 = vmatprep.subr.bf16.mxu0 0
        %1874 = vmatpush1.bf16.msra.mxu0 0
        %1875 = vmatprep.subr.bf16.mxu0 0
        %1876 = vmatpush1.bf16.msra.mxu0 0
        %1877 = vmatprep.subr.bf16.mxu0 0
        %1878 = vmatpush1.bf16.msra.mxu0 %v1495
        %1879 = vmatprep.subr.bf16.mxu0 0
        %1880 = vmatpush2.bf16.msra.mxu0 0
        %1881 = vmatprep.subr.bf16.mxu0 0
        %1882 = vmatpush2.bf16.msra.mxu0 0
        %1883 = vmatprep.subr.bf16.mxu0 0
        %1884 = vmatpush2.bf16.msra.mxu0 0
        %1885 = vmatprep.subr.bf16.mxu0 0
        %1886 = vmatpush2.bf16.msra.mxu0 0
        %1887 = vmatprep.subr.bf16.mxu0 0
        %1888 = vmatpush2.bf16.msra.mxu0 0
        %1889 = vmatprep.subr.bf16.mxu0 0
        %1890 = vmatpush2.bf16.msra.mxu0 0
        %1891 = vmatprep.subr.bf16.mxu0 0
        %1892 = vmatpush2.bf16.msra.mxu0 0
        %1893 = vmatprep.subr.bf16.mxu0 0
        %1894 = vmatpush2.bf16.msra.mxu0 0
        %1895 = vmatprep.mubr.bf16.mxu0 0
        %1896 = vmatmul.mubr.bf16.gmra.mxu0 %v1861
        %v1897 = vpop.f32.mrf.mxu0
        %v1898 = vadd.f32 0.0, %v1897
        %v1899 = vpop.f32.mrf.mxu0
        %v1900 = vpop.f32.mrf.mxu0
        %v1901 = vpop.f32.mrf.mxu0
        %1902 = vdwg.mxu0
        %v1903 = vpack.c.bf16 %v1898, %v1898
        %s1904 = scalar_lea.vmem %s8, 96
        %v1905 = vld [vmem:[%s1904] sm:$0xf]
        %v1906 = vld [vmem:[%s1904 + $0x4] sm:$0xf]
        %v1907 = vld [vmem:[%s1904 + $0x8] sm:$0xf]
        %v1908 = vld [vmem:[%s1904 + $0xc] sm:$0xf]
        %v1909 = vld [vmem:[%s1904 + $0x10] sm:$0xf]
        %v1910 = vld [vmem:[%s1904 + $0x14] sm:$0xf]
        %v1911 = vld [vmem:[%s1904 + $0x18] sm:$0xf]
        %v1912 = vld [vmem:[%s1904 + $0x1c] sm:$0xf]
        %v1921 = vunpack.c.l.b16 %v1905
        %v1922 = vunpack.c.l.b16 %v1906
        %v1923 = vunpack.c.l.b16 %v1907
        %v1924 = vunpack.c.l.b16 %v1908
        %v1925 = vunpack.c.l.b16 %v1909
        %v1926 = vunpack.c.l.b16 %v1910
        %v1927 = vunpack.c.l.b16 %v1911
        %v1928 = vunpack.c.l.b16 %v1912
        %v1929 = vpack.c.b16 %v1922, %v1921
        %v1930 = vpack.c.b16 %v1924, %v1923
        %v1931 = vpack.c.b16 %v1926, %v1925
        %v1932 = vpack.c.b16 %v1928, %v1927
        %v1938 = vsel %vm1119, %v1903, 0
        %1940 = vmatprep.subr.bf16.mxu0 0
        %1941 = vmatpush1.bf16.msra.mxu0 0
        %1942 = vmatprep.subr.bf16.mxu0 0
        %1943 = vmatpush1.bf16.msra.mxu0 0
        %1944 = vmatprep.subr.bf16.mxu0 0
        %1945 = vmatpush1.bf16.msra.mxu0 0
        %1946 = vmatprep.subr.bf16.mxu0 0
        %1947 = vmatpush1.bf16.msra.mxu0 0
        %1948 = vmatprep.subr.bf16.mxu0 0
        %1949 = vmatpush1.bf16.msra.mxu0 %v1932
        %1950 = vmatprep.subr.bf16.mxu0 0
        %1951 = vmatpush1.bf16.msra.mxu0 %v1931
        %1952 = vmatprep.subr.bf16.mxu0 0
        %1953 = vmatpush1.bf16.msra.mxu0 %v1930
        %1954 = vmatprep.subr.bf16.mxu0 0
        %1955 = vmatpush1.bf16.msra.mxu0 %v1929
        %1956 = vmatprep.subr.bf16.mxu0 0
        %1957 = vmatpush2.bf16.msra.mxu0 0
        %1958 = vmatprep.subr.bf16.mxu0 0
        %1959 = vmatpush2.bf16.msra.mxu0 0
        %1960 = vmatprep.subr.bf16.mxu0 0
        %1961 = vmatpush2.bf16.msra.mxu0 0
        %1962 = vmatprep.subr.bf16.mxu0 0
        %1963 = vmatpush2.bf16.msra.mxu0 0
        %1964 = vmatprep.subr.bf16.mxu0 0
        %1965 = vmatpush2.bf16.msra.mxu0 0
        %1966 = vmatprep.subr.bf16.mxu0 0
        %1967 = vmatpush2.bf16.msra.mxu0 0
        %1968 = vmatprep.subr.bf16.mxu0 0
        %1969 = vmatpush2.bf16.msra.mxu0 0
        %1970 = vmatprep.subr.bf16.mxu0 0
        %1971 = vmatpush2.bf16.msra.mxu0 0
        %1972 = vmatprep.mubr.bf16.mxu0 0
        %1973 = vmatmul.mubr.bf16.gmra.mxu0 %v1938
        %v1974 = vpop.f32.mrf.mxu0
        %v1975 = vadd.f32 0.0, %v1974
        %v1976 = vpop.f32.mrf.mxu0
        %v1977 = vpop.f32.mrf.mxu0
        %v1978 = vpop.f32.mrf.mxu0
        %1979 = vdwg.mxu0
        %v1980 = vadd.f32 %v1857, %v1975
        %v1981 = vld [vmem:[%s9] sm:$0x1]
        %v1983 = vlaneseq
        %v1984 = vshrl.u32 %v1983, 7
        %v1985 = vsub.s32 0, %v1984
        %v1986 = vrot.slane %v1981, %v1985
        %v1988 = vadd.f32 %v1980, %v1986
        %vm1989 = vcmp.ge.f32.partialorder %v1988, 0.0
        %v1990 = vmul.f32 %v1988, 0.01
        %v1991 = vsel %vm1989, %v1988, %v1990
        %v1992 = vpack.c.bf16 %v1991, %v1991
        %v1993 = vld [vmem:[%s10] sm:$0x1]
        %vm1994 = vcmask 15360
        %v1996 = vsel %vm1994, %v1993, 0
        %vm1998 = vcmask 1040384
        %v2000 = vsel %vm1998, %v1992, 0
        %2002 = vmatprep.subr.bf16.mxu0 0
        %2003 = vmatpush1.bf16.msra.mxu0 0
        %2004 = vmatprep.subr.bf16.mxu0 0
        %2005 = vmatpush1.bf16.msra.mxu0 0
        %2006 = vmatprep.subr.bf16.mxu0 0
        %2007 = vmatpush1.bf16.msra.mxu0 0
        %2008 = vmatprep.subr.bf16.mxu0 0
        %2009 = vmatpush1.bf16.msra.mxu0 0
        %2010 = vmatprep.subr.bf16.mxu0 0
        %2011 = vmatpush1.bf16.msra.mxu0 0
        %2012 = vmatprep.subr.bf16.mxu0 0
        %2013 = vmatpush1.bf16.msra.mxu0 0
        %2014 = vmatprep.subr.bf16.mxu0 0
        %2015 = vmatpush1.bf16.msra.mxu0 0
        %2016 = vmatprep.subr.bf16.mxu0 0
        %2017 = vmatpush1.bf16.msra.mxu0 %v2000
        %2018 = vmatprep.subr.bf16.mxu0 0
        %2019 = vmatpush2.bf16.msra.mxu0 0
        %2020 = vmatprep.subr.bf16.mxu0 0
        %2021 = vmatpush2.bf16.msra.mxu0 0
        %2022 = vmatprep.subr.bf16.mxu0 0
        %2023 = vmatpush2.bf16.msra.mxu0 0
        %2024 = vmatprep.subr.bf16.mxu0 0
        %2025 = vmatpush2.bf16.msra.mxu0 0
        %2026 = vmatprep.subr.bf16.mxu0 0
        %2027 = vmatpush2.bf16.msra.mxu0 0
        %2028 = vmatprep.subr.bf16.mxu0 0
        %2029 = vmatpush2.bf16.msra.mxu0 0
        %2030 = vmatprep.subr.bf16.mxu0 0
        %2031 = vmatpush2.bf16.msra.mxu0 0
        %2032 = vmatprep.subr.bf16.mxu0 0
        %2033 = vmatpush2.bf16.msra.mxu0 0
        %2034 = vmatprep.mubr.bf16.mxu0 0
        %2035 = vmatmul.mubr.bf16.gmra.mxu0 %v1996
        %v2036 = vpop.f32.mrf.mxu0
        %v2037 = vadd.f32 0.0, %v2036
        %v2038 = vpop.f32.mrf.mxu0
        %v2039 = vpop.f32.mrf.mxu0
        %v2040 = vpop.f32.mrf.mxu0
        %2041 = vdwg.mxu0
        %v2042 = vpack.c.bf16 %v2037, %v2037
        %v2043 = vld [vmem:[%s11] sm:$0xf]
        %v2044 = vld [vmem:[%s11 + $0x4] sm:$0xf]
        %v2045 = vld [vmem:[%s11 + $0x8] sm:$0xf]
        %v2046 = vld [vmem:[%s11 + $0xc] sm:$0xf]
        %v2047 = vld [vmem:[%s11 + $0x10] sm:$0xf]
        %v2048 = vld [vmem:[%s11 + $0x14] sm:$0xf]
        %v2049 = vld [vmem:[%s11 + $0x18] sm:$0xf]
        %v2050 = vld [vmem:[%s11 + $0x1c] sm:$0xf]
        %s2051 = scalar_lea.vmem %s10, 1
        %v2052 = vld [vmem:[%s2051] sm:$0x1]
        %v2054 = vsel %vm1994, %v2052, 0
        %2056 = vmatprep.subr.bf16.mxu0 0
        %2057 = vmatpush1.bf16.msra.mxu0 0
        %2058 = vmatprep.subr.bf16.mxu0 0
        %2059 = vmatpush1.bf16.msra.mxu0 0
        %2060 = vmatprep.subr.bf16.mxu0 0
        %2061 = vmatpush1.bf16.msra.mxu0 0
        %2062 = vmatprep.subr.bf16.mxu0 0
        %2063 = vmatpush1.bf16.msra.mxu0 0
        %2064 = vmatprep.subr.bf16.mxu0 0
        %2065 = vmatpush1.bf16.msra.mxu0 0
        %2066 = vmatprep.subr.bf16.mxu0 0
        %2067 = vmatpush1.bf16.msra.mxu0 0
        %2068 = vmatprep.subr.bf16.mxu0 0
        %2069 = vmatpush1.bf16.msra.mxu0 0
        %2070 = vmatprep.subr.bf16.mxu0 0
        %2071 = vmatpush1.bf16.msra.mxu0 %v2000
        %2072 = vmatprep.subr.bf16.mxu0 0
        %2073 = vmatpush2.bf16.msra.mxu0 0
        %2074 = vmatprep.subr.bf16.mxu0 0
        %2075 = vmatpush2.bf16.msra.mxu0 0
        %2076 = vmatprep.subr.bf16.mxu0 0
        %2077 = vmatpush2.bf16.msra.mxu0 0
        %2078 = vmatprep.subr.bf16.mxu0 0
        %2079 = vmatpush2.bf16.msra.mxu0 0
        %2080 = vmatprep.subr.bf16.mxu0 0
        %2081 = vmatpush2.bf16.msra.mxu0 0
        %2082 = vmatprep.subr.bf16.mxu0 0
        %2083 = vmatpush2.bf16.msra.mxu0 0
        %2084 = vmatprep.subr.bf16.mxu0 0
        %2085 = vmatpush2.bf16.msra.mxu0 0
        %2086 = vmatprep.subr.bf16.mxu0 0
        %2087 = vmatpush2.bf16.msra.mxu0 0
        %2088 = vmatprep.mubr.bf16.mxu0 0
        %2089 = vmatmul.mubr.bf16.gmra.mxu0 %v2054
        %v2090 = vpop.f32.mrf.mxu0
        %v2091 = vadd.f32 0.0, %v2090
        %v2092 = vpop.f32.mrf.mxu0
        %v2093 = vpop.f32.mrf.mxu0
        %v2094 = vpop.f32.mrf.mxu0
        %2095 = vdwg.mxu0
        %v2096 = vpack.c.bf16 %v2091, %v2091
        %s2097 = scalar_lea.vmem %s11, 32
        %v2098 = vld [vmem:[%s2097] sm:$0xf]
        %v2099 = vld [vmem:[%s2097 + $0x4] sm:$0xf]
        %v2100 = vld [vmem:[%s2097 + $0x8] sm:$0xf]
        %v2101 = vld [vmem:[%s2097 + $0xc] sm:$0xf]
        %v2102 = vld [vmem:[%s2097 + $0x10] sm:$0xf]
        %v2103 = vld [vmem:[%s2097 + $0x14] sm:$0xf]
        %v2104 = vld [vmem:[%s2097 + $0x18] sm:$0xf]
        %v2105 = vld [vmem:[%s2097 + $0x1c] sm:$0xf]
        %v2114 = vunpack.c.l.b16 %v2098
        %v2115 = vunpack.c.l.b16 %v2099
        %v2116 = vunpack.c.l.b16 %v2100
        %v2117 = vunpack.c.l.b16 %v2101
        %v2118 = vunpack.c.l.b16 %v2102
        %v2119 = vunpack.c.l.b16 %v2103
        %v2120 = vunpack.c.l.b16 %v2104
        %v2121 = vunpack.c.l.b16 %v2105
        %v2122 = vpack.c.b16 %v2115, %v2114
        %v2123 = vpack.c.b16 %v2117, %v2116
        %v2124 = vpack.c.b16 %v2119, %v2118
        %v2125 = vpack.c.b16 %v2121, %v2120
        %v2131 = vsel %vm1119, %v2096, 0
        %2133 = vmatprep.subr.bf16.mxu0 0
        %2134 = vmatpush1.bf16.msra.mxu0 0
        %2135 = vmatprep.subr.bf16.mxu0 0
        %2136 = vmatpush1.bf16.msra.mxu0 0
        %2137 = vmatprep.subr.bf16.mxu0 0
        %2138 = vmatpush1.bf16.msra.mxu0 0
        %2139 = vmatprep.subr.bf16.mxu0 0
        %2140 = vmatpush1.bf16.msra.mxu0 0
        %2141 = vmatprep.subr.bf16.mxu0 0
        %2142 = vmatpush1.bf16.msra.mxu0 %v2125
        %2143 = vmatprep.subr.bf16.mxu0 0
        %2144 = vmatpush1.bf16.msra.mxu0 %v2124
        %2145 = vmatprep.subr.bf16.mxu0 0
        %2146 = vmatpush1.bf16.msra.mxu0 %v2123
        %2147 = vmatprep.subr.bf16.mxu0 0
        %2148 = vmatpush1.bf16.msra.mxu0 %v2122
        %2149 = vmatprep.subr.bf16.mxu0 0
        %2150 = vmatpush2.bf16.msra.mxu0 0
        %2151 = vmatprep.subr.bf16.mxu0 0
        %2152 = vmatpush2.bf16.msra.mxu0 0
        %2153 = vmatprep.subr.bf16.mxu0 0
        %2154 = vmatpush2.bf16.msra.mxu0 0
        %2155 = vmatprep.subr.bf16.mxu0 0
        %2156 = vmatpush2.bf16.msra.mxu0 0
        %2157 = vmatprep.subr.bf16.mxu0 0
        %2158 = vmatpush2.bf16.msra.mxu0 0
        %2159 = vmatprep.subr.bf16.mxu0 0
        %2160 = vmatpush2.bf16.msra.mxu0 0
        %2161 = vmatprep.subr.bf16.mxu0 0
        %2162 = vmatpush2.bf16.msra.mxu0 0
        %2163 = vmatprep.subr.bf16.mxu0 0
        %2164 = vmatpush2.bf16.msra.mxu0 0
        %2165 = vmatprep.mubr.bf16.mxu0 0
        %2166 = vmatmul.mubr.bf16.gmra.mxu0 %v2131
        %v2167 = vpop.f32.mrf.mxu0
        %v2168 = vadd.f32 0.0, %v2167
        %v2169 = vpop.f32.mrf.mxu0
        %v2170 = vpop.f32.mrf.mxu0
        %v2171 = vpop.f32.mrf.mxu0
        %2172 = vdwg.mxu0
        %v2181 = vunpack.c.l.b16 %v2043
        %v2182 = vunpack.c.l.b16 %v2044
        %v2183 = vunpack.c.l.b16 %v2045
        %v2184 = vunpack.c.l.b16 %v2046
        %v2185 = vunpack.c.l.b16 %v2047
        %v2186 = vunpack.c.l.b16 %v2048
        %v2187 = vunpack.c.l.b16 %v2049
        %v2188 = vunpack.c.l.b16 %v2050
        %v2189 = vpack.c.b16 %v2182, %v2181
        %v2190 = vpack.c.b16 %v2184, %v2183
        %v2191 = vpack.c.b16 %v2186, %v2185
        %v2192 = vpack.c.b16 %v2188, %v2187
        %v2198 = vsel %vm1119, %v2042, 0
        %2200 = vmatprep.subr.bf16.mxu0 0
        %2201 = vmatpush1.bf16.msra.mxu0 0
        %2202 = vmatprep.subr.bf16.mxu0 0
        %2203 = vmatpush1.bf16.msra.mxu0 0
        %2204 = vmatprep.subr.bf16.mxu0 0
        %2205 = vmatpush1.bf16.msra.mxu0 0
        %2206 = vmatprep.subr.bf16.mxu0 0
        %2207 = vmatpush1.bf16.msra.mxu0 0
        %2208 = vmatprep.subr.bf16.mxu0 0
        %2209 = vmatpush1.bf16.msra.mxu0 %v2192
        %2210 = vmatprep.subr.bf16.mxu0 0
        %2211 = vmatpush1.bf16.msra.mxu0 %v2191
        %2212 = vmatprep.subr.bf16.mxu0 0
        %2213 = vmatpush1.bf16.msra.mxu0 %v2190
        %2214 = vmatprep.subr.bf16.mxu0 0
        %2215 = vmatpush1.bf16.msra.mxu0 %v2189
        %2216 = vmatprep.subr.bf16.mxu0 0
        %2217 = vmatpush2.bf16.msra.mxu0 0
        %2218 = vmatprep.subr.bf16.mxu0 0
        %2219 = vmatpush2.bf16.msra.mxu0 0
        %2220 = vmatprep.subr.bf16.mxu0 0
        %2221 = vmatpush2.bf16.msra.mxu0 0
        %2222 = vmatprep.subr.bf16.mxu0 0
        %2223 = vmatpush2.bf16.msra.mxu0 0
        %2224 = vmatprep.subr.bf16.mxu0 0
        %2225 = vmatpush2.bf16.msra.mxu0 0
        %2226 = vmatprep.subr.bf16.mxu0 0
        %2227 = vmatpush2.bf16.msra.mxu0 0
        %2228 = vmatprep.subr.bf16.mxu0 0
        %2229 = vmatpush2.bf16.msra.mxu0 0
        %2230 = vmatprep.subr.bf16.mxu0 0
        %2231 = vmatpush2.bf16.msra.mxu0 0
        %2232 = vmatprep.mubr.bf16.mxu0 0
        %2233 = vmatmul.mubr.bf16.gmra.mxu0 %v2198
        %v2234 = vpop.f32.mrf.mxu0
        %v2235 = vadd.f32 %v2168, %v2234
        %v2236 = vpop.f32.mrf.mxu0
        %v2237 = vpop.f32.mrf.mxu0
        %v2238 = vpop.f32.mrf.mxu0
        %2239 = vdwg.mxu0
        %s2240 = scalar_lea.vmem %s10, 2
        %v2241 = vld [vmem:[%s2240] sm:$0x1]
        %v2243 = vsel %vm1994, %v2241, 0
        %2245 = vmatprep.subr.bf16.mxu0 0
        %2246 = vmatpush1.bf16.msra.mxu0 0
        %2247 = vmatprep.subr.bf16.mxu0 0
        %2248 = vmatpush1.bf16.msra.mxu0 0
        %2249 = vmatprep.subr.bf16.mxu0 0
        %2250 = vmatpush1.bf16.msra.mxu0 0
        %2251 = vmatprep.subr.bf16.mxu0 0
        %2252 = vmatpush1.bf16.msra.mxu0 0
        %2253 = vmatprep.subr.bf16.mxu0 0
        %2254 = vmatpush1.bf16.msra.mxu0 0
        %2255 = vmatprep.subr.bf16.mxu0 0
        %2256 = vmatpush1.bf16.msra.mxu0 0
        %2257 = vmatprep.subr.bf16.mxu0 0
        %2258 = vmatpush1.bf16.msra.mxu0 0
        %2259 = vmatprep.subr.bf16.mxu0 0
        %2260 = vmatpush1.bf16.msra.mxu0 %v2000
        %2261 = vmatprep.subr.bf16.mxu0 0
        %2262 = vmatpush2.bf16.msra.mxu0 0
        %2263 = vmatprep.subr.bf16.mxu0 0
        %2264 = vmatpush2.bf16.msra.mxu0 0
        %2265 = vmatprep.subr.bf16.mxu0 0
        %2266 = vmatpush2.bf16.msra.mxu0 0
        %2267 = vmatprep.subr.bf16.mxu0 0
        %2268 = vmatpush2.bf16.msra.mxu0 0
        %2269 = vmatprep.subr.bf16.mxu0 0
        %2270 = vmatpush2.bf16.msra.mxu0 0
        %2271 = vmatprep.subr.bf16.mxu0 0
        %2272 = vmatpush2.bf16.msra.mxu0 0
        %2273 = vmatprep.subr.bf16.mxu0 0
        %2274 = vmatpush2.bf16.msra.mxu0 0
        %2275 = vmatprep.subr.bf16.mxu0 0
        %2276 = vmatpush2.bf16.msra.mxu0 0
        %2277 = vmatprep.mubr.bf16.mxu0 0
        %2278 = vmatmul.mubr.bf16.gmra.mxu0 %v2243
        %v2279 = vpop.f32.mrf.mxu0
        %v2280 = vadd.f32 0.0, %v2279
        %v2281 = vpop.f32.mrf.mxu0
        %v2282 = vpop.f32.mrf.mxu0
        %v2283 = vpop.f32.mrf.mxu0
        %2284 = vdwg.mxu0
        %v2285 = vpack.c.bf16 %v2280, %v2280
        %s2286 = scalar_lea.vmem %s11, 64
        %v2287 = vld [vmem:[%s2286] sm:$0xf]
        %v2288 = vld [vmem:[%s2286 + $0x4] sm:$0xf]
        %v2289 = vld [vmem:[%s2286 + $0x8] sm:$0xf]
        %v2290 = vld [vmem:[%s2286 + $0xc] sm:$0xf]
        %v2291 = vld [vmem:[%s2286 + $0x10] sm:$0xf]
        %v2292 = vld [vmem:[%s2286 + $0x14] sm:$0xf]
        %v2293 = vld [vmem:[%s2286 + $0x18] sm:$0xf]
        %v2294 = vld [vmem:[%s2286 + $0x1c] sm:$0xf]
        %v2303 = vunpack.c.l.b16 %v2287
        %v2304 = vunpack.c.l.b16 %v2288
        %v2305 = vunpack.c.l.b16 %v2289
        %v2306 = vunpack.c.l.b16 %v2290
        %v2307 = vunpack.c.l.b16 %v2291
        %v2308 = vunpack.c.l.b16 %v2292
        %v2309 = vunpack.c.l.b16 %v2293
        %v2310 = vunpack.c.l.b16 %v2294
        %v2311 = vpack.c.b16 %v2304, %v2303
        %v2312 = vpack.c.b16 %v2306, %v2305
        %v2313 = vpack.c.b16 %v2308, %v2307
        %v2314 = vpack.c.b16 %v2310, %v2309
        %v2320 = vsel %vm1119, %v2285, 0
        %2322 = vmatprep.subr.bf16.mxu0 0
        %2323 = vmatpush1.bf16.msra.mxu0 0
        %2324 = vmatprep.subr.bf16.mxu0 0
        %2325 = vmatpush1.bf16.msra.mxu0 0
        %2326 = vmatprep.subr.bf16.mxu0 0
        %2327 = vmatpush1.bf16.msra.mxu0 0
        %2328 = vmatprep.subr.bf16.mxu0 0
        %2329 = vmatpush1.bf16.msra.mxu0 0
        %2330 = vmatprep.subr.bf16.mxu0 0
        %2331 = vmatpush1.bf16.msra.mxu0 %v2314
        %2332 = vmatprep.subr.bf16.mxu0 0
        %2333 = vmatpush1.bf16.msra.mxu0 %v2313
        %2334 = vmatprep.subr.bf16.mxu0 0
        %2335 = vmatpush1.bf16.msra.mxu0 %v2312
        %2336 = vmatprep.subr.bf16.mxu0 0
        %2337 = vmatpush1.bf16.msra.mxu0 %v2311
        %2338 = vmatprep.subr.bf16.mxu0 0
        %2339 = vmatpush2.bf16.msra.mxu0 0
        %2340 = vmatprep.subr.bf16.mxu0 0
        %2341 = vmatpush2.bf16.msra.mxu0 0
        %2342 = vmatprep.subr.bf16.mxu0 0
        %2343 = vmatpush2.bf16.msra.mxu0 0
        %2344 = vmatprep.subr.bf16.mxu0 0
        %2345 = vmatpush2.bf16.msra.mxu0 0
        %2346 = vmatprep.subr.bf16.mxu0 0
        %2347 = vmatpush2.bf16.msra.mxu0 0
        %2348 = vmatprep.subr.bf16.mxu0 0
        %2349 = vmatpush2.bf16.msra.mxu0 0
        %2350 = vmatprep.subr.bf16.mxu0 0
        %2351 = vmatpush2.bf16.msra.mxu0 0
        %2352 = vmatprep.subr.bf16.mxu0 0
        %2353 = vmatpush2.bf16.msra.mxu0 0
        %2354 = vmatprep.mubr.bf16.mxu0 0
        %2355 = vmatmul.mubr.bf16.gmra.mxu0 %v2320
        %v2356 = vpop.f32.mrf.mxu0
        %v2357 = vadd.f32 0.0, %v2356
        %v2358 = vpop.f32.mrf.mxu0
        %v2359 = vpop.f32.mrf.mxu0
        %v2360 = vpop.f32.mrf.mxu0
        %2361 = vdwg.mxu0
        %v2362 = vadd.f32 %v2235, %v2357
        %vm2363 = vcmask 9216
        %2364 = vst.msk [vmem:[%s491] sm:$0x3] %vm2363, %v2362
        %v2365 = vld [vmem:[%s12] sm:$0x1]
        %v2367 = vsel %vm1994, %v2365, 0
        %2369 = vmatprep.subr.bf16.mxu0 0
        %2370 = vmatpush1.bf16.msra.mxu0 0
        %2371 = vmatprep.subr.bf16.mxu0 0
        %2372 = vmatpush1.bf16.msra.mxu0 0
        %2373 = vmatprep.subr.bf16.mxu0 0
        %2374 = vmatpush1.bf16.msra.mxu0 0
        %2375 = vmatprep.subr.bf16.mxu0 0
        %2376 = vmatpush1.bf16.msra.mxu0 0
        %2377 = vmatprep.subr.bf16.mxu0 0
        %2378 = vmatpush1.bf16.msra.mxu0 0
        %2379 = vmatprep.subr.bf16.mxu0 0
        %2380 = vmatpush1.bf16.msra.mxu0 0
        %2381 = vmatprep.subr.bf16.mxu0 0
        %2382 = vmatpush1.bf16.msra.mxu0 0
        %2383 = vmatprep.subr.bf16.mxu0 0
        %2384 = vmatpush1.bf16.msra.mxu0 %v2000
        %2385 = vmatprep.subr.bf16.mxu0 0
        %2386 = vmatpush2.bf16.msra.mxu0 0
        %2387 = vmatprep.subr.bf16.mxu0 0
        %2388 = vmatpush2.bf16.msra.mxu0 0
        %2389 = vmatprep.subr.bf16.mxu0 0
        %2390 = vmatpush2.bf16.msra.mxu0 0
        %2391 = vmatprep.subr.bf16.mxu0 0
        %2392 = vmatpush2.bf16.msra.mxu0 0
        %2393 = vmatprep.subr.bf16.mxu0 0
        %2394 = vmatpush2.bf16.msra.mxu0 0
        %2395 = vmatprep.subr.bf16.mxu0 0
        %2396 = vmatpush2.bf16.msra.mxu0 0
        %2397 = vmatprep.subr.bf16.mxu0 0
        %2398 = vmatpush2.bf16.msra.mxu0 0
        %2399 = vmatprep.subr.bf16.mxu0 0
        %2400 = vmatpush2.bf16.msra.mxu0 0
        %2401 = vmatprep.mubr.bf16.mxu0 0
        %2402 = vmatmul.mubr.bf16.gmra.mxu0 %v2367
        %v2403 = vpop.f32.mrf.mxu0
        %v2404 = vadd.f32 0.0, %v2403
        %v2405 = vpop.f32.mrf.mxu0
        %v2406 = vpop.f32.mrf.mxu0
        %v2407 = vpop.f32.mrf.mxu0
        %2408 = vdwg.mxu0
        %v2409 = vpack.c.bf16 %v2404, %v2404
        %v2410 = vld [vmem:[%s13] sm:$0xf]
        %v2411 = vld [vmem:[%s13 + $0x4] sm:$0xf]
        %v2412 = vld [vmem:[%s13 + $0x8] sm:$0xf]
        %v2413 = vld [vmem:[%s13 + $0xc] sm:$0xf]
        %v2414 = vld [vmem:[%s13 + $0x10] sm:$0xf]
        %v2415 = vld [vmem:[%s13 + $0x14] sm:$0xf]
        %v2416 = vld [vmem:[%s13 + $0x18] sm:$0xf]
        %v2417 = vld [vmem:[%s13 + $0x1c] sm:$0xf]
        %s2418 = scalar_lea.vmem %s12, 1
        %v2419 = vld [vmem:[%s2418] sm:$0x1]
        %v2421 = vsel %vm1994, %v2419, 0
        %2423 = vmatprep.subr.bf16.mxu0 0
        %2424 = vmatpush1.bf16.msra.mxu0 0
        %2425 = vmatprep.subr.bf16.mxu0 0
        %2426 = vmatpush1.bf16.msra.mxu0 0
        %2427 = vmatprep.subr.bf16.mxu0 0
        %2428 = vmatpush1.bf16.msra.mxu0 0
        %2429 = vmatprep.subr.bf16.mxu0 0
        %2430 = vmatpush1.bf16.msra.mxu0 0
        %2431 = vmatprep.subr.bf16.mxu0 0
        %2432 = vmatpush1.bf16.msra.mxu0 0
        %2433 = vmatprep.subr.bf16.mxu0 0
        %2434 = vmatpush1.bf16.msra.mxu0 0
        %2435 = vmatprep.subr.bf16.mxu0 0
        %2436 = vmatpush1.bf16.msra.mxu0 0
        %2437 = vmatprep.subr.bf16.mxu0 0
        %2438 = vmatpush1.bf16.msra.mxu0 %v2000
        %2439 = vmatprep.subr.bf16.mxu0 0
        %2440 = vmatpush2.bf16.msra.mxu0 0
        %2441 = vmatprep.subr.bf16.mxu0 0
        %2442 = vmatpush2.bf16.msra.mxu0 0
        %2443 = vmatprep.subr.bf16.mxu0 0
        %2444 = vmatpush2.bf16.msra.mxu0 0
        %2445 = vmatprep.subr.bf16.mxu0 0
        %2446 = vmatpush2.bf16.msra.mxu0 0
        %2447 = vmatprep.subr.bf16.mxu0 0
        %2448 = vmatpush2.bf16.msra.mxu0 0
        %2449 = vmatprep.subr.bf16.mxu0 0
        %2450 = vmatpush2.bf16.msra.mxu0 0
        %2451 = vmatprep.subr.bf16.mxu0 0
        %2452 = vmatpush2.bf16.msra.mxu0 0
        %2453 = vmatprep.subr.bf16.mxu0 0
        %2454 = vmatpush2.bf16.msra.mxu0 0
        %2455 = vmatprep.mubr.bf16.mxu0 0
        %2456 = vmatmul.mubr.bf16.gmra.mxu0 %v2421
        %v2457 = vpop.f32.mrf.mxu0
        %v2458 = vadd.f32 0.0, %v2457
        %v2459 = vpop.f32.mrf.mxu0
        %v2460 = vpop.f32.mrf.mxu0
        %v2461 = vpop.f32.mrf.mxu0
        %2462 = vdwg.mxu0
        %v2463 = vpack.c.bf16 %v2458, %v2458
        %s2464 = scalar_lea.vmem %s13, 32
        %v2465 = vld [vmem:[%s2464] sm:$0xf]
        %v2466 = vld [vmem:[%s2464 + $0x4] sm:$0xf]
        %v2467 = vld [vmem:[%s2464 + $0x8] sm:$0xf]
        %v2468 = vld [vmem:[%s2464 + $0xc] sm:$0xf]
        %v2469 = vld [vmem:[%s2464 + $0x10] sm:$0xf]
        %v2470 = vld [vmem:[%s2464 + $0x14] sm:$0xf]
        %v2471 = vld [vmem:[%s2464 + $0x18] sm:$0xf]
        %v2472 = vld [vmem:[%s2464 + $0x1c] sm:$0xf]
        %v2481 = vunpack.c.l.b16 %v2465
        %v2482 = vunpack.c.l.b16 %v2466
        %v2483 = vunpack.c.l.b16 %v2467
        %v2484 = vunpack.c.l.b16 %v2468
        %v2485 = vunpack.c.l.b16 %v2469
        %v2486 = vunpack.c.l.b16 %v2470
        %v2487 = vunpack.c.l.b16 %v2471
        %v2488 = vunpack.c.l.b16 %v2472
        %v2489 = vpack.c.b16 %v2482, %v2481
        %v2490 = vpack.c.b16 %v2484, %v2483
        %v2491 = vpack.c.b16 %v2486, %v2485
        %v2492 = vpack.c.b16 %v2488, %v2487
        %v2498 = vsel %vm1119, %v2463, 0
        %2500 = vmatprep.subr.bf16.mxu0 0
        %2501 = vmatpush1.bf16.msra.mxu0 0
        %2502 = vmatprep.subr.bf16.mxu0 0
        %2503 = vmatpush1.bf16.msra.mxu0 0
        %2504 = vmatprep.subr.bf16.mxu0 0
        %2505 = vmatpush1.bf16.msra.mxu0 0
        %2506 = vmatprep.subr.bf16.mxu0 0
        %2507 = vmatpush1.bf16.msra.mxu0 0
        %2508 = vmatprep.subr.bf16.mxu0 0
        %2509 = vmatpush1.bf16.msra.mxu0 %v2492
        %2510 = vmatprep.subr.bf16.mxu0 0
        %2511 = vmatpush1.bf16.msra.mxu0 %v2491
        %2512 = vmatprep.subr.bf16.mxu0 0
        %2513 = vmatpush1.bf16.msra.mxu0 %v2490
        %2514 = vmatprep.subr.bf16.mxu0 0
        %2515 = vmatpush1.bf16.msra.mxu0 %v2489
        %2516 = vmatprep.subr.bf16.mxu0 0
        %2517 = vmatpush2.bf16.msra.mxu0 0
        %2518 = vmatprep.subr.bf16.mxu0 0
        %2519 = vmatpush2.bf16.msra.mxu0 0
        %2520 = vmatprep.subr.bf16.mxu0 0
        %2521 = vmatpush2.bf16.msra.mxu0 0
        %2522 = vmatprep.subr.bf16.mxu0 0
        %2523 = vmatpush2.bf16.msra.mxu0 0
        %2524 = vmatprep.subr.bf16.mxu0 0
        %2525 = vmatpush2.bf16.msra.mxu0 0
        %2526 = vmatprep.subr.bf16.mxu0 0
        %2527 = vmatpush2.bf16.msra.mxu0 0
        %2528 = vmatprep.subr.bf16.mxu0 0
        %2529 = vmatpush2.bf16.msra.mxu0 0
        %2530 = vmatprep.subr.bf16.mxu0 0
        %2531 = vmatpush2.bf16.msra.mxu0 0
        %2532 = vmatprep.mubr.bf16.mxu0 0
        %2533 = vmatmul.mubr.bf16.gmra.mxu0 %v2498
        %v2534 = vpop.f32.mrf.mxu0
        %v2535 = vadd.f32 0.0, %v2534
        %v2536 = vpop.f32.mrf.mxu0
        %v2537 = vpop.f32.mrf.mxu0
        %v2538 = vpop.f32.mrf.mxu0
        %2539 = vdwg.mxu0
        %v2548 = vunpack.c.l.b16 %v2410
        %v2549 = vunpack.c.l.b16 %v2411
        %v2550 = vunpack.c.l.b16 %v2412
        %v2551 = vunpack.c.l.b16 %v2413
        %v2552 = vunpack.c.l.b16 %v2414
        %v2553 = vunpack.c.l.b16 %v2415
        %v2554 = vunpack.c.l.b16 %v2416
        %v2555 = vunpack.c.l.b16 %v2417
        %v2556 = vpack.c.b16 %v2549, %v2548
        %v2557 = vpack.c.b16 %v2551, %v2550
        %v2558 = vpack.c.b16 %v2553, %v2552
        %v2559 = vpack.c.b16 %v2555, %v2554
        %v2565 = vsel %vm1119, %v2409, 0
        %2567 = vmatprep.subr.bf16.mxu0 0
        %2568 = vmatpush1.bf16.msra.mxu0 0
        %2569 = vmatprep.subr.bf16.mxu0 0
        %2570 = vmatpush1.bf16.msra.mxu0 0
        %2571 = vmatprep.subr.bf16.mxu0 0
        %2572 = vmatpush1.bf16.msra.mxu0 0
        %2573 = vmatprep.subr.bf16.mxu0 0
        %2574 = vmatpush1.bf16.msra.mxu0 0
        %2575 = vmatprep.subr.bf16.mxu0 0
        %2576 = vmatpush1.bf16.msra.mxu0 %v2559
        %2577 = vmatprep.subr.bf16.mxu0 0
        %2578 = vmatpush1.bf16.msra.mxu0 %v2558
        %2579 = vmatprep.subr.bf16.mxu0 0
        %2580 = vmatpush1.bf16.msra.mxu0 %v2557
        %2581 = vmatprep.subr.bf16.mxu0 0
        %2582 = vmatpush1.bf16.msra.mxu0 %v2556
        %2583 = vmatprep.subr.bf16.mxu0 0
        %2584 = vmatpush2.bf16.msra.mxu0 0
        %2585 = vmatprep.subr.bf16.mxu0 0
        %2586 = vmatpush2.bf16.msra.mxu0 0
        %2587 = vmatprep.subr.bf16.mxu0 0
        %2588 = vmatpush2.bf16.msra.mxu0 0
        %2589 = vmatprep.subr.bf16.mxu0 0
        %2590 = vmatpush2.bf16.msra.mxu0 0
        %2591 = vmatprep.subr.bf16.mxu0 0
        %2592 = vmatpush2.bf16.msra.mxu0 0
        %2593 = vmatprep.subr.bf16.mxu0 0
        %2594 = vmatpush2.bf16.msra.mxu0 0
        %2595 = vmatprep.subr.bf16.mxu0 0
        %2596 = vmatpush2.bf16.msra.mxu0 0
        %2597 = vmatprep.subr.bf16.mxu0 0
        %2598 = vmatpush2.bf16.msra.mxu0 0
        %2599 = vmatprep.mubr.bf16.mxu0 0
        %2600 = vmatmul.mubr.bf16.gmra.mxu0 %v2565
        %v2601 = vpop.f32.mrf.mxu0
        %v2602 = vadd.f32 %v2535, %v2601
        %v2603 = vpop.f32.mrf.mxu0
        %v2604 = vpop.f32.mrf.mxu0
        %v2605 = vpop.f32.mrf.mxu0
        %2606 = vdwg.mxu0
        %vm2607 = vcmask 32768
        %2608 = vst.msk [vmem:[%s497] sm:$0x1] %vm2607, %v2602
        %s2609 = sand.u32 %s340, 1
        %s2610 = scalar_lea.sflag [#allocation3], %s2609
        %s2611 = sand.u32 %s340, 1
        %s2612 = smul.addr %s2611, 2
        %s2613 = scalar_lea.vmem [#allocation2], %s2612
        %s2614 = sand.u32 %s366, 1
        %s2615 = scalar_lea.sflag [#allocation5], %s2614
        %s2616 = sand.u32 %s366, 1
        %s2617 = scalar_lea.vmem [#allocation4], %s2616
        // Predicated region
        $region77: #{discriminator_forward.1} parent=75 // pred_check
          %p2618 = pneg %p350
        $region78: #{discriminator_forward.1} parent=75 // pred_check_branch
          %2620 = sbr.rel (%p2618) target = $region80
        $region79: #{discriminator_forward.1} parent=75 // pred_region
          %s2622 = ssub.s32 32, 32
          %2623 = vsyncadd %s2610, %s2622
          %s2624 = smul.addr %s33, 32
          %s2625 = scalar_lea.hbm %s14, %s2624
          %s2627 = sshll.u32 %s2613, 4
          %s2628 = int_to_ptr.vmem [resolvable:$true] %s2627
          %2630 = dma.vmem_to_hbm [thread:$0]  %s2628, 32, %s2625, %s2610
        $region80: #{discriminator_forward.1} parent=75 // pred_fallthru
          _
        // Predicated region
        $region81: #{discriminator_forward.1} parent=75 // pred_check
          %p2631 = pneg %p376
        $region82: #{discriminator_forward.1} parent=75 // pred_check_branch
          %2633 = sbr.rel (%p2631) target = $region84
        $region83: #{discriminator_forward.1} parent=75 // pred_region
          %s2635 = ssub.s32 16, 16
          %2636 = vsyncadd %s2615, %s2635
          %s2637 = smul.addr %s33, 16
          %s2638 = scalar_lea.hbm %s15, %s2637
          %s2640 = sshll.u32 %s2617, 4
          %s2641 = int_to_ptr.vmem [resolvable:$true] %s2640
          %2643 = dma.vmem_to_hbm [thread:$0]  %s2641, 16, %s2638, %s2615
        $region84: #{discriminator_forward.1} parent=75 // pred_fallthru
          _
      $region76: #{discriminator_forward.1} parent=5 // pred_fallthru
        _
      %p2644 = scmp.le.s32.totalorder 2, %s28
      // Predicated region
      $region85: #{discriminator_forward.1} parent=5 // pred_check
        %p2645 = pneg %p2644
      $region86: #{discriminator_forward.1} parent=5 // pred_check_branch
        %2647 = sbr.rel (%p2645) target = $region88
      $region87: #{discriminator_forward.1} parent=5 // pred_region
        %s2648 = ssub.s32 %s28, 2
        // Predicated region
        $region89: #{discriminator_forward.1} parent=87 // pred_check
          %p2649 = pneg %p356
        $region90: #{discriminator_forward.1} parent=87 // pred_check_branch
          %2651 = sbr.rel (%p2649) target = $region92
        $region91: #{discriminator_forward.1} parent=87 // pred_region
          %s2652 = sand.u32 %s341, 1
          %s2653 = scalar_lea.sflag [#allocation3], %s2652
          %s2654 = sand.u32 %s341, 1
          %s2655 = smul.addr %s2654, 2
          %s2656 = scalar_lea.vmem [#allocation2], %s2655
          %2657 = dma.done %s2653, 32
        $region92: #{discriminator_forward.1} parent=87 // pred_fallthru
          _
        // Predicated region
        $region93: #{discriminator_forward.1} parent=87 // pred_check
          %p2658 = pneg %p382
        $region94: #{discriminator_forward.1} parent=87 // pred_check_branch
          %2660 = sbr.rel (%p2658) target = $region96
        $region95: #{discriminator_forward.1} parent=87 // pred_region
          %s2661 = sand.u32 %s367, 1
          %s2662 = scalar_lea.sflag [#allocation5], %s2661
          %s2663 = sand.u32 %s367, 1
          %s2664 = scalar_lea.vmem [#allocation4], %s2663
          %2665 = dma.done %s2662, 16
        $region96: #{discriminator_forward.1} parent=87 // pred_fallthru
          _
      $region88: #{discriminator_forward.1} parent=5 // pred_fallthru
        _
    $region6: #{discriminator_forward.1} parent=1 // loop_footer
      %s32 = sadd.s32 1, %s28
    $region7: #{discriminator_forward.1} parent=1 // loop_footer_branch
      %27 = sbr.rel target = $region3
    $region8: #{discriminator_forward.1} parent=1 // loop_exit
      _
    %2666 = vsyncpa [#allocation3], 1
    %s2667 = scalar_lea.sflag [#allocation3], 1
    %2668 = vsyncpa %s2667, 1
    %2669 = vsyncpa [#allocation5], 1
    %s2670 = scalar_lea.sflag [#allocation5], 1
    %2671 = vsyncpa %s2670, 1

</llo_original>
